<compile_context>
chip_gen: v7x
topology: tpu7x:2x2x1
jax: 0.10.0
libtpu: 0.0.40
codegen_flags: <defaults>
</compile_context>

<pallas_src>
import jax
import jax.numpy as jnp
from jax.experimental import pallas as pl
from jax.experimental.pallas import tpu as pltpu

LANE = 128


def _round_up(n, m):
    return ((n + m - 1) // m) * m


# -------------------- Pallas kernel: full recurrence + FC head --------------------
def lstm_kernel(x_ref,     # (T*B, Ipad)  bf16  time-major, flattened, padded input
                wx0_ref,   # (Ipad, 4H)   bf16  layer-0 W_ih^T (feature-padded)
                b0_ref,    # (1, 4H)      f32   layer-0 b_ih + b_hh
                wh0_ref,   # (H, 8H)      bf16  [W_hh0^T | W_ih1^T]  (h0-driven)
                wh1_ref,   # (H, 4H)      bf16  W_hh1^T              (h1-driven)
                b1_ref,    # (1, 4H)      f32   layer-1 b_ih + b_hh
                wfc_ref,   # (H, Cpad)    bf16  fc weight^T (lane-padded)
                bfc_ref,   # (1, Cpad)    f32   fc bias (lane-padded)
                out_ref,   # (B, Cpad)    f32   lane-dense logits
                xg_ref):   # (T, B, 4H)   f32   scratch: precomputed layer-0 input gates
    T, B, H4 = xg_ref.shape
    H = H4 // 4

    # ---- (1) one batched MXU op: layer-0 input projection for all timesteps ----
    xg = jnp.dot(x_ref[...], wx0_ref[...], preferred_element_type=jnp.float32)
    xg_ref[...] = (xg + b0_ref[...]).reshape(T, B, H4)

    # ---- loop-invariant loads / broadcasts hoisted out of the recurrence ----
    wh0 = wh0_ref[...]                                   # (H, 8H)
    wh1 = wh1_ref[...]                                   # (H, 4H)
    b1 = jnp.broadcast_to(b1_ref[...], (B, H4))

    def sigmoid(v):
        # exp on the EUP + approx reciprocal on the EUP: keeps precise VPU
        # divides (Newton iterations) off the serial chain (item 5 of review).
        return pl.reciprocal(1.0 + jnp.exp(-v), approx=True)

    def activate(g, c):
        i = sigmoid(g[:, 0 * H:1 * H])
        f = sigmoid(g[:, 1 * H:2 * H])
        gg = jnp.tanh(g[:, 2 * H:3 * H])
        o = sigmoid(g[:, 3 * H:4 * H])
        c_new = f * c + i * gg
        h_new = o * jnp.tanh(c_new)
        return h_new, c_new

    zeros = jnp.zeros((B, H), jnp.float32)

    # ---- (2) wavefront recurrence: layer1(t-1) fused with layer0(t) ----
    # Wavefront 0: layer0 at t=0.  h0(-1) = 0, so the recurrent matmul is skipped
    # and the gate is just the precomputed input projection.
    h0, c0 = activate(xg_ref[0], zeros)
    h1, c1 = zeros, zeros

    # Wavefronts 1..T (static, fully unrolled; T = 8).  Both dots depend only on
    # the previous wavefront's carry, so the MXU pipelines them back to back.
    for w in range(1, T + 1):
        r0 = jnp.dot(h0.astype(jnp.bfloat16), wh0,
                     preferred_element_type=jnp.float32)         # (B, 8H)
        r1 = jnp.dot(h1.astype(jnp.bfloat16), wh1,
                     preferred_element_type=jnp.float32)         # (B, 4H)
        # layer 1 at t = w-1 : W_ih1*h0(w-1) + W_hh1*h1(w-2) + b1
        h1, c1 = activate(r0[:, H4:] + r1 + b1, c1)
        if w < T:
            # layer 0 at t = w : W_hh0*h0(w-1) + (W_ih0*x(w) + b0)
            h0, c0 = activate(r0[:, :H4] + xg_ref[w], c0)

    # ---- fc head on h1(T-1): lane-dense (B, Cpad) store (padded cols are 0) ----
    out_ref[...] = (jnp.dot(h1.astype(jnp.bfloat16), wfc_ref[...],
                            preferred_element_type=jnp.float32) + bfc_ref[...])


# -------------------- one-time parameter preparation (review item 3) --------------------
def prepare_params(params):
    """Fuse / transpose / pad all weights once, outside the per-call hot path."""
    H = params["whh0"].shape[1]
    I = params["wih0"].shape[1]
    C = params["wfc"].shape[0]
    Ipad = _round_up(max(I, LANE), LANE)
    Cpad = _round_up(max(C, LANE), LANE)

    # layer-0 input projection weights (feature-padded rows contribute 0)
    wx0 = jnp.pad(params["wih0"].T, ((0, Ipad - I), (0, 0))).astype(jnp.bfloat16)
    b0 = (params["bih0"] + params["bhh0"]).reshape(1, 4 * H).astype(jnp.float32)

    # h0-driven fused recurrent weights: cols 0:4H -> layer-0 recurrence,
    # cols 4H:8H -> layer-1 input projection (disjoint N ranges, no cross-talk).
    wh0 = jnp.concatenate([params["whh0"].T, params["wih1"].T],
                          axis=1).astype(jnp.bfloat16)            # (H, 8H)
    wh1 = params["whh1"].T.astype(jnp.bfloat16)                   # (H, 4H)
    b1 = (params["bih1"] + params["bhh1"]).reshape(1, 4 * H).astype(jnp.float32)

    wfc = jnp.pad(params["wfc"].T, ((0, 0), (0, Cpad - C))).astype(jnp.bfloat16)
    bfc = jnp.pad(params["bfc"].reshape(1, C),
                  ((0, 0), (0, Cpad - C))).astype(jnp.float32)

    prep = dict(wx0=wx0, b0=b0, wh0=wh0, wh1=wh1, b1=b1, wfc=wfc, bfc=bfc)
    meta = dict(I=I, Ipad=Ipad, H=H, C=C, Cpad=Cpad)
    return prep, meta


# -------------------- per-call wrapper --------------------
def lstm_model_forward(x, prep, meta):
    """x: (B, T, I) float32. Returns (B, num_classes) f32 logits."""
    B, T, I = x.shape
    H, Ipad, C, Cpad = meta["H"], meta["Ipad"], meta["C"], meta["Cpad"]

    # time-major, flattened to (T*B, Ipad), bf16 operands for the MXU.
    x_tb = jnp.transpose(x, (1, 0, 2)).reshape(T * B, I)
    x_tb = jnp.pad(x_tb, ((0, 0), (0, Ipad - I))).astype(jnp.bfloat16)

    # Total footprint ~0.8 MiB << every generation's VMEM, so a single grid-free
    # invocation is the right structure.  On v7x only one of the two TCs is used;
    # add a ("parallel",) grid over batch only once B >= 16 (f32 sublane min is 8).
    vmem = pl.BlockSpec(memory_space=pltpu.MemorySpace.VMEM)
    out_pad = pl.pallas_call(
        lstm_kernel,
        out_shape=jax.ShapeDtypeStruct((B, Cpad), jnp.float32),
        in_specs=[vmem] * 8,
        out_specs=vmem,
        scratch_shapes=[pltpu.VMEM((T, B, 4 * H), jnp.float32)],
    )(x_tb, prep["wx0"], prep["b0"], prep["wh0"], prep["wh1"],
      prep["b1"], prep["wfc"], prep["bfc"])

    return out_pad[:, :C]


# -------------------- pure-JAX f32 reference (sanity check) --------------------
def lstm_model_reference(x, params):
    B, T, I = x.shape
    H = params["whh0"].shape[1]

    def run_layer(seq, wih, whh, bih, bhh):
        h = jnp.zeros((B, H), jnp.float32)
        c = jnp.zeros((B, H), jnp.float32)
        outs = []
        for t in range(seq.shape[1]):
            g = seq[:, t, :] @ wih.T + bih + h @ whh.T + bhh
            i = jax.nn.sigmoid(g[:, 0 * H:1 * H])
            f = jax.nn.sigmoid(g[:, 1 * H:2 * H])
            gg = jnp.tanh(g[:, 2 * H:3 * H])
            o = jax.nn.sigmoid(g[:, 3 * H:4 * H])
            c = f * c + i * gg
            h = o * jnp.tanh(c)
            outs.append(h)
        return jnp.stack(outs, axis=1)

    y0 = run_layer(x, params["wih0"], params["whh0"], params["bih0"], params["bhh0"])
    y1 = run_layer(y0, params["wih1"], params["whh1"], params["bih1"], params["bhh1"])
    return y1[:, -1, :] @ params["wfc"].T + params["bfc"]


# -------------------- parameter init --------------------
def init_params(key, input_size, hidden_size, num_classes):
    H = hidden_size
    k = 1.0 / jnp.sqrt(jnp.float32(H))
    keys = jax.random.split(key, 10)

    def u(kk, shape):
        return jax.random.uniform(kk, shape, jnp.float32, -k, k)

    return {
        # layer 0
        "wih0": u(keys[0], (4 * H, input_size)),
        "whh0": u(keys[1], (4 * H, H)),
        "bih0": u(keys[2], (4 * H,)),
        "bhh0": u(keys[3], (4 * H,)),
        # layer 1
        "wih1": u(keys[4], (4 * H, H)),
        "whh1": u(keys[5], (4 * H, H)),
        "bih1": u(keys[6], (4 * H,)),
        "bhh1": u(keys[7], (4 * H,)),
        # fc head
        "wfc": u(keys[8], (num_classes, H)),
        "bfc": u(keys[9], (num_classes,)),
    }


if __name__ == "__main__":
    # Shapes consistent with the module: hidden_size=128, num_classes=2,
    # num_layers=2, batch_first input (batch, seq, input_size).
    B, T, I = 8, 8, 16
    H, C = 128, 2

    key = jax.random.PRNGKey(0)
    kx, kp = jax.random.split(key)
    x = jax.random.normal(kx, (B, T, I), jnp.float32)
    params = init_params(kp, I, H, C)

    prep, meta = prepare_params(params)          # one-time weight prep (hoisted)

    out = jax.block_until_ready(lstm_model_forward(x, prep, meta))
    ref = jax.block_until_ready(lstm_model_reference(x, params))

    assert out.shape == (B, C)
    # bf16 MXU operands (f32 accumulation) vs. pure-f32 reference: widened
    # tolerance per the perf review; observed error is O(1e-3) at these shapes.
    assert jnp.allclose(out, ref, atol=3e-2, rtol=3e-2), (out, ref)
    print("KERNEL_OK")
</pallas_src>

<mosaic_0001>
module attributes {stable_mosaic.version = 11 : i64} {
  func.func @lstm_kernel(%arg0: memref<64x128xbf16, #tpu.memory_space<vmem>>, %arg1: memref<128x512xbf16, #tpu.memory_space<vmem>>, %arg2: memref<1x512xf32, #tpu.memory_space<vmem>>, %arg3: memref<128x1024xbf16, #tpu.memory_space<vmem>>, %arg4: memref<128x512xbf16, #tpu.memory_space<vmem>>, %arg5: memref<1x512xf32, #tpu.memory_space<vmem>>, %arg6: memref<128x128xbf16, #tpu.memory_space<vmem>>, %arg7: memref<1x128xf32, #tpu.memory_space<vmem>>, %arg8: memref<8x128xf32, #tpu.memory_space<vmem>>, %arg9: memref<8x8x512xf32, #tpu.memory_space<vmem>>) attributes {dimension_semantics = [], scalar_prefetch = 0 : i64, scratch_operands = 1 : i64, tpu.core_type = #tpu.core_type<tc>} {
    %c0 = arith.constant 0 : index
    %c0_0 = arith.constant 0 : index
    %0 = vector.load %arg0[%c0, %c0_0] : memref<64x128xbf16, #tpu.memory_space<vmem>>, vector<64x128xbf16>
    %c0_1 = arith.constant 0 : index
    %c0_2 = arith.constant 0 : index
    %1 = vector.load %arg1[%c0_1, %c0_2] : memref<128x512xbf16, #tpu.memory_space<vmem>>, vector<128x512xbf16>
    %cst = arith.constant dense<0.000000e+00> : vector<64x512xf32>
    %2 = tpu.matmul %0, %1, %cst {dimension_numbers = #tpu.dot_dimension_numbers<[1], [0], [0], [1], [0, 0, 1, 1], [], []>} : vector<64x128xbf16>, vector<128x512xbf16>, vector<64x512xf32> -> vector<64x512xf32>
    %c0_3 = arith.constant 0 : index
    %c0_4 = arith.constant 0 : index
    %3 = vector.load %arg2[%c0_3, %c0_4] : memref<1x512xf32, #tpu.memory_space<vmem>>, vector<1x512xf32>
    %4 = vector.broadcast %3 : vector<1x512xf32> to vector<64x512xf32>
    %5 = arith.addf %2, %4 : vector<64x512xf32>
    %6 = vector.shape_cast %5 : vector<64x512xf32> to vector<8x8x512xf32>
    %c0_5 = arith.constant 0 : index
    %c0_6 = arith.constant 0 : index
    %c0_7 = arith.constant 0 : index
    %7 = vector.load %arg9[%c0_5, %c0_6, %c0_7] : memref<8x8x512xf32, #tpu.memory_space<vmem>>, vector<8x8x512xf32>
    tpu.vector_store %arg9[%c0_5, %c0_6, %c0_7], %6 {strides = array<i32>} : memref<8x8x512xf32, #tpu.memory_space<vmem>>, vector<8x8x512xf32>,
    %c0_8 = arith.constant 0 : index
    %c0_9 = arith.constant 0 : index
    %8 = vector.load %arg3[%c0_8, %c0_9] : memref<128x1024xbf16, #tpu.memory_space<vmem>>, vector<128x1024xbf16>
    %c0_10 = arith.constant 0 : index
    %c0_11 = arith.constant 0 : index
    %9 = vector.load %arg4[%c0_10, %c0_11] : memref<128x512xbf16, #tpu.memory_space<vmem>>, vector<128x512xbf16>
    %c0_12 = arith.constant 0 : index
    %c0_13 = arith.constant 0 : index
    %10 = vector.load %arg5[%c0_12, %c0_13] : memref<1x512xf32, #tpu.memory_space<vmem>>, vector<1x512xf32>
    %11 = vector.shape_cast %10 : vector<1x512xf32> to vector<1x512xf32>
    %12 = vector.broadcast %11 : vector<1x512xf32> to vector<8x512xf32>
    %cst_14 = arith.constant 0.000000e+00 : f32
    %13 = vector.broadcast %cst_14 : f32 to vector<8x128xf32>
    %c0_15 = arith.constant 0 : index
    %c0_16 = arith.constant 0 : index
    %c0_17 = arith.constant 0 : index
    %14 = vector.load %arg9[%c0_15, %c0_16, %c0_17] : memref<8x8x512xf32, #tpu.memory_space<vmem>>, vector<1x8x512xf32>
    %15 = vector.shape_cast %14 : vector<1x8x512xf32> to vector<8x512xf32>
    %16 = vector.extract_strided_slice %15 {offsets = [0, 0], sizes = [8, 128], strides = [1, 1]} : vector<8x512xf32> to vector<8x128xf32>
    %cst_18 = arith.constant 0.000000e+00 : f32
    %17 = vector.broadcast %cst_18 : f32 to vector<8x128xf32>
    %18 = arith.subf %17, %16 : vector<8x128xf32>
    %19 = math.exp %18 : vector<8x128xf32>
    %cst_19 = arith.constant 1.000000e+00 : f32
    %20 = vector.broadcast %cst_19 : f32 to vector<8x128xf32>
    %21 = arith.addf %20, %19 : vector<8x128xf32>
    %22 = tpu.reciprocal %21 {approx = true} : vector<8x128xf32> -> vector<8x128xf32>
    %23 = vector.extract_strided_slice %15 {offsets = [0, 128], sizes = [8, 128], strides = [1, 1]} : vector<8x512xf32> to vector<8x128xf32>
    %cst_20 = arith.constant 0.000000e+00 : f32
    %24 = vector.broadcast %cst_20 : f32 to vector<8x128xf32>
    %25 = arith.subf %24, %23 : vector<8x128xf32>
    %26 = math.exp %25 : vector<8x128xf32>
    %cst_21 = arith.constant 1.000000e+00 : f32
    %27 = vector.broadcast %cst_21 : f32 to vector<8x128xf32>
    %28 = arith.addf %27, %26 : vector<8x128xf32>
    %29 = tpu.reciprocal %28 {approx = true} : vector<8x128xf32> -> vector<8x128xf32>
    %30 = vector.extract_strided_slice %15 {offsets = [0, 256], sizes = [8, 128], strides = [1, 1]} : vector<8x512xf32> to vector<8x128xf32>
    %31 = math.tanh %30 : vector<8x128xf32>
    %32 = vector.extract_strided_slice %15 {offsets = [0, 384], sizes = [8, 128], strides = [1, 1]} : vector<8x512xf32> to vector<8x128xf32>
    %cst_22 = arith.constant 0.000000e+00 : f32
    %33 = vector.broadcast %cst_22 : f32 to vector<8x128xf32>
    %34 = arith.subf %33, %32 : vector<8x128xf32>
    %35 = math.exp %34 : vector<8x128xf32>
    %cst_23 = arith.constant 1.000000e+00 : f32
    %36 = vector.broadcast %cst_23 : f32 to vector<8x128xf32>
    %37 = arith.addf %36, %35 : vector<8x128xf32>
    %38 = tpu.reciprocal %37 {approx = true} : vector<8x128xf32> -> vector<8x128xf32>
    %39 = arith.mulf %29, %13 : vector<8x128xf32>
    %40 = arith.mulf %22, %31 : vector<8x128xf32>
    %41 = arith.addf %39, %40 : vector<8x128xf32>
    %42 = math.tanh %41 : vector<8x128xf32>
    %43 = arith.mulf %38, %42 : vector<8x128xf32>
    %44 = arith.truncf %43 : vector<8x128xf32> to vector<8x128xbf16>
    %cst_24 = arith.constant dense<0.000000e+00> : vector<8x1024xf32>
    %45 = tpu.matmul %44, %8, %cst_24 {dimension_numbers = #tpu.dot_dimension_numbers<[1], [0], [0], [1], [0, 0, 1, 1], [], []>} : vector<8x128xbf16>, vector<128x1024xbf16>, vector<8x1024xf32> -> vector<8x1024xf32>
    %46 = arith.truncf %13 : vector<8x128xf32> to vector<8x128xbf16>
    %cst_25 = arith.constant dense<0.000000e+00> : vector<8x512xf32>
    %47 = tpu.matmul %46, %9, %cst_25 {dimension_numbers = #tpu.dot_dimension_numbers<[1], [0], [0], [1], [0, 0, 1, 1], [], []>} : vector<8x128xbf16>, vector<128x512xbf16>, vector<8x512xf32> -> vector<8x512xf32>
    %48 = vector.extract_strided_slice %45 {offsets = [0, 512], sizes = [8, 512], strides = [1, 1]} : vector<8x1024xf32> to vector<8x512xf32>
    %49 = arith.addf %48, %47 : vector<8x512xf32>
    %50 = arith.addf %49, %12 : vector<8x512xf32>
    %51 = vector.extract_strided_slice %50 {offsets = [0, 0], sizes = [8, 128], strides = [1, 1]} : vector<8x512xf32> to vector<8x128xf32>
    %cst_26 = arith.constant 0.000000e+00 : f32
    %52 = vector.broadcast %cst_26 : f32 to vector<8x128xf32>
    %53 = arith.subf %52, %51 : vector<8x128xf32>
    %54 = math.exp %53 : vector<8x128xf32>
    %cst_27 = arith.constant 1.000000e+00 : f32
    %55 = vector.broadcast %cst_27 : f32 to vector<8x128xf32>
    %56 = arith.addf %55, %54 : vector<8x128xf32>
    %57 = tpu.reciprocal %56 {approx = true} : vector<8x128xf32> -> vector<8x128xf32>
    %58 = vector.extract_strided_slice %50 {offsets = [0, 128], sizes = [8, 128], strides = [1, 1]} : vector<8x512xf32> to vector<8x128xf32>
    %cst_28 = arith.constant 0.000000e+00 : f32
    %59 = vector.broadcast %cst_28 : f32 to vector<8x128xf32>
    %60 = arith.subf %59, %58 : vector<8x128xf32>
    %61 = math.exp %60 : vector<8x128xf32>
    %cst_29 = arith.constant 1.000000e+00 : f32
    %62 = vector.broadcast %cst_29 : f32 to vector<8x128xf32>
    %63 = arith.addf %62, %61 : vector<8x128xf32>
    %64 = tpu.reciprocal %63 {approx = true} : vector<8x128xf32> -> vector<8x128xf32>
    %65 = vector.extract_strided_slice %50 {offsets = [0, 256], sizes = [8, 128], strides = [1, 1]} : vector<8x512xf32> to vector<8x128xf32>
    %66 = math.tanh %65 : vector<8x128xf32>
    %67 = vector.extract_strided_slice %50 {offsets = [0, 384], sizes = [8, 128], strides = [1, 1]} : vector<8x512xf32> to vector<8x128xf32>
    %cst_30 = arith.constant 0.000000e+00 : f32
    %68 = vector.broadcast %cst_30 : f32 to vector<8x128xf32>
    %69 = arith.subf %68, %67 : vector<8x128xf32>
    %70 = math.exp %69 : vector<8x128xf32>
    %cst_31 = arith.constant 1.000000e+00 : f32
    %71 = vector.broadcast %cst_31 : f32 to vector<8x128xf32>
    %72 = arith.addf %71, %70 : vector<8x128xf32>
    %73 = tpu.reciprocal %72 {approx = true} : vector<8x128xf32> -> vector<8x128xf32>
    %74 = arith.mulf %64, %13 : vector<8x128xf32>
    %75 = arith.mulf %57, %66 : vector<8x128xf32>
    %76 = arith.addf %74, %75 : vector<8x128xf32>
    %77 = math.tanh %76 : vector<8x128xf32>
    %78 = arith.mulf %73, %77 : vector<8x128xf32>
    %79 = vector.extract_strided_slice %45 {offsets = [0, 0], sizes = [8, 512], strides = [1, 1]} : vector<8x1024xf32> to vector<8x512xf32>
    %c1 = arith.constant 1 : index
    %c0_32 = arith.constant 0 : index
    %c0_33 = arith.constant 0 : index
    %80 = vector.load %arg9[%c1, %c0_32, %c0_33] : memref<8x8x512xf32, #tpu.memory_space<vmem>>, vector<1x8x512xf32>
    %81 = vector.shape_cast %80 : vector<1x8x512xf32> to vector<8x512xf32>
    %82 = arith.addf %79, %81 : vector<8x512xf32>
    %83 = vector.extract_strided_slice %82 {offsets = [0, 0], sizes = [8, 128], strides = [1, 1]} : vector<8x512xf32> to vector<8x128xf32>
    %cst_34 = arith.constant 0.000000e+00 : f32
    %84 = vector.broadcast %cst_34 : f32 to vector<8x128xf32>
    %85 = arith.subf %84, %83 : vector<8x128xf32>
    %86 = math.exp %85 : vector<8x128xf32>
    %cst_35 = arith.constant 1.000000e+00 : f32
    %87 = vector.broadcast %cst_35 : f32 to vector<8x128xf32>
    %88 = arith.addf %87, %86 : vector<8x128xf32>
    %89 = tpu.reciprocal %88 {approx = true} : vector<8x128xf32> -> vector<8x128xf32>
    %90 = vector.extract_strided_slice %82 {offsets = [0, 128], sizes = [8, 128], strides = [1, 1]} : vector<8x512xf32> to vector<8x128xf32>
    %cst_36 = arith.constant 0.000000e+00 : f32
    %91 = vector.broadcast %cst_36 : f32 to vector<8x128xf32>
    %92 = arith.subf %91, %90 : vector<8x128xf32>
    %93 = math.exp %92 : vector<8x128xf32>
    %cst_37 = arith.constant 1.000000e+00 : f32
    %94 = vector.broadcast %cst_37 : f32 to vector<8x128xf32>
    %95 = arith.addf %94, %93 : vector<8x128xf32>
    %96 = tpu.reciprocal %95 {approx = true} : vector<8x128xf32> -> vector<8x128xf32>
    %97 = vector.extract_strided_slice %82 {offsets = [0, 256], sizes = [8, 128], strides = [1, 1]} : vector<8x512xf32> to vector<8x128xf32>
    %98 = math.tanh %97 : vector<8x128xf32>
    %99 = vector.extract_strided_slice %82 {offsets = [0, 384], sizes = [8, 128], strides = [1, 1]} : vector<8x512xf32> to vector<8x128xf32>
    %cst_38 = arith.constant 0.000000e+00 : f32
    %100 = vector.broadcast %cst_38 : f32 to vector<8x128xf32>
    %101 = arith.subf %100, %99 : vector<8x128xf32>
    %102 = math.exp %101 : vector<8x128xf32>
    %cst_39 = arith.constant 1.000000e+00 : f32
    %103 = vector.broadcast %cst_39 : f32 to vector<8x128xf32>
    %104 = arith.addf %103, %102 : vector<8x128xf32>
    %105 = tpu.reciprocal %104 {approx = true} : vector<8x128xf32> -> vector<8x128xf32>
    %106 = arith.mulf %96, %41 : vector<8x128xf32>
    %107 = arith.mulf %89, %98 : vector<8x128xf32>
    %108 = arith.addf %106, %107 : vector<8x128xf32>
    %109 = math.tanh %108 : vector<8x128xf32>
    %110 = arith.mulf %105, %109 : vector<8x128xf32>
    %111 = arith.truncf %110 : vector<8x128xf32> to vector<8x128xbf16>
    %cst_40 = arith.constant dense<0.000000e+00> : vector<8x1024xf32>
    %112 = tpu.matmul %111, %8, %cst_40 {dimension_numbers = #tpu.dot_dimension_numbers<[1], [0], [0], [1], [0, 0, 1, 1], [], []>} : vector<8x128xbf16>, vector<128x1024xbf16>, vector<8x1024xf32> -> vector<8x1024xf32>
    %113 = arith.truncf %78 : vector<8x128xf32> to vector<8x128xbf16>
    %cst_41 = arith.constant dense<0.000000e+00> : vector<8x512xf32>
    %114 = tpu.matmul %113, %9, %cst_41 {dimension_numbers = #tpu.dot_dimension_numbers<[1], [0], [0], [1], [0, 0, 1, 1], [], []>} : vector<8x128xbf16>, vector<128x512xbf16>, vector<8x512xf32> -> vector<8x512xf32>
    %115 = vector.extract_strided_slice %112 {offsets = [0, 512], sizes = [8, 512], strides = [1, 1]} : vector<8x1024xf32> to vector<8x512xf32>
    %116 = arith.addf %115, %114 : vector<8x512xf32>
    %117 = arith.addf %116, %12 : vector<8x512xf32>
    %118 = vector.extract_strided_slice %117 {offsets = [0, 0], sizes = [8, 128], strides = [1, 1]} : vector<8x512xf32> to vector<8x128xf32>
    %cst_42 = arith.constant 0.000000e+00 : f32
    %119 = vector.broadcast %cst_42 : f32 to vector<8x128xf32>
    %120 = arith.subf %119, %118 : vector<8x128xf32>
    %121 = math.exp %120 : vector<8x128xf32>
    %cst_43 = arith.constant 1.000000e+00 : f32
    %122 = vector.broadcast %cst_43 : f32 to vector<8x128xf32>
    %123 = arith.addf %122, %121 : vector<8x128xf32>
    %124 = tpu.reciprocal %123 {approx = true} : vector<8x128xf32> -> vector<8x128xf32>
    %125 = vector.extract_strided_slice %117 {offsets = [0, 128], sizes = [8, 128], strides = [1, 1]} : vector<8x512xf32> to vector<8x128xf32>
    %cst_44 = arith.constant 0.000000e+00 : f32
    %126 = vector.broadcast %cst_44 : f32 to vector<8x128xf32>
    %127 = arith.subf %126, %125 : vector<8x128xf32>
    %128 = math.exp %127 : vector<8x128xf32>
    %cst_45 = arith.constant 1.000000e+00 : f32
    %129 = vector.broadcast %cst_45 : f32 to vector<8x128xf32>
    %130 = arith.addf %129, %128 : vector<8x128xf32>
    %131 = tpu.reciprocal %130 {approx = true} : vector<8x128xf32> -> vector<8x128xf32>
    %132 = vector.extract_strided_slice %117 {offsets = [0, 256], sizes = [8, 128], strides = [1, 1]} : vector<8x512xf32> to vector<8x128xf32>
    %133 = math.tanh %132 : vector<8x128xf32>
    %134 = vector.extract_strided_slice %117 {offsets = [0, 384], sizes = [8, 128], strides = [1, 1]} : vector<8x512xf32> to vector<8x128xf32>
    %cst_46 = arith.constant 0.000000e+00 : f32
    %135 = vector.broadcast %cst_46 : f32 to vector<8x128xf32>
    %136 = arith.subf %135, %134 : vector<8x128xf32>
    %137 = math.exp %136 : vector<8x128xf32>
    %cst_47 = arith.constant 1.000000e+00 : f32
    %138 = vector.broadcast %cst_47 : f32 to vector<8x128xf32>
    %139 = arith.addf %138, %137 : vector<8x128xf32>
    %140 = tpu.reciprocal %139 {approx = true} : vector<8x128xf32> -> vector<8x128xf32>
    %141 = arith.mulf %131, %76 : vector<8x128xf32>
    %142 = arith.mulf %124, %133 : vector<8x128xf32>
    %143 = arith.addf %141, %142 : vector<8x128xf32>
    %144 = math.tanh %143 : vector<8x128xf32>
    %145 = arith.mulf %140, %144 : vector<8x128xf32>
    %146 = vector.extract_strided_slice %112 {offsets = [0, 0], sizes = [8, 512], strides = [1, 1]} : vector<8x1024xf32> to vector<8x512xf32>
    %c2 = arith.constant 2 : index
    %c0_48 = arith.constant 0 : index
    %c0_49 = arith.constant 0 : index
    %147 = vector.load %arg9[%c2, %c0_48, %c0_49] : memref<8x8x512xf32, #tpu.memory_space<vmem>>, vector<1x8x512xf32>
    %148 = vector.shape_cast %147 : vector<1x8x512xf32> to vector<8x512xf32>
    %149 = arith.addf %146, %148 : vector<8x512xf32>
    %150 = vector.extract_strided_slice %149 {offsets = [0, 0], sizes = [8, 128], strides = [1, 1]} : vector<8x512xf32> to vector<8x128xf32>
    %cst_50 = arith.constant 0.000000e+00 : f32
    %151 = vector.broadcast %cst_50 : f32 to vector<8x128xf32>
    %152 = arith.subf %151, %150 : vector<8x128xf32>
    %153 = math.exp %152 : vector<8x128xf32>
    %cst_51 = arith.constant 1.000000e+00 : f32
    %154 = vector.broadcast %cst_51 : f32 to vector<8x128xf32>
    %155 = arith.addf %154, %153 : vector<8x128xf32>
    %156 = tpu.reciprocal %155 {approx = true} : vector<8x128xf32> -> vector<8x128xf32>
    %157 = vector.extract_strided_slice %149 {offsets = [0, 128], sizes = [8, 128], strides = [1, 1]} : vector<8x512xf32> to vector<8x128xf32>
    %cst_52 = arith.constant 0.000000e+00 : f32
    %158 = vector.broadcast %cst_52 : f32 to vector<8x128xf32>
    %159 = arith.subf %158, %157 : vector<8x128xf32>
    %160 = math.exp %159 : vector<8x128xf32>
    %cst_53 = arith.constant 1.000000e+00 : f32
    %161 = vector.broadcast %cst_53 : f32 to vector<8x128xf32>
    %162 = arith.addf %161, %160 : vector<8x128xf32>
    %163 = tpu.reciprocal %162 {approx = true} : vector<8x128xf32> -> vector<8x128xf32>
    %164 = vector.extract_strided_slice %149 {offsets = [0, 256], sizes = [8, 128], strides = [1, 1]} : vector<8x512xf32> to vector<8x128xf32>
    %165 = math.tanh %164 : vector<8x128xf32>
    %166 = vector.extract_strided_slice %149 {offsets = [0, 384], sizes = [8, 128], strides = [1, 1]} : vector<8x512xf32> to vector<8x128xf32>
    %cst_54 = arith.constant 0.000000e+00 : f32
    %167 = vector.broadcast %cst_54 : f32 to vector<8x128xf32>
    %168 = arith.subf %167, %166 : vector<8x128xf32>
    %169 = math.exp %168 : vector<8x128xf32>
    %cst_55 = arith.constant 1.000000e+00 : f32
    %170 = vector.broadcast %cst_55 : f32 to vector<8x128xf32>
    %171 = arith.addf %170, %169 : vector<8x128xf32>
    %172 = tpu.reciprocal %171 {approx = true} : vector<8x128xf32> -> vector<8x128xf32>
    %173 = arith.mulf %163, %108 : vector<8x128xf32>
    %174 = arith.mulf %156, %165 : vector<8x128xf32>
    %175 = arith.addf %173, %174 : vector<8x128xf32>
    %176 = math.tanh %175 : vector<8x128xf32>
    %177 = arith.mulf %172, %176 : vector<8x128xf32>
    %178 = arith.truncf %177 : vector<8x128xf32> to vector<8x128xbf16>
    %cst_56 = arith.constant dense<0.000000e+00> : vector<8x1024xf32>
    %179 = tpu.matmul %178, %8, %cst_56 {dimension_numbers = #tpu.dot_dimension_numbers<[1], [0], [0], [1], [0, 0, 1, 1], [], []>} : vector<8x128xbf16>, vector<128x1024xbf16>, vector<8x1024xf32> -> vector<8x1024xf32>
    %180 = arith.truncf %145 : vector<8x128xf32> to vector<8x128xbf16>
    %cst_57 = arith.constant dense<0.000000e+00> : vector<8x512xf32>
    %181 = tpu.matmul %180, %9, %cst_57 {dimension_numbers = #tpu.dot_dimension_numbers<[1], [0], [0], [1], [0, 0, 1, 1], [], []>} : vector<8x128xbf16>, vector<128x512xbf16>, vector<8x512xf32> -> vector<8x512xf32>
    %182 = vector.extract_strided_slice %179 {offsets = [0, 512], sizes = [8, 512], strides = [1, 1]} : vector<8x1024xf32> to vector<8x512xf32>
    %183 = arith.addf %182, %181 : vector<8x512xf32>
    %184 = arith.addf %183, %12 : vector<8x512xf32>
    %185 = vector.extract_strided_slice %184 {offsets = [0, 0], sizes = [8, 128], strides = [1, 1]} : vector<8x512xf32> to vector<8x128xf32>
    %cst_58 = arith.constant 0.000000e+00 : f32
    %186 = vector.broadcast %cst_58 : f32 to vector<8x128xf32>
    %187 = arith.subf %186, %185 : vector<8x128xf32>
    %188 = math.exp %187 : vector<8x128xf32>
    %cst_59 = arith.constant 1.000000e+00 : f32
    %189 = vector.broadcast %cst_59 : f32 to vector<8x128xf32>
    %190 = arith.addf %189, %188 : vector<8x128xf32>
    %191 = tpu.reciprocal %190 {approx = true} : vector<8x128xf32> -> vector<8x128xf32>
    %192 = vector.extract_strided_slice %184 {offsets = [0, 128], sizes = [8, 128], strides = [1, 1]} : vector<8x512xf32> to vector<8x128xf32>
    %cst_60 = arith.constant 0.000000e+00 : f32
    %193 = vector.broadcast %cst_60 : f32 to vector<8x128xf32>
    %194 = arith.subf %193, %192 : vector<8x128xf32>
    %195 = math.exp %194 : vector<8x128xf32>
    %cst_61 = arith.constant 1.000000e+00 : f32
    %196 = vector.broadcast %cst_61 : f32 to vector<8x128xf32>
    %197 = arith.addf %196, %195 : vector<8x128xf32>
    %198 = tpu.reciprocal %197 {approx = true} : vector<8x128xf32> -> vector<8x128xf32>
    %199 = vector.extract_strided_slice %184 {offsets = [0, 256], sizes = [8, 128], strides = [1, 1]} : vector<8x512xf32> to vector<8x128xf32>
    %200 = math.tanh %199 : vector<8x128xf32>
    %201 = vector.extract_strided_slice %184 {offsets = [0, 384], sizes = [8, 128], strides = [1, 1]} : vector<8x512xf32> to vector<8x128xf32>
    %cst_62 = arith.constant 0.000000e+00 : f32
    %202 = vector.broadcast %cst_62 : f32 to vector<8x128xf32>
    %203 = arith.subf %202, %201 : vector<8x128xf32>
    %204 = math.exp %203 : vector<8x128xf32>
    %cst_63 = arith.constant 1.000000e+00 : f32
    %205 = vector.broadcast %cst_63 : f32 to vector<8x128xf32>
    %206 = arith.addf %205, %204 : vector<8x128xf32>
    %207 = tpu.reciprocal %206 {approx = true} : vector<8x128xf32> -> vector<8x128xf32>
    %208 = arith.mulf %198, %143 : vector<8x128xf32>
    %209 = arith.mulf %191, %200 : vector<8x128xf32>
    %210 = arith.addf %208, %209 : vector<8x128xf32>
    %211 = math.tanh %210 : vector<8x128xf32>
    %212 = arith.mulf %207, %211 : vector<8x128xf32>
    %213 = vector.extract_strided_slice %179 {offsets = [0, 0], sizes = [8, 512], strides = [1, 1]} : vector<8x1024xf32> to vector<8x512xf32>
    %c3 = arith.constant 3 : index
    %c0_64 = arith.constant 0 : index
    %c0_65 = arith.constant 0 : index
    %214 = vector.load %arg9[%c3, %c0_64, %c0_65] : memref<8x8x512xf32, #tpu.memory_space<vmem>>, vector<1x8x512xf32>
    %215 = vector.shape_cast %214 : vector<1x8x512xf32> to vector<8x512xf32>
    %216 = arith.addf %213, %215 : vector<8x512xf32>
    %217 = vector.extract_strided_slice %216 {offsets = [0, 0], sizes = [8, 128], strides = [1, 1]} : vector<8x512xf32> to vector<8x128xf32>
    %cst_66 = arith.constant 0.000000e+00 : f32
    %218 = vector.broadcast %cst_66 : f32 to vector<8x128xf32>
    %219 = arith.subf %218, %217 : vector<8x128xf32>
    %220 = math.exp %219 : vector<8x128xf32>
    %cst_67 = arith.constant 1.000000e+00 : f32
    %221 = vector.broadcast %cst_67 : f32 to vector<8x128xf32>
    %222 = arith.addf %221, %220 : vector<8x128xf32>
    %223 = tpu.reciprocal %222 {approx = true} : vector<8x128xf32> -> vector<8x128xf32>
    %224 = vector.extract_strided_slice %216 {offsets = [0, 128], sizes = [8, 128], strides = [1, 1]} : vector<8x512xf32> to vector<8x128xf32>
    %cst_68 = arith.constant 0.000000e+00 : f32
    %225 = vector.broadcast %cst_68 : f32 to vector<8x128xf32>
    %226 = arith.subf %225, %224 : vector<8x128xf32>
    %227 = math.exp %226 : vector<8x128xf32>
    %cst_69 = arith.constant 1.000000e+00 : f32
    %228 = vector.broadcast %cst_69 : f32 to vector<8x128xf32>
    %229 = arith.addf %228, %227 : vector<8x128xf32>
    %230 = tpu.reciprocal %229 {approx = true} : vector<8x128xf32> -> vector<8x128xf32>
    %231 = vector.extract_strided_slice %216 {offsets = [0, 256], sizes = [8, 128], strides = [1, 1]} : vector<8x512xf32> to vector<8x128xf32>
    %232 = math.tanh %231 : vector<8x128xf32>
    %233 = vector.extract_strided_slice %216 {offsets = [0, 384], sizes = [8, 128], strides = [1, 1]} : vector<8x512xf32> to vector<8x128xf32>
    %cst_70 = arith.constant 0.000000e+00 : f32
    %234 = vector.broadcast %cst_70 : f32 to vector<8x128xf32>
    %235 = arith.subf %234, %233 : vector<8x128xf32>
    %236 = math.exp %235 : vector<8x128xf32>
    %cst_71 = arith.constant 1.000000e+00 : f32
    %237 = vector.broadcast %cst_71 : f32 to vector<8x128xf32>
    %238 = arith.addf %237, %236 : vector<8x128xf32>
    %239 = tpu.reciprocal %238 {approx = true} : vector<8x128xf32> -> vector<8x128xf32>
    %240 = arith.mulf %230, %175 : vector<8x128xf32>
    %241 = arith.mulf %223, %232 : vector<8x128xf32>
    %242 = arith.addf %240, %241 : vector<8x128xf32>
    %243 = math.tanh %242 : vector<8x128xf32>
    %244 = arith.mulf %239, %243 : vector<8x128xf32>
    %245 = arith.truncf %244 : vector<8x128xf32> to vector<8x128xbf16>
    %cst_72 = arith.constant dense<0.000000e+00> : vector<8x1024xf32>
    %246 = tpu.matmul %245, %8, %cst_72 {dimension_numbers = #tpu.dot_dimension_numbers<[1], [0], [0], [1], [0, 0, 1, 1], [], []>} : vector<8x128xbf16>, vector<128x1024xbf16>, vector<8x1024xf32> -> vector<8x1024xf32>
    %247 = arith.truncf %212 : vector<8x128xf32> to vector<8x128xbf16>
    %cst_73 = arith.constant dense<0.000000e+00> : vector<8x512xf32>
    %248 = tpu.matmul %247, %9, %cst_73 {dimension_numbers = #tpu.dot_dimension_numbers<[1], [0], [0], [1], [0, 0, 1, 1], [], []>} : vector<8x128xbf16>, vector<128x512xbf16>, vector<8x512xf32> -> vector<8x512xf32>
    %249 = vector.extract_strided_slice %246 {offsets = [0, 512], sizes = [8, 512], strides = [1, 1]} : vector<8x1024xf32> to vector<8x512xf32>
    %250 = arith.addf %249, %248 : vector<8x512xf32>
    %251 = arith.addf %250, %12 : vector<8x512xf32>
    %252 = vector.extract_strided_slice %251 {offsets = [0, 0], sizes = [8, 128], strides = [1, 1]} : vector<8x512xf32> to vector<8x128xf32>
    %cst_74 = arith.constant 0.000000e+00 : f32
    %253 = vector.broadcast %cst_74 : f32 to vector<8x128xf32>
    %254 = arith.subf %253, %252 : vector<8x128xf32>
    %255 = math.exp %254 : vector<8x128xf32>
    %cst_75 = arith.constant 1.000000e+00 : f32
    %256 = vector.broadcast %cst_75 : f32 to vector<8x128xf32>
    %257 = arith.addf %256, %255 : vector<8x128xf32>
    %258 = tpu.reciprocal %257 {approx = true} : vector<8x128xf32> -> vector<8x128xf32>
    %259 = vector.extract_strided_slice %251 {offsets = [0, 128], sizes = [8, 128], strides = [1, 1]} : vector<8x512xf32> to vector<8x128xf32>
    %cst_76 = arith.constant 0.000000e+00 : f32
    %260 = vector.broadcast %cst_76 : f32 to vector<8x128xf32>
    %261 = arith.subf %260, %259 : vector<8x128xf32>
    %262 = math.exp %261 : vector<8x128xf32>
    %cst_77 = arith.constant 1.000000e+00 : f32
    %263 = vector.broadcast %cst_77 : f32 to vector<8x128xf32>
    %264 = arith.addf %263, %262 : vector<8x128xf32>
    %265 = tpu.reciprocal %264 {approx = true} : vector<8x128xf32> -> vector<8x128xf32>
    %266 = vector.extract_strided_slice %251 {offsets = [0, 256], sizes = [8, 128], strides = [1, 1]} : vector<8x512xf32> to vector<8x128xf32>
    %267 = math.tanh %266 : vector<8x128xf32>
    %268 = vector.extract_strided_slice %251 {offsets = [0, 384], sizes = [8, 128], strides = [1, 1]} : vector<8x512xf32> to vector<8x128xf32>
    %cst_78 = arith.constant 0.000000e+00 : f32
    %269 = vector.broadcast %cst_78 : f32 to vector<8x128xf32>
    %270 = arith.subf %269, %268 : vector<8x128xf32>
    %271 = math.exp %270 : vector<8x128xf32>
    %cst_79 = arith.constant 1.000000e+00 : f32
    %272 = vector.broadcast %cst_79 : f32 to vector<8x128xf32>
    %273 = arith.addf %272, %271 : vector<8x128xf32>
    %274 = tpu.reciprocal %273 {approx = true} : vector<8x128xf32> -> vector<8x128xf32>
    %275 = arith.mulf %265, %210 : vector<8x128xf32>
    %276 = arith.mulf %258, %267 : vector<8x128xf32>
    %277 = arith.addf %275, %276 : vector<8x128xf32>
    %278 = math.tanh %277 : vector<8x128xf32>
    %279 = arith.mulf %274, %278 : vector<8x128xf32>
    %280 = vector.extract_strided_slice %246 {offsets = [0, 0], sizes = [8, 512], strides = [1, 1]} : vector<8x1024xf32> to vector<8x512xf32>
    %c4 = arith.constant 4 : index
    %c0_80 = arith.constant 0 : index
    %c0_81 = arith.constant 0 : index
    %281 = vector.load %arg9[%c4, %c0_80, %c0_81] : memref<8x8x512xf32, #tpu.memory_space<vmem>>, vector<1x8x512xf32>
    %282 = vector.shape_cast %281 : vector<1x8x512xf32> to vector<8x512xf32>
    %283 = arith.addf %280, %282 : vector<8x512xf32>
    %284 = vector.extract_strided_slice %283 {offsets = [0, 0], sizes = [8, 128], strides = [1, 1]} : vector<8x512xf32> to vector<8x128xf32>
    %cst_82 = arith.constant 0.000000e+00 : f32
    %285 = vector.broadcast %cst_82 : f32 to vector<8x128xf32>
    %286 = arith.subf %285, %284 : vector<8x128xf32>
    %287 = math.exp %286 : vector<8x128xf32>
    %cst_83 = arith.constant 1.000000e+00 : f32
    %288 = vector.broadcast %cst_83 : f32 to vector<8x128xf32>
    %289 = arith.addf %288, %287 : vector<8x128xf32>
    %290 = tpu.reciprocal %289 {approx = true} : vector<8x128xf32> -> vector<8x128xf32>
    %291 = vector.extract_strided_slice %283 {offsets = [0, 128], sizes = [8, 128], strides = [1, 1]} : vector<8x512xf32> to vector<8x128xf32>
    %cst_84 = arith.constant 0.000000e+00 : f32
    %292 = vector.broadcast %cst_84 : f32 to vector<8x128xf32>
    %293 = arith.subf %292, %291 : vector<8x128xf32>
    %294 = math.exp %293 : vector<8x128xf32>
    %cst_85 = arith.constant 1.000000e+00 : f32
    %295 = vector.broadcast %cst_85 : f32 to vector<8x128xf32>
    %296 = arith.addf %295, %294 : vector<8x128xf32>
    %297 = tpu.reciprocal %296 {approx = true} : vector<8x128xf32> -> vector<8x128xf32>
    %298 = vector.extract_strided_slice %283 {offsets = [0, 256], sizes = [8, 128], strides = [1, 1]} : vector<8x512xf32> to vector<8x128xf32>
    %299 = math.tanh %298 : vector<8x128xf32>
    %300 = vector.extract_strided_slice %283 {offsets = [0, 384], sizes = [8, 128], strides = [1, 1]} : vector<8x512xf32> to vector<8x128xf32>
    %cst_86 = arith.constant 0.000000e+00 : f32
    %301 = vector.broadcast %cst_86 : f32 to vector<8x128xf32>
    %302 = arith.subf %301, %300 : vector<8x128xf32>
    %303 = math.exp %302 : vector<8x128xf32>
    %cst_87 = arith.constant 1.000000e+00 : f32
    %304 = vector.broadcast %cst_87 : f32 to vector<8x128xf32>
    %305 = arith.addf %304, %303 : vector<8x128xf32>
    %306 = tpu.reciprocal %305 {approx = true} : vector<8x128xf32> -> vector<8x128xf32>
    %307 = arith.mulf %297, %242 : vector<8x128xf32>
    %308 = arith.mulf %290, %299 : vector<8x128xf32>
    %309 = arith.addf %307, %308 : vector<8x128xf32>
    %310 = math.tanh %309 : vector<8x128xf32>
    %311 = arith.mulf %306, %310 : vector<8x128xf32>
    %312 = arith.truncf %311 : vector<8x128xf32> to vector<8x128xbf16>
    %cst_88 = arith.constant dense<0.000000e+00> : vector<8x1024xf32>
    %313 = tpu.matmul %312, %8, %cst_88 {dimension_numbers = #tpu.dot_dimension_numbers<[1], [0], [0], [1], [0, 0, 1, 1], [], []>} : vector<8x128xbf16>, vector<128x1024xbf16>, vector<8x1024xf32> -> vector<8x1024xf32>
    %314 = arith.truncf %279 : vector<8x128xf32> to vector<8x128xbf16>
    %cst_89 = arith.constant dense<0.000000e+00> : vector<8x512xf32>
    %315 = tpu.matmul %314, %9, %cst_89 {dimension_numbers = #tpu.dot_dimension_numbers<[1], [0], [0], [1], [0, 0, 1, 1], [], []>} : vector<8x128xbf16>, vector<128x512xbf16>, vector<8x512xf32> -> vector<8x512xf32>
    %316 = vector.extract_strided_slice %313 {offsets = [0, 512], sizes = [8, 512], strides = [1, 1]} : vector<8x1024xf32> to vector<8x512xf32>
    %317 = arith.addf %316, %315 : vector<8x512xf32>
    %318 = arith.addf %317, %12 : vector<8x512xf32>
    %319 = vector.extract_strided_slice %318 {offsets = [0, 0], sizes = [8, 128], strides = [1, 1]} : vector<8x512xf32> to vector<8x128xf32>
    %cst_90 = arith.constant 0.000000e+00 : f32
    %320 = vector.broadcast %cst_90 : f32 to vector<8x128xf32>
    %321 = arith.subf %320, %319 : vector<8x128xf32>
    %322 = math.exp %321 : vector<8x128xf32>
    %cst_91 = arith.constant 1.000000e+00 : f32
    %323 = vector.broadcast %cst_91 : f32 to vector<8x128xf32>
    %324 = arith.addf %323, %322 : vector<8x128xf32>
    %325 = tpu.reciprocal %324 {approx = true} : vector<8x128xf32> -> vector<8x128xf32>
    %326 = vector.extract_strided_slice %318 {offsets = [0, 128], sizes = [8, 128], strides = [1, 1]} : vector<8x512xf32> to vector<8x128xf32>
    %cst_92 = arith.constant 0.000000e+00 : f32
    %327 = vector.broadcast %cst_92 : f32 to vector<8x128xf32>
    %328 = arith.subf %327, %326 : vector<8x128xf32>
    %329 = math.exp %328 : vector<8x128xf32>
    %cst_93 = arith.constant 1.000000e+00 : f32
    %330 = vector.broadcast %cst_93 : f32 to vector<8x128xf32>
    %331 = arith.addf %330, %329 : vector<8x128xf32>
    %332 = tpu.reciprocal %331 {approx = true} : vector<8x128xf32> -> vector<8x128xf32>
    %333 = vector.extract_strided_slice %318 {offsets = [0, 256], sizes = [8, 128], strides = [1, 1]} : vector<8x512xf32> to vector<8x128xf32>
    %334 = math.tanh %333 : vector<8x128xf32>
    %335 = vector.extract_strided_slice %318 {offsets = [0, 384], sizes = [8, 128], strides = [1, 1]} : vector<8x512xf32> to vector<8x128xf32>
    %cst_94 = arith.constant 0.000000e+00 : f32
    %336 = vector.broadcast %cst_94 : f32 to vector<8x128xf32>
    %337 = arith.subf %336, %335 : vector<8x128xf32>
    %338 = math.exp %337 : vector<8x128xf32>
    %cst_95 = arith.constant 1.000000e+00 : f32
    %339 = vector.broadcast %cst_95 : f32 to vector<8x128xf32>
    %340 = arith.addf %339, %338 : vector<8x128xf32>
    %341 = tpu.reciprocal %340 {approx = true} : vector<8x128xf32> -> vector<8x128xf32>
    %342 = arith.mulf %332, %277 : vector<8x128xf32>
    %343 = arith.mulf %325, %334 : vector<8x128xf32>
    %344 = arith.addf %342, %343 : vector<8x128xf32>
    %345 = math.tanh %344 : vector<8x128xf32>
    %346 = arith.mulf %341, %345 : vector<8x128xf32>
    %347 = vector.extract_strided_slice %313 {offsets = [0, 0], sizes = [8, 512], strides = [1, 1]} : vector<8x1024xf32> to vector<8x512xf32>
    %c5 = arith.constant 5 : index
    %c0_96 = arith.constant 0 : index
    %c0_97 = arith.constant 0 : index
    %348 = vector.load %arg9[%c5, %c0_96, %c0_97] : memref<8x8x512xf32, #tpu.memory_space<vmem>>, vector<1x8x512xf32>
    %349 = vector.shape_cast %348 : vector<1x8x512xf32> to vector<8x512xf32>
    %350 = arith.addf %347, %349 : vector<8x512xf32>
    %351 = vector.extract_strided_slice %350 {offsets = [0, 0], sizes = [8, 128], strides = [1, 1]} : vector<8x512xf32> to vector<8x128xf32>
    %cst_98 = arith.constant 0.000000e+00 : f32
    %352 = vector.broadcast %cst_98 : f32 to vector<8x128xf32>
    %353 = arith.subf %352, %351 : vector<8x128xf32>
    %354 = math.exp %353 : vector<8x128xf32>
    %cst_99 = arith.constant 1.000000e+00 : f32
    %355 = vector.broadcast %cst_99 : f32 to vector<8x128xf32>
    %356 = arith.addf %355, %354 : vector<8x128xf32>
    %357 = tpu.reciprocal %356 {approx = true} : vector<8x128xf32> -> vector<8x128xf32>
    %358 = vector.extract_strided_slice %350 {offsets = [0, 128], sizes = [8, 128], strides = [1, 1]} : vector<8x512xf32> to vector<8x128xf32>
    %cst_100 = arith.constant 0.000000e+00 : f32
    %359 = vector.broadcast %cst_100 : f32 to vector<8x128xf32>
    %360 = arith.subf %359, %358 : vector<8x128xf32>
    %361 = math.exp %360 : vector<8x128xf32>
    %cst_101 = arith.constant 1.000000e+00 : f32
    %362 = vector.broadcast %cst_101 : f32 to vector<8x128xf32>
    %363 = arith.addf %362, %361 : vector<8x128xf32>
    %364 = tpu.reciprocal %363 {approx = true} : vector<8x128xf32> -> vector<8x128xf32>
    %365 = vector.extract_strided_slice %350 {offsets = [0, 256], sizes = [8, 128], strides = [1, 1]} : vector<8x512xf32> to vector<8x128xf32>
    %366 = math.tanh %365 : vector<8x128xf32>
    %367 = vector.extract_strided_slice %350 {offsets = [0, 384], sizes = [8, 128], strides = [1, 1]} : vector<8x512xf32> to vector<8x128xf32>
    %cst_102 = arith.constant 0.000000e+00 : f32
    %368 = vector.broadcast %cst_102 : f32 to vector<8x128xf32>
    %369 = arith.subf %368, %367 : vector<8x128xf32>
    %370 = math.exp %369 : vector<8x128xf32>
    %cst_103 = arith.constant 1.000000e+00 : f32
    %371 = vector.broadcast %cst_103 : f32 to vector<8x128xf32>
    %372 = arith.addf %371, %370 : vector<8x128xf32>
    %373 = tpu.reciprocal %372 {approx = true} : vector<8x128xf32> -> vector<8x128xf32>
    %374 = arith.mulf %364, %309 : vector<8x128xf32>
    %375 = arith.mulf %357, %366 : vector<8x128xf32>
    %376 = arith.addf %374, %375 : vector<8x128xf32>
    %377 = math.tanh %376 : vector<8x128xf32>
    %378 = arith.mulf %373, %377 : vector<8x128xf32>
    %379 = arith.truncf %378 : vector<8x128xf32> to vector<8x128xbf16>
    %cst_104 = arith.constant dense<0.000000e+00> : vector<8x1024xf32>
    %380 = tpu.matmul %379, %8, %cst_104 {dimension_numbers = #tpu.dot_dimension_numbers<[1], [0], [0], [1], [0, 0, 1, 1], [], []>} : vector<8x128xbf16>, vector<128x1024xbf16>, vector<8x1024xf32> -> vector<8x1024xf32>
    %381 = arith.truncf %346 : vector<8x128xf32> to vector<8x128xbf16>
    %cst_105 = arith.constant dense<0.000000e+00> : vector<8x512xf32>
    %382 = tpu.matmul %381, %9, %cst_105 {dimension_numbers = #tpu.dot_dimension_numbers<[1], [0], [0], [1], [0, 0, 1, 1], [], []>} : vector<8x128xbf16>, vector<128x512xbf16>, vector<8x512xf32> -> vector<8x512xf32>
    %383 = vector.extract_strided_slice %380 {offsets = [0, 512], sizes = [8, 512], strides = [1, 1]} : vector<8x1024xf32> to vector<8x512xf32>
    %384 = arith.addf %383, %382 : vector<8x512xf32>
    %385 = arith.addf %384, %12 : vector<8x512xf32>
    %386 = vector.extract_strided_slice %385 {offsets = [0, 0], sizes = [8, 128], strides = [1, 1]} : vector<8x512xf32> to vector<8x128xf32>
    %cst_106 = arith.constant 0.000000e+00 : f32
    %387 = vector.broadcast %cst_106 : f32 to vector<8x128xf32>
    %388 = arith.subf %387, %386 : vector<8x128xf32>
    %389 = math.exp %388 : vector<8x128xf32>
    %cst_107 = arith.constant 1.000000e+00 : f32
    %390 = vector.broadcast %cst_107 : f32 to vector<8x128xf32>
    %391 = arith.addf %390, %389 : vector<8x128xf32>
    %392 = tpu.reciprocal %391 {approx = true} : vector<8x128xf32> -> vector<8x128xf32>
    %393 = vector.extract_strided_slice %385 {offsets = [0, 128], sizes = [8, 128], strides = [1, 1]} : vector<8x512xf32> to vector<8x128xf32>
    %cst_108 = arith.constant 0.000000e+00 : f32
    %394 = vector.broadcast %cst_108 : f32 to vector<8x128xf32>
    %395 = arith.subf %394, %393 : vector<8x128xf32>
    %396 = math.exp %395 : vector<8x128xf32>
    %cst_109 = arith.constant 1.000000e+00 : f32
    %397 = vector.broadcast %cst_109 : f32 to vector<8x128xf32>
    %398 = arith.addf %397, %396 : vector<8x128xf32>
    %399 = tpu.reciprocal %398 {approx = true} : vector<8x128xf32> -> vector<8x128xf32>
    %400 = vector.extract_strided_slice %385 {offsets = [0, 256], sizes = [8, 128], strides = [1, 1]} : vector<8x512xf32> to vector<8x128xf32>
    %401 = math.tanh %400 : vector<8x128xf32>
    %402 = vector.extract_strided_slice %385 {offsets = [0, 384], sizes = [8, 128], strides = [1, 1]} : vector<8x512xf32> to vector<8x128xf32>
    %cst_110 = arith.constant 0.000000e+00 : f32
    %403 = vector.broadcast %cst_110 : f32 to vector<8x128xf32>
    %404 = arith.subf %403, %402 : vector<8x128xf32>
    %405 = math.exp %404 : vector<8x128xf32>
    %cst_111 = arith.constant 1.000000e+00 : f32
    %406 = vector.broadcast %cst_111 : f32 to vector<8x128xf32>
    %407 = arith.addf %406, %405 : vector<8x128xf32>
    %408 = tpu.reciprocal %407 {approx = true} : vector<8x128xf32> -> vector<8x128xf32>
    %409 = arith.mulf %399, %344 : vector<8x128xf32>
    %410 = arith.mulf %392, %401 : vector<8x128xf32>
    %411 = arith.addf %409, %410 : vector<8x128xf32>
    %412 = math.tanh %411 : vector<8x128xf32>
    %413 = arith.mulf %408, %412 : vector<8x128xf32>
    %414 = vector.extract_strided_slice %380 {offsets = [0, 0], sizes = [8, 512], strides = [1, 1]} : vector<8x1024xf32> to vector<8x512xf32>
    %c6 = arith.constant 6 : index
    %c0_112 = arith.constant 0 : index
    %c0_113 = arith.constant 0 : index
    %415 = vector.load %arg9[%c6, %c0_112, %c0_113] : memref<8x8x512xf32, #tpu.memory_space<vmem>>, vector<1x8x512xf32>
    %416 = vector.shape_cast %415 : vector<1x8x512xf32> to vector<8x512xf32>
    %417 = arith.addf %414, %416 : vector<8x512xf32>
    %418 = vector.extract_strided_slice %417 {offsets = [0, 0], sizes = [8, 128], strides = [1, 1]} : vector<8x512xf32> to vector<8x128xf32>
    %cst_114 = arith.constant 0.000000e+00 : f32
    %419 = vector.broadcast %cst_114 : f32 to vector<8x128xf32>
    %420 = arith.subf %419, %418 : vector<8x128xf32>
    %421 = math.exp %420 : vector<8x128xf32>
    %cst_115 = arith.constant 1.000000e+00 : f32
    %422 = vector.broadcast %cst_115 : f32 to vector<8x128xf32>
    %423 = arith.addf %422, %421 : vector<8x128xf32>
    %424 = tpu.reciprocal %423 {approx = true} : vector<8x128xf32> -> vector<8x128xf32>
    %425 = vector.extract_strided_slice %417 {offsets = [0, 128], sizes = [8, 128], strides = [1, 1]} : vector<8x512xf32> to vector<8x128xf32>
    %cst_116 = arith.constant 0.000000e+00 : f32
    %426 = vector.broadcast %cst_116 : f32 to vector<8x128xf32>
    %427 = arith.subf %426, %425 : vector<8x128xf32>
    %428 = math.exp %427 : vector<8x128xf32>
    %cst_117 = arith.constant 1.000000e+00 : f32
    %429 = vector.broadcast %cst_117 : f32 to vector<8x128xf32>
    %430 = arith.addf %429, %428 : vector<8x128xf32>
    %431 = tpu.reciprocal %430 {approx = true} : vector<8x128xf32> -> vector<8x128xf32>
    %432 = vector.extract_strided_slice %417 {offsets = [0, 256], sizes = [8, 128], strides = [1, 1]} : vector<8x512xf32> to vector<8x128xf32>
    %433 = math.tanh %432 : vector<8x128xf32>
    %434 = vector.extract_strided_slice %417 {offsets = [0, 384], sizes = [8, 128], strides = [1, 1]} : vector<8x512xf32> to vector<8x128xf32>
    %cst_118 = arith.constant 0.000000e+00 : f32
    %435 = vector.broadcast %cst_118 : f32 to vector<8x128xf32>
    %436 = arith.subf %435, %434 : vector<8x128xf32>
    %437 = math.exp %436 : vector<8x128xf32>
    %cst_119 = arith.constant 1.000000e+00 : f32
    %438 = vector.broadcast %cst_119 : f32 to vector<8x128xf32>
    %439 = arith.addf %438, %437 : vector<8x128xf32>
    %440 = tpu.reciprocal %439 {approx = true} : vector<8x128xf32> -> vector<8x128xf32>
    %441 = arith.mulf %431, %376 : vector<8x128xf32>
    %442 = arith.mulf %424, %433 : vector<8x128xf32>
    %443 = arith.addf %441, %442 : vector<8x128xf32>
    %444 = math.tanh %443 : vector<8x128xf32>
    %445 = arith.mulf %440, %444 : vector<8x128xf32>
    %446 = arith.truncf %445 : vector<8x128xf32> to vector<8x128xbf16>
    %cst_120 = arith.constant dense<0.000000e+00> : vector<8x1024xf32>
    %447 = tpu.matmul %446, %8, %cst_120 {dimension_numbers = #tpu.dot_dimension_numbers<[1], [0], [0], [1], [0, 0, 1, 1], [], []>} : vector<8x128xbf16>, vector<128x1024xbf16>, vector<8x1024xf32> -> vector<8x1024xf32>
    %448 = arith.truncf %413 : vector<8x128xf32> to vector<8x128xbf16>
    %cst_121 = arith.constant dense<0.000000e+00> : vector<8x512xf32>
    %449 = tpu.matmul %448, %9, %cst_121 {dimension_numbers = #tpu.dot_dimension_numbers<[1], [0], [0], [1], [0, 0, 1, 1], [], []>} : vector<8x128xbf16>, vector<128x512xbf16>, vector<8x512xf32> -> vector<8x512xf32>
    %450 = vector.extract_strided_slice %447 {offsets = [0, 512], sizes = [8, 512], strides = [1, 1]} : vector<8x1024xf32> to vector<8x512xf32>
    %451 = arith.addf %450, %449 : vector<8x512xf32>
    %452 = arith.addf %451, %12 : vector<8x512xf32>
    %453 = vector.extract_strided_slice %452 {offsets = [0, 0], sizes = [8, 128], strides = [1, 1]} : vector<8x512xf32> to vector<8x128xf32>
    %cst_122 = arith.constant 0.000000e+00 : f32
    %454 = vector.broadcast %cst_122 : f32 to vector<8x128xf32>
    %455 = arith.subf %454, %453 : vector<8x128xf32>
    %456 = math.exp %455 : vector<8x128xf32>
    %cst_123 = arith.constant 1.000000e+00 : f32
    %457 = vector.broadcast %cst_123 : f32 to vector<8x128xf32>
    %458 = arith.addf %457, %456 : vector<8x128xf32>
    %459 = tpu.reciprocal %458 {approx = true} : vector<8x128xf32> -> vector<8x128xf32>
    %460 = vector.extract_strided_slice %452 {offsets = [0, 128], sizes = [8, 128], strides = [1, 1]} : vector<8x512xf32> to vector<8x128xf32>
    %cst_124 = arith.constant 0.000000e+00 : f32
    %461 = vector.broadcast %cst_124 : f32 to vector<8x128xf32>
    %462 = arith.subf %461, %460 : vector<8x128xf32>
    %463 = math.exp %462 : vector<8x128xf32>
    %cst_125 = arith.constant 1.000000e+00 : f32
    %464 = vector.broadcast %cst_125 : f32 to vector<8x128xf32>
    %465 = arith.addf %464, %463 : vector<8x128xf32>
    %466 = tpu.reciprocal %465 {approx = true} : vector<8x128xf32> -> vector<8x128xf32>
    %467 = vector.extract_strided_slice %452 {offsets = [0, 256], sizes = [8, 128], strides = [1, 1]} : vector<8x512xf32> to vector<8x128xf32>
    %468 = math.tanh %467 : vector<8x128xf32>
    %469 = vector.extract_strided_slice %452 {offsets = [0, 384], sizes = [8, 128], strides = [1, 1]} : vector<8x512xf32> to vector<8x128xf32>
    %cst_126 = arith.constant 0.000000e+00 : f32
    %470 = vector.broadcast %cst_126 : f32 to vector<8x128xf32>
    %471 = arith.subf %470, %469 : vector<8x128xf32>
    %472 = math.exp %471 : vector<8x128xf32>
    %cst_127 = arith.constant 1.000000e+00 : f32
    %473 = vector.broadcast %cst_127 : f32 to vector<8x128xf32>
    %474 = arith.addf %473, %472 : vector<8x128xf32>
    %475 = tpu.reciprocal %474 {approx = true} : vector<8x128xf32> -> vector<8x128xf32>
    %476 = arith.mulf %466, %411 : vector<8x128xf32>
    %477 = arith.mulf %459, %468 : vector<8x128xf32>
    %478 = arith.addf %476, %477 : vector<8x128xf32>
    %479 = math.tanh %478 : vector<8x128xf32>
    %480 = arith.mulf %475, %479 : vector<8x128xf32>
    %481 = vector.extract_strided_slice %447 {offsets = [0, 0], sizes = [8, 512], strides = [1, 1]} : vector<8x1024xf32> to vector<8x512xf32>
    %c7 = arith.constant 7 : index
    %c0_128 = arith.constant 0 : index
    %c0_129 = arith.constant 0 : index
    %482 = vector.load %arg9[%c7, %c0_128, %c0_129] : memref<8x8x512xf32, #tpu.memory_space<vmem>>, vector<1x8x512xf32>
    %483 = vector.shape_cast %482 : vector<1x8x512xf32> to vector<8x512xf32>
    %484 = arith.addf %481, %483 : vector<8x512xf32>
    %485 = vector.extract_strided_slice %484 {offsets = [0, 0], sizes = [8, 128], strides = [1, 1]} : vector<8x512xf32> to vector<8x128xf32>
    %cst_130 = arith.constant 0.000000e+00 : f32
    %486 = vector.broadcast %cst_130 : f32 to vector<8x128xf32>
    %487 = arith.subf %486, %485 : vector<8x128xf32>
    %488 = math.exp %487 : vector<8x128xf32>
    %cst_131 = arith.constant 1.000000e+00 : f32
    %489 = vector.broadcast %cst_131 : f32 to vector<8x128xf32>
    %490 = arith.addf %489, %488 : vector<8x128xf32>
    %491 = tpu.reciprocal %490 {approx = true} : vector<8x128xf32> -> vector<8x128xf32>
    %492 = vector.extract_strided_slice %484 {offsets = [0, 128], sizes = [8, 128], strides = [1, 1]} : vector<8x512xf32> to vector<8x128xf32>
    %cst_132 = arith.constant 0.000000e+00 : f32
    %493 = vector.broadcast %cst_132 : f32 to vector<8x128xf32>
    %494 = arith.subf %493, %492 : vector<8x128xf32>
    %495 = math.exp %494 : vector<8x128xf32>
    %cst_133 = arith.constant 1.000000e+00 : f32
    %496 = vector.broadcast %cst_133 : f32 to vector<8x128xf32>
    %497 = arith.addf %496, %495 : vector<8x128xf32>
    %498 = tpu.reciprocal %497 {approx = true} : vector<8x128xf32> -> vector<8x128xf32>
    %499 = vector.extract_strided_slice %484 {offsets = [0, 256], sizes = [8, 128], strides = [1, 1]} : vector<8x512xf32> to vector<8x128xf32>
    %500 = math.tanh %499 : vector<8x128xf32>
    %501 = vector.extract_strided_slice %484 {offsets = [0, 384], sizes = [8, 128], strides = [1, 1]} : vector<8x512xf32> to vector<8x128xf32>
    %cst_134 = arith.constant 0.000000e+00 : f32
    %502 = vector.broadcast %cst_134 : f32 to vector<8x128xf32>
    %503 = arith.subf %502, %501 : vector<8x128xf32>
    %504 = math.exp %503 : vector<8x128xf32>
    %cst_135 = arith.constant 1.000000e+00 : f32
    %505 = vector.broadcast %cst_135 : f32 to vector<8x128xf32>
    %506 = arith.addf %505, %504 : vector<8x128xf32>
    %507 = tpu.reciprocal %506 {approx = true} : vector<8x128xf32> -> vector<8x128xf32>
    %508 = arith.mulf %498, %443 : vector<8x128xf32>
    %509 = arith.mulf %491, %500 : vector<8x128xf32>
    %510 = arith.addf %508, %509 : vector<8x128xf32>
    %511 = math.tanh %510 : vector<8x128xf32>
    %512 = arith.mulf %507, %511 : vector<8x128xf32>
    %513 = arith.truncf %512 : vector<8x128xf32> to vector<8x128xbf16>
    %cst_136 = arith.constant dense<0.000000e+00> : vector<8x1024xf32>
    %514 = tpu.matmul %513, %8, %cst_136 {dimension_numbers = #tpu.dot_dimension_numbers<[1], [0], [0], [1], [0, 0, 1, 1], [], []>} : vector<8x128xbf16>, vector<128x1024xbf16>, vector<8x1024xf32> -> vector<8x1024xf32>
    %515 = arith.truncf %480 : vector<8x128xf32> to vector<8x128xbf16>
    %cst_137 = arith.constant dense<0.000000e+00> : vector<8x512xf32>
    %516 = tpu.matmul %515, %9, %cst_137 {dimension_numbers = #tpu.dot_dimension_numbers<[1], [0], [0], [1], [0, 0, 1, 1], [], []>} : vector<8x128xbf16>, vector<128x512xbf16>, vector<8x512xf32> -> vector<8x512xf32>
    %517 = vector.extract_strided_slice %514 {offsets = [0, 512], sizes = [8, 512], strides = [1, 1]} : vector<8x1024xf32> to vector<8x512xf32>
    %518 = arith.addf %517, %516 : vector<8x512xf32>
    %519 = arith.addf %518, %12 : vector<8x512xf32>
    %520 = vector.extract_strided_slice %519 {offsets = [0, 0], sizes = [8, 128], strides = [1, 1]} : vector<8x512xf32> to vector<8x128xf32>
    %cst_138 = arith.constant 0.000000e+00 : f32
    %521 = vector.broadcast %cst_138 : f32 to vector<8x128xf32>
    %522 = arith.subf %521, %520 : vector<8x128xf32>
    %523 = math.exp %522 : vector<8x128xf32>
    %cst_139 = arith.constant 1.000000e+00 : f32
    %524 = vector.broadcast %cst_139 : f32 to vector<8x128xf32>
    %525 = arith.addf %524, %523 : vector<8x128xf32>
    %526 = tpu.reciprocal %525 {approx = true} : vector<8x128xf32> -> vector<8x128xf32>
    %527 = vector.extract_strided_slice %519 {offsets = [0, 128], sizes = [8, 128], strides = [1, 1]} : vector<8x512xf32> to vector<8x128xf32>
    %cst_140 = arith.constant 0.000000e+00 : f32
    %528 = vector.broadcast %cst_140 : f32 to vector<8x128xf32>
    %529 = arith.subf %528, %527 : vector<8x128xf32>
    %530 = math.exp %529 : vector<8x128xf32>
    %cst_141 = arith.constant 1.000000e+00 : f32
    %531 = vector.broadcast %cst_141 : f32 to vector<8x128xf32>
    %532 = arith.addf %531, %530 : vector<8x128xf32>
    %533 = tpu.reciprocal %532 {approx = true} : vector<8x128xf32> -> vector<8x128xf32>
    %534 = vector.extract_strided_slice %519 {offsets = [0, 256], sizes = [8, 128], strides = [1, 1]} : vector<8x512xf32> to vector<8x128xf32>
    %535 = math.tanh %534 : vector<8x128xf32>
    %536 = vector.extract_strided_slice %519 {offsets = [0, 384], sizes = [8, 128], strides = [1, 1]} : vector<8x512xf32> to vector<8x128xf32>
    %cst_142 = arith.constant 0.000000e+00 : f32
    %537 = vector.broadcast %cst_142 : f32 to vector<8x128xf32>
    %538 = arith.subf %537, %536 : vector<8x128xf32>
    %539 = math.exp %538 : vector<8x128xf32>
    %cst_143 = arith.constant 1.000000e+00 : f32
    %540 = vector.broadcast %cst_143 : f32 to vector<8x128xf32>
    %541 = arith.addf %540, %539 : vector<8x128xf32>
    %542 = tpu.reciprocal %541 {approx = true} : vector<8x128xf32> -> vector<8x128xf32>
    %543 = arith.mulf %533, %478 : vector<8x128xf32>
    %544 = arith.mulf %526, %535 : vector<8x128xf32>
    %545 = arith.addf %543, %544 : vector<8x128xf32>
    %546 = math.tanh %545 : vector<8x128xf32>
    %547 = arith.mulf %542, %546 : vector<8x128xf32>
    %548 = arith.truncf %547 : vector<8x128xf32> to vector<8x128xbf16>
    %c0_144 = arith.constant 0 : index
    %c0_145 = arith.constant 0 : index
    %549 = vector.load %arg6[%c0_144, %c0_145] : memref<128x128xbf16, #tpu.memory_space<vmem>>, vector<128x128xbf16>
    %cst_146 = arith.constant dense<0.000000e+00> : vector<8x128xf32>
    %550 = tpu.matmul %548, %549, %cst_146 {dimension_numbers = #tpu.dot_dimension_numbers<[1], [0], [0], [1], [0, 0, 1, 1], [], []>} : vector<8x128xbf16>, vector<128x128xbf16>, vector<8x128xf32> -> vector<8x128xf32>
    %c0_147 = arith.constant 0 : index
    %c0_148 = arith.constant 0 : index
    %551 = vector.load %arg7[%c0_147, %c0_148] : memref<1x128xf32, #tpu.memory_space<vmem>>, vector<1x128xf32>
    %552 = vector.broadcast %551 : vector<1x128xf32> to vector<8x128xf32>
    %553 = arith.addf %550, %552 : vector<8x128xf32>
    %c0_149 = arith.constant 0 : index
    %c0_150 = arith.constant 0 : index
    %554 = vector.load %arg8[%c0_149, %c0_150] : memref<8x128xf32, #tpu.memory_space<vmem>>, vector<8x128xf32>
    tpu.vector_store %arg8[%c0_149, %c0_150], %553 {strides = array<i32>} : memref<8x128xf32, #tpu.memory_space<vmem>>, vector<8x128xf32>,
    return
  }
}

</mosaic_0001>

<llo_original>
// kernel: tpu_custom_call.1
$region0: #{tpu_custom_call.1}
  #allocation0 [shape = 'u32[]', space=smem, size = 0x4, offset = 0x4, fixed_abs, tag = 'smem constant byte address 0x4 - core index']
  #allocation1 [shape = 'u32[144,128]{1,0:T(1,128)}', space=vmem, size = 0x12000, scoped, tag = 'internal scratch']
  #allocation2 [shape = 'f32[8,8,512]{2,1,0:T(8,128)}', space=vmem, size = 0x20000, scoped, tag = 'scratch operand']
  %s0 = inlined_call_operand.hbm [shape: bf16[64,128], index: 0, kind: input, shape index: {}]
  %s1 = inlined_call_operand.hbm [shape: bf16[128,512], index: 1, kind: input, shape index: {}]
  %s2 = inlined_call_operand.vmem [shape: f32[1,512], index: 2, kind: input, shape index: {}]
  %s3 = inlined_call_operand.hbm [shape: bf16[128,1024], index: 3, kind: input, shape index: {}]
  %s4 = inlined_call_operand.hbm [shape: bf16[128,512], index: 4, kind: input, shape index: {}]
  %s5 = inlined_call_operand.vmem [shape: f32[1,512], index: 5, kind: input, shape index: {}]
  %s6 = inlined_call_operand.hbm [shape: bf16[128,128], index: 6, kind: input, shape index: {}]
  %s7 = inlined_call_operand.vmem [shape: f32[1,128], index: 7, kind: input, shape index: {}]
  %s8 = inlined_call_operand.hbm [shape: f32[8,128], index: 8, kind: output, shape index: {}]
  %s9 = sld [smem:[#allocation0]]
  $region62: #{tpu_custom_call.1} parent=0
    _
  %s11 = ssub.s32 1, %s9
  %s12 = scalar_select 0, %s11, %s9
  $region1: #{tpu_custom_call.1} parent=0
    #allocation3 [shape = 'u8[16384]{0}', space=vmem, size = 0x4000, scoped, tag = 'input window, operand 0, single buffered']
    #allocation4 [shape = 's32[1]{0}', space=sflag, size = 0x4, scoped, tag = 'scoped memory for tpu_custom_call.1']
    #allocation5 [shape = 's32[1]{0}', space=sflag, size = 0x4, scoped, tag = 'scoped memory for tpu_custom_call.1']
    #allocation6 [shape = 'u8[131072]{0}', space=vmem, size = 0x20000, scoped, tag = 'input window, operand 1, single buffered']
    #allocation7 [shape = 's32[1]{0}', space=sflag, size = 0x4, scoped, tag = 'scoped memory for tpu_custom_call.1']
    #allocation8 [shape = 'u8[262144]{0}', space=vmem, size = 0x40000, scoped, tag = 'input window, operand 3, single buffered']
    #allocation9 [shape = 'u8[131072]{0}', space=vmem, size = 0x20000, scoped, tag = 'input window, operand 4, single buffered']
    #allocation10 [shape = 's32[1]{0}', space=sflag, size = 0x4, scoped, tag = 'scoped memory for tpu_custom_call.1']
    #allocation11 [shape = 'u8[32768]{0}', space=vmem, size = 0x8000, scoped, tag = 'input window, operand 6, single buffered']
    #allocation12 [shape = 'u8[4096]{0}', space=vmem, size = 0x1000, scoped, tag = 'output window, operand 0, single buffered']
    %13 = vsyncpa [#allocation4], 0
    %14 = vsyncpa [#allocation7], 0
    %15 = vsyncpa [#allocation10], 0
    %16 = vsyncpa [#allocation5], 0
    // Predicated region
    $region2: #{tpu_custom_call.1} parent=1 // pred_check
      _
    $region3: #{tpu_custom_call.1} parent=1 // pred_check_branch
      %18 = sbr.rel (0) target = $region5
    $region4: #{tpu_custom_call.1} parent=1 // pred_region
      %s20 = ssub.s32 512, 512
      %21 = vsyncadd [#allocation4], %s20
      %s22 = sshll.u32 [#allocation3], 4
      %s23 = int_to_ptr.vmem [resolvable:$true] %s22
      %28 = dma.hbm_to_vmem [thread:$0]  %s0, 512, %s23, [#allocation4], 64, 64, 4
    $region5: #{tpu_custom_call.1} parent=1 // pred_fallthru
      _
    // Predicated region
    $region6: #{tpu_custom_call.1} parent=1 // pred_check
      _
    $region7: #{tpu_custom_call.1} parent=1 // pred_check_branch
      %30 = sbr.rel (0) target = $region9
    $region8: #{tpu_custom_call.1} parent=1 // pred_region
      %s32 = ssub.s32 4096, 4096
      %33 = vsyncadd [#allocation7], %s32
      %s34 = sshll.u32 [#allocation6], 4
      %s35 = int_to_ptr.vmem [resolvable:$true] %s34
      %40 = dma.hbm_to_vmem [thread:$0]  %s1, 4096, %s35, [#allocation7], 256, 256, 16
    $region9: #{tpu_custom_call.1} parent=1 // pred_fallthru
      _
    // Predicated region
    $region10: #{tpu_custom_call.1} parent=1 // pred_check
      _
    $region11: #{tpu_custom_call.1} parent=1 // pred_check_branch
      %42 = sbr.rel (0) target = $region13
    $region12: #{tpu_custom_call.1} parent=1 // pred_region
      _
    $region13: #{tpu_custom_call.1} parent=1 // pred_fallthru
      _
    // Predicated region
    $region14: #{tpu_custom_call.1} parent=1 // pred_check
      _
    $region15: #{tpu_custom_call.1} parent=1 // pred_check_branch
      %44 = sbr.rel (0) target = $region17
    $region16: #{tpu_custom_call.1} parent=1 // pred_region
      %s46 = ssub.s32 8192, 8192
      %47 = vsyncadd [#allocation7], %s46
      %s48 = sshll.u32 [#allocation8], 4
      %s49 = int_to_ptr.vmem [resolvable:$true] %s48
      %54 = dma.hbm_to_vmem [thread:$0]  %s3, 8192, %s49, [#allocation7], 512, 512, 32
    $region17: #{tpu_custom_call.1} parent=1 // pred_fallthru
      _
    // Predicated region
    $region18: #{tpu_custom_call.1} parent=1 // pred_check
      _
    $region19: #{tpu_custom_call.1} parent=1 // pred_check_branch
      %56 = sbr.rel (0) target = $region21
    $region20: #{tpu_custom_call.1} parent=1 // pred_region
      %s58 = ssub.s32 4096, 4096
      %59 = vsyncadd [#allocation10], %s58
      %s60 = sshll.u32 [#allocation9], 4
      %s61 = int_to_ptr.vmem [resolvable:$true] %s60
      %66 = dma.hbm_to_vmem [thread:$0]  %s4, 4096, %s61, [#allocation10], 256, 256, 16
    $region21: #{tpu_custom_call.1} parent=1 // pred_fallthru
      _
    // Predicated region
    $region22: #{tpu_custom_call.1} parent=1 // pred_check
      _
    $region23: #{tpu_custom_call.1} parent=1 // pred_check_branch
      %68 = sbr.rel (0) target = $region25
    $region24: #{tpu_custom_call.1} parent=1 // pred_region
      _
    $region25: #{tpu_custom_call.1} parent=1 // pred_fallthru
      _
    // Predicated region
    $region26: #{tpu_custom_call.1} parent=1 // pred_check
      _
    $region27: #{tpu_custom_call.1} parent=1 // pred_check_branch
      %70 = sbr.rel (0) target = $region29
    $region28: #{tpu_custom_call.1} parent=1 // pred_region
      %s72 = ssub.s32 1024, 1024
      %73 = vsyncadd [#allocation10], %s72
      %s74 = sshll.u32 [#allocation11], 4
      %s75 = int_to_ptr.vmem [resolvable:$true] %s74
      %80 = dma.hbm_to_vmem [thread:$0]  %s6, 1024, %s75, [#allocation10], 64, 64, 4
    $region29: #{tpu_custom_call.1} parent=1 // pred_fallthru
      _
    // Predicated region
    $region30: #{tpu_custom_call.1} parent=1 // pred_check
      _
    $region31: #{tpu_custom_call.1} parent=1 // pred_check_branch
      %82 = sbr.rel (0) target = $region33
    $region32: #{tpu_custom_call.1} parent=1 // pred_region
      _
    $region33: #{tpu_custom_call.1} parent=1 // pred_fallthru
      _
    // Predicated region
    $region34: #{tpu_custom_call.1} parent=1 // pred_check
      _
    $region35: #{tpu_custom_call.1} parent=1 // pred_check_branch
      %84 = sbr.rel (0) target = $region37
    $region36: #{tpu_custom_call.1} parent=1 // pred_region
      %85 = dma.done [#allocation4], 512
    $region37: #{tpu_custom_call.1} parent=1 // pred_fallthru
      _
    // Predicated region
    $region38: #{tpu_custom_call.1} parent=1 // pred_check
      _
    $region39: #{tpu_custom_call.1} parent=1 // pred_check_branch
      %87 = sbr.rel (0) target = $region41
    $region40: #{tpu_custom_call.1} parent=1 // pred_region
      %88 = dma.done [#allocation7], 4096
    $region41: #{tpu_custom_call.1} parent=1 // pred_fallthru
      _
    // Predicated region
    $region42: #{tpu_custom_call.1} parent=1 // pred_check
      _
    $region43: #{tpu_custom_call.1} parent=1 // pred_check_branch
      %90 = sbr.rel (0) target = $region45
    $region44: #{tpu_custom_call.1} parent=1 // pred_region
      %91 = dma.done [#allocation7], 8192
    $region45: #{tpu_custom_call.1} parent=1 // pred_fallthru
      _
    // Predicated region
    $region46: #{tpu_custom_call.1} parent=1 // pred_check
      _
    $region47: #{tpu_custom_call.1} parent=1 // pred_check_branch
      %93 = sbr.rel (0) target = $region49
    $region48: #{tpu_custom_call.1} parent=1 // pred_region
      %94 = dma.done [#allocation10], 4096
    $region49: #{tpu_custom_call.1} parent=1 // pred_fallthru
      _
    // Predicated region
    $region50: #{tpu_custom_call.1} parent=1 // pred_check
      _
    $region51: #{tpu_custom_call.1} parent=1 // pred_check_branch
      %96 = sbr.rel (0) target = $region53
    $region52: #{tpu_custom_call.1} parent=1 // pred_region
      %97 = dma.done [#allocation10], 1024
    $region53: #{tpu_custom_call.1} parent=1 // pred_fallthru
      _
    %v99 = vld [vmem:[#allocation3] sm:$0xf]
    %v100 = vld [vmem:[#allocation3 + $0x4] sm:$0xf]
    %v101 = vld [vmem:[#allocation3 + $0x8] sm:$0xf]
    %v102 = vld [vmem:[#allocation3 + $0xc] sm:$0xf]
    %v103 = vld [vmem:[#allocation3 + $0x10] sm:$0xf]
    %v104 = vld [vmem:[#allocation3 + $0x14] sm:$0xf]
    %v105 = vld [vmem:[#allocation3 + $0x18] sm:$0xf]
    %v106 = vld [vmem:[#allocation3 + $0x1c] sm:$0xf]
    %v107 = vld [vmem:[#allocation6] sm:$0xff]
    %v108 = vld [vmem:[#allocation6 + $0x8] sm:$0xff]
    %v109 = vld [vmem:[#allocation6 + $0x10] sm:$0xff]
    %v110 = vld [vmem:[#allocation6 + $0x18] sm:$0xff]
    %v111 = vld [vmem:[#allocation6 + $0x20] sm:$0xff]
    %v112 = vld [vmem:[#allocation6 + $0x28] sm:$0xff]
    %v113 = vld [vmem:[#allocation6 + $0x30] sm:$0xff]
    %v114 = vld [vmem:[#allocation6 + $0x38] sm:$0xff]
    %v115 = vld [vmem:[#allocation6 + $0x40] sm:$0xff]
    %v116 = vld [vmem:[#allocation6 + $0x48] sm:$0xff]
    %v117 = vld [vmem:[#allocation6 + $0x50] sm:$0xff]
    %v118 = vld [vmem:[#allocation6 + $0x58] sm:$0xff]
    %v119 = vld [vmem:[#allocation6 + $0x60] sm:$0xff]
    %v120 = vld [vmem:[#allocation6 + $0x68] sm:$0xff]
    %v121 = vld [vmem:[#allocation6 + $0x70] sm:$0xff]
    %v122 = vld [vmem:[#allocation6 + $0x78] sm:$0xff]
    %v123 = vld [vmem:[#allocation6 + $0x80] sm:$0xff]
    %v124 = vld [vmem:[#allocation6 + $0x88] sm:$0xff]
    %v125 = vld [vmem:[#allocation6 + $0x90] sm:$0xff]
    %v126 = vld [vmem:[#allocation6 + $0x98] sm:$0xff]
    %v127 = vld [vmem:[#allocation6 + $0xa0] sm:$0xff]
    %v128 = vld [vmem:[#allocation6 + $0xa8] sm:$0xff]
    %v129 = vld [vmem:[#allocation6 + $0xb0] sm:$0xff]
    %v130 = vld [vmem:[#allocation6 + $0xb8] sm:$0xff]
    %v131 = vld [vmem:[#allocation6 + $0xc0] sm:$0xff]
    %v132 = vld [vmem:[#allocation6 + $0xc8] sm:$0xff]
    %v133 = vld [vmem:[#allocation6 + $0xd0] sm:$0xff]
    %v134 = vld [vmem:[#allocation6 + $0xd8] sm:$0xff]
    %v135 = vld [vmem:[#allocation6 + $0xe0] sm:$0xff]
    %v136 = vld [vmem:[#allocation6 + $0xe8] sm:$0xff]
    %v137 = vld [vmem:[#allocation6 + $0xf0] sm:$0xff]
    %v138 = vld [vmem:[#allocation6 + $0xf8] sm:$0xff]
    %v139 = vld [vmem:[%s2] sm:$0xf]
    %v141 = vlaneseq
    %v142 = vshrl.u32 %v141, 7
    %v143 = vsub.s32 0, %v142
    %v144 = vrot.slane %v139, %v143
    %v145 = vlaneseq
    %v146 = vshrl.u32 %v145, 7
    %v147 = vsub.s32 1, %v146
    %v148 = vrot.slane %v139, %v147
    %v149 = vlaneseq
    %v150 = vshrl.u32 %v149, 7
    %v151 = vsub.s32 2, %v150
    %v152 = vrot.slane %v139, %v151
    %v153 = vlaneseq
    %v154 = vshrl.u32 %v153, 7
    %v155 = vsub.s32 3, %v154
    %v156 = vrot.slane %v139, %v155
    %v169 = vunpack.c.l.b16 %v99
    %v170 = vunpack.c.l.b16 %v100
    %v171 = vunpack.c.l.b16 %v101
    %v172 = vunpack.c.l.b16 %v102
    %v173 = vunpack.c.l.b16 %v103
    %v174 = vunpack.c.l.b16 %v104
    %v175 = vunpack.c.l.b16 %v105
    %v176 = vunpack.c.l.b16 %v106
    %v177 = vpack.c.b16 %v170, %v169
    %v178 = vpack.c.b16 %v172, %v171
    %v179 = vpack.c.b16 %v174, %v173
    %v180 = vpack.c.b16 %v176, %v175
    %v217 = vunpack.c.l.b16 %v107
    %v218 = vunpack.c.h.b16 %v107
    %v219 = vunpack.c.l.b16 %v108
    %v220 = vunpack.c.h.b16 %v108
    %v221 = vunpack.c.l.b16 %v109
    %v222 = vunpack.c.h.b16 %v109
    %v223 = vunpack.c.l.b16 %v110
    %v224 = vunpack.c.h.b16 %v110
    %v225 = vunpack.c.l.b16 %v111
    %v226 = vunpack.c.h.b16 %v111
    %v227 = vunpack.c.l.b16 %v112
    %v228 = vunpack.c.h.b16 %v112
    %v229 = vunpack.c.l.b16 %v113
    %v230 = vunpack.c.h.b16 %v113
    %v231 = vunpack.c.l.b16 %v114
    %v232 = vunpack.c.h.b16 %v114
    %v233 = vunpack.c.l.b16 %v115
    %v234 = vunpack.c.h.b16 %v115
    %v235 = vunpack.c.l.b16 %v116
    %v236 = vunpack.c.h.b16 %v116
    %v237 = vunpack.c.l.b16 %v117
    %v238 = vunpack.c.h.b16 %v117
    %v239 = vunpack.c.l.b16 %v118
    %v240 = vunpack.c.h.b16 %v118
    %v241 = vunpack.c.l.b16 %v119
    %v242 = vunpack.c.h.b16 %v119
    %v243 = vunpack.c.l.b16 %v120
    %v244 = vunpack.c.h.b16 %v120
    %v245 = vunpack.c.l.b16 %v121
    %v246 = vunpack.c.h.b16 %v121
    %v247 = vunpack.c.l.b16 %v122
    %v248 = vunpack.c.h.b16 %v122
    %v249 = vunpack.c.l.b16 %v123
    %v250 = vunpack.c.h.b16 %v123
    %v251 = vunpack.c.l.b16 %v124
    %v252 = vunpack.c.h.b16 %v124
    %v253 = vunpack.c.l.b16 %v125
    %v254 = vunpack.c.h.b16 %v125
    %v255 = vunpack.c.l.b16 %v126
    %v256 = vunpack.c.h.b16 %v126
    %v257 = vunpack.c.l.b16 %v127
    %v258 = vunpack.c.h.b16 %v127
    %v259 = vunpack.c.l.b16 %v128
    %v260 = vunpack.c.h.b16 %v128
    %v261 = vunpack.c.l.b16 %v129
    %v262 = vunpack.c.h.b16 %v129
    %v263 = vunpack.c.l.b16 %v130
    %v264 = vunpack.c.h.b16 %v130
    %v265 = vunpack.c.l.b16 %v131
    %v266 = vunpack.c.h.b16 %v131
    %v267 = vunpack.c.l.b16 %v132
    %v268 = vunpack.c.h.b16 %v132
    %v269 = vunpack.c.l.b16 %v133
    %v270 = vunpack.c.h.b16 %v133
    %v271 = vunpack.c.l.b16 %v134
    %v272 = vunpack.c.h.b16 %v134
    %v273 = vunpack.c.l.b16 %v135
    %v274 = vunpack.c.h.b16 %v135
    %v275 = vunpack.c.l.b16 %v136
    %v276 = vunpack.c.h.b16 %v136
    %v277 = vunpack.c.l.b16 %v137
    %v278 = vunpack.c.h.b16 %v137
    %v279 = vunpack.c.l.b16 %v138
    %v280 = vunpack.c.h.b16 %v138
    %v281 = vpack.c.b16 %v221, %v217
    %v282 = vpack.c.b16 %v222, %v218
    %v283 = vpack.c.b16 %v223, %v219
    %v284 = vpack.c.b16 %v224, %v220
    %v285 = vpack.c.b16 %v229, %v225
    %v286 = vpack.c.b16 %v230, %v226
    %v287 = vpack.c.b16 %v231, %v227
    %v288 = vpack.c.b16 %v232, %v228
    %v289 = vpack.c.b16 %v237, %v233
    %v290 = vpack.c.b16 %v238, %v234
    %v291 = vpack.c.b16 %v239, %v235
    %v292 = vpack.c.b16 %v240, %v236
    %v293 = vpack.c.b16 %v245, %v241
    %v294 = vpack.c.b16 %v246, %v242
    %v295 = vpack.c.b16 %v247, %v243
    %v296 = vpack.c.b16 %v248, %v244
    %v297 = vpack.c.b16 %v253, %v249
    %v298 = vpack.c.b16 %v254, %v250
    %v299 = vpack.c.b16 %v255, %v251
    %v300 = vpack.c.b16 %v256, %v252
    %v301 = vpack.c.b16 %v261, %v257
    %v302 = vpack.c.b16 %v262, %v258
    %v303 = vpack.c.b16 %v263, %v259
    %v304 = vpack.c.b16 %v264, %v260
    %v305 = vpack.c.b16 %v269, %v265
    %v306 = vpack.c.b16 %v270, %v266
    %v307 = vpack.c.b16 %v271, %v267
    %v308 = vpack.c.b16 %v272, %v268
    %v309 = vpack.c.b16 %v277, %v273
    %v310 = vpack.c.b16 %v278, %v274
    %v311 = vpack.c.b16 %v279, %v275
    %v312 = vpack.c.b16 %v280, %v276
    %345 = vmatprep.subr.bf16.mxu0 %v282
    %346 = vmatpush1.bf16.msra.mxu0 %v281
    %347 = vmatprep.subr.bf16.mxu0 %v286
    %348 = vmatpush1.bf16.msra.mxu0 %v285
    %349 = vmatprep.subr.bf16.mxu0 %v290
    %350 = vmatpush1.bf16.msra.mxu0 %v289
    %351 = vmatprep.subr.bf16.mxu0 %v294
    %352 = vmatpush1.bf16.msra.mxu0 %v293
    %353 = vmatprep.subr.bf16.mxu0 %v298
    %354 = vmatpush1.bf16.msra.mxu0 %v297
    %355 = vmatprep.subr.bf16.mxu0 %v302
    %356 = vmatpush1.bf16.msra.mxu0 %v301
    %357 = vmatprep.subr.bf16.mxu0 %v306
    %358 = vmatpush1.bf16.msra.mxu0 %v305
    %359 = vmatprep.subr.bf16.mxu0 %v310
    %360 = vmatpush1.bf16.msra.mxu0 %v309
    %361 = vmatprep.subr.bf16.mxu0 0
    %362 = vmatpush1.bf16.msra.mxu0 0
    %363 = vmatprep.subr.bf16.mxu0 0
    %364 = vmatpush1.bf16.msra.mxu0 0
    %365 = vmatprep.subr.bf16.mxu0 0
    %366 = vmatpush1.bf16.msra.mxu0 0
    %367 = vmatprep.subr.bf16.mxu0 0
    %368 = vmatpush1.bf16.msra.mxu0 0
    %369 = vmatprep.subr.bf16.mxu0 0
    %370 = vmatpush1.bf16.msra.mxu0 0
    %371 = vmatprep.subr.bf16.mxu0 0
    %372 = vmatpush1.bf16.msra.mxu0 0
    %373 = vmatprep.subr.bf16.mxu0 0
    %374 = vmatpush1.bf16.msra.mxu0 0
    %375 = vmatprep.subr.bf16.mxu0 0
    %376 = vmatpush1.bf16.msra.mxu0 0
    %377 = vmatprep.mubr.bf16.mxu0 0
    %378 = vmatmul.mubr.bf16.gmra.mrb[0].mxu0 %v177
    %v379 = vpop.f32.mrb[0].mxu0
    %v380 = vadd.f32 %v144, %v379
    %v381 = vpop.f32.mrb[0].mxu0
    %v382 = vadd.f32 %v148, %v381
    %v383 = vpop.f32.mrb[0].mxu0
    %v384 = vadd.f32 %v144, %v383
    %v385 = vpop.f32.mrb[0].mxu0
    %v386 = vadd.f32 %v148, %v385
    %387 = vmatprep.mubr.bf16.mxu0 0
    %388 = vmatmul.mubr.bf16.gmra.mrb[0].mxu0 %v178
    %v389 = vpop.f32.mrb[0].mxu0
    %v390 = vadd.f32 %v144, %v389
    %v391 = vpop.f32.mrb[0].mxu0
    %v392 = vadd.f32 %v148, %v391
    %v393 = vpop.f32.mrb[0].mxu0
    %v394 = vadd.f32 %v144, %v393
    %v395 = vpop.f32.mrb[0].mxu0
    %v396 = vadd.f32 %v148, %v395
    %397 = vmatprep.mubr.bf16.mxu0 0
    %398 = vmatmul.mubr.bf16.gmra.mrb[0].mxu0 %v179
    %v399 = vpop.f32.mrb[0].mxu0
    %v400 = vadd.f32 %v144, %v399
    %v401 = vpop.f32.mrb[0].mxu0
    %v402 = vadd.f32 %v148, %v401
    %v403 = vpop.f32.mrb[0].mxu0
    %v404 = vadd.f32 %v144, %v403
    %v405 = vpop.f32.mrb[0].mxu0
    %v406 = vadd.f32 %v148, %v405
    %407 = vmatprep.mubr.bf16.mxu0 0
    %408 = vmatmul.mubr.bf16.gmra.mrb[0].mxu0 %v180
    %v409 = vpop.f32.mrb[0].mxu0
    %v410 = vadd.f32 %v144, %v409
    %v411 = vpop.f32.mrb[0].mxu0
    %v412 = vadd.f32 %v148, %v411
    %v413 = vpop.f32.mrb[0].mxu0
    %v414 = vadd.f32 %v144, %v413
    %v415 = vpop.f32.mrb[0].mxu0
    %v416 = vadd.f32 %v148, %v415
    %417 = vdwg.mxu0
    %418 = vmatprep.subr.bf16.mxu0 %v284
    %419 = vmatpush1.bf16.msra.mxu0 %v283
    %420 = vmatprep.subr.bf16.mxu0 %v288
    %421 = vmatpush1.bf16.msra.mxu0 %v287
    %422 = vmatprep.subr.bf16.mxu0 %v292
    %423 = vmatpush1.bf16.msra.mxu0 %v291
    %424 = vmatprep.subr.bf16.mxu0 %v296
    %425 = vmatpush1.bf16.msra.mxu0 %v295
    %426 = vmatprep.subr.bf16.mxu0 %v300
    %427 = vmatpush1.bf16.msra.mxu0 %v299
    %428 = vmatprep.subr.bf16.mxu0 %v304
    %429 = vmatpush1.bf16.msra.mxu0 %v303
    %430 = vmatprep.subr.bf16.mxu0 %v308
    %431 = vmatpush1.bf16.msra.mxu0 %v307
    %432 = vmatprep.subr.bf16.mxu0 %v312
    %433 = vmatpush1.bf16.msra.mxu0 %v311
    %434 = vmatprep.subr.bf16.mxu0 0
    %435 = vmatpush1.bf16.msra.mxu0 0
    %436 = vmatprep.subr.bf16.mxu0 0
    %437 = vmatpush1.bf16.msra.mxu0 0
    %438 = vmatprep.subr.bf16.mxu0 0
    %439 = vmatpush1.bf16.msra.mxu0 0
    %440 = vmatprep.subr.bf16.mxu0 0
    %441 = vmatpush1.bf16.msra.mxu0 0
    %442 = vmatprep.subr.bf16.mxu0 0
    %443 = vmatpush1.bf16.msra.mxu0 0
    %444 = vmatprep.subr.bf16.mxu0 0
    %445 = vmatpush1.bf16.msra.mxu0 0
    %446 = vmatprep.subr.bf16.mxu0 0
    %447 = vmatpush1.bf16.msra.mxu0 0
    %448 = vmatprep.subr.bf16.mxu0 0
    %449 = vmatpush1.bf16.msra.mxu0 0
    %450 = vmatprep.mubr.bf16.mxu0 0
    %451 = vmatmul.mubr.bf16.gmra.mrb[0].mxu0 %v177
    %v452 = vpop.f32.mrb[0].mxu0
    %v453 = vadd.f32 %v152, %v452
    %v454 = vpop.f32.mrb[0].mxu0
    %v455 = vadd.f32 %v156, %v454
    %v456 = vpop.f32.mrb[0].mxu0
    %v457 = vadd.f32 %v152, %v456
    %v458 = vpop.f32.mrb[0].mxu0
    %v459 = vadd.f32 %v156, %v458
    %460 = vmatprep.mubr.bf16.mxu0 0
    %461 = vmatmul.mubr.bf16.gmra.mrb[0].mxu0 %v178
    %v462 = vpop.f32.mrb[0].mxu0
    %v463 = vadd.f32 %v152, %v462
    %v464 = vpop.f32.mrb[0].mxu0
    %v465 = vadd.f32 %v156, %v464
    %v466 = vpop.f32.mrb[0].mxu0
    %v467 = vadd.f32 %v152, %v466
    %v468 = vpop.f32.mrb[0].mxu0
    %v469 = vadd.f32 %v156, %v468
    %470 = vmatprep.mubr.bf16.mxu0 0
    %471 = vmatmul.mubr.bf16.gmra.mrb[0].mxu0 %v179
    %v472 = vpop.f32.mrb[0].mxu0
    %v473 = vadd.f32 %v152, %v472
    %v474 = vpop.f32.mrb[0].mxu0
    %v475 = vadd.f32 %v156, %v474
    %v476 = vpop.f32.mrb[0].mxu0
    %v477 = vadd.f32 %v152, %v476
    %v478 = vpop.f32.mrb[0].mxu0
    %v479 = vadd.f32 %v156, %v478
    %480 = vmatprep.mubr.bf16.mxu0 0
    %481 = vmatmul.mubr.bf16.gmra.mrb[0].mxu0 %v180
    %v482 = vpop.f32.mrb[0].mxu0
    %v483 = vadd.f32 %v152, %v482
    %v484 = vpop.f32.mrb[0].mxu0
    %v485 = vadd.f32 %v156, %v484
    %v486 = vpop.f32.mrb[0].mxu0
    %v487 = vadd.f32 %v152, %v486
    %v488 = vpop.f32.mrb[0].mxu0
    %v489 = vadd.f32 %v156, %v488
    %490 = vdwg.mxu0
    %491 = vst [vmem:[#allocation2] sm:$0xff] %v380
    %492 = vst [vmem:[#allocation2 + $0x8] sm:$0xff] %v382
    %493 = vst [vmem:[#allocation2 + $0x10] sm:$0xff] %v453
    %494 = vst [vmem:[#allocation2 + $0x18] sm:$0xff] %v455
    %495 = vst [vmem:[#allocation2 + $0x20] sm:$0xff] %v384
    %496 = vst [vmem:[#allocation2 + $0x28] sm:$0xff] %v386
    %497 = vst [vmem:[#allocation2 + $0x30] sm:$0xff] %v457
    %498 = vst [vmem:[#allocation2 + $0x38] sm:$0xff] %v459
    %499 = vst [vmem:[#allocation2 + $0x40] sm:$0xff] %v390
    %500 = vst [vmem:[#allocation2 + $0x48] sm:$0xff] %v392
    %501 = vst [vmem:[#allocation2 + $0x50] sm:$0xff] %v463
    %502 = vst [vmem:[#allocation2 + $0x58] sm:$0xff] %v465
    %503 = vst [vmem:[#allocation2 + $0x60] sm:$0xff] %v394
    %504 = vst [vmem:[#allocation2 + $0x68] sm:$0xff] %v396
    %505 = vst [vmem:[#allocation2 + $0x70] sm:$0xff] %v467
    %506 = vst [vmem:[#allocation2 + $0x78] sm:$0xff] %v469
    %507 = vst [vmem:[#allocation2 + $0x80] sm:$0xff] %v400
    %508 = vst [vmem:[#allocation2 + $0x88] sm:$0xff] %v402
    %509 = vst [vmem:[#allocation2 + $0x90] sm:$0xff] %v473
    %510 = vst [vmem:[#allocation2 + $0x98] sm:$0xff] %v475
    %511 = vst [vmem:[#allocation2 + $0xa0] sm:$0xff] %v404
    %512 = vst [vmem:[#allocation2 + $0xa8] sm:$0xff] %v406
    %513 = vst [vmem:[#allocation2 + $0xb0] sm:$0xff] %v477
    %514 = vst [vmem:[#allocation2 + $0xb8] sm:$0xff] %v479
    %515 = vst [vmem:[#allocation2 + $0xc0] sm:$0xff] %v410
    %516 = vst [vmem:[#allocation2 + $0xc8] sm:$0xff] %v412
    %517 = vst [vmem:[#allocation2 + $0xd0] sm:$0xff] %v483
    %518 = vst [vmem:[#allocation2 + $0xd8] sm:$0xff] %v485
    %519 = vst [vmem:[#allocation2 + $0xe0] sm:$0xff] %v414
    %520 = vst [vmem:[#allocation2 + $0xe8] sm:$0xff] %v416
    %521 = vst [vmem:[#allocation2 + $0xf0] sm:$0xff] %v487
    %522 = vst [vmem:[#allocation2 + $0xf8] sm:$0xff] %v489
    %v523 = vld [vmem:[#allocation8] sm:$0xff]
    %v524 = vld [vmem:[#allocation8 + $0x8] sm:$0xff]
    %v525 = vld [vmem:[#allocation8 + $0x10] sm:$0xff]
    %v526 = vld [vmem:[#allocation8 + $0x18] sm:$0xff]
    %v527 = vld [vmem:[#allocation8 + $0x20] sm:$0xff]
    %v528 = vld [vmem:[#allocation8 + $0x28] sm:$0xff]
    %v529 = vld [vmem:[#allocation8 + $0x30] sm:$0xff]
    %v530 = vld [vmem:[#allocation8 + $0x38] sm:$0xff]
    %v531 = vld [vmem:[#allocation8 + $0x40] sm:$0xff]
    %v532 = vld [vmem:[#allocation8 + $0x48] sm:$0xff]
    %v533 = vld [vmem:[#allocation8 + $0x50] sm:$0xff]
    %v534 = vld [vmem:[#allocation8 + $0x58] sm:$0xff]
    %v535 = vld [vmem:[#allocation8 + $0x60] sm:$0xff]
    %v536 = vld [vmem:[#allocation8 + $0x68] sm:$0xff]
    %v537 = vld [vmem:[#allocation8 + $0x70] sm:$0xff]
    %v538 = vld [vmem:[#allocation8 + $0x78] sm:$0xff]
    %v539 = vld [vmem:[#allocation8 + $0x80] sm:$0xff]
    %v540 = vld [vmem:[#allocation8 + $0x88] sm:$0xff]
    %v541 = vld [vmem:[#allocation8 + $0x90] sm:$0xff]
    %v542 = vld [vmem:[#allocation8 + $0x98] sm:$0xff]
    %v543 = vld [vmem:[#allocation8 + $0xa0] sm:$0xff]
    %v544 = vld [vmem:[#allocation8 + $0xa8] sm:$0xff]
    %v545 = vld [vmem:[#allocation8 + $0xb0] sm:$0xff]
    %v546 = vld [vmem:[#allocation8 + $0xb8] sm:$0xff]
    %v547 = vld [vmem:[#allocation8 + $0xc0] sm:$0xff]
    %v548 = vld [vmem:[#allocation8 + $0xc8] sm:$0xff]
    %v549 = vld [vmem:[#allocation8 + $0xd0] sm:$0xff]
    %v550 = vld [vmem:[#allocation8 + $0xd8] sm:$0xff]
    %v551 = vld [vmem:[#allocation8 + $0xe0] sm:$0xff]
    %v552 = vld [vmem:[#allocation8 + $0xe8] sm:$0xff]
    %v553 = vld [vmem:[#allocation8 + $0xf0] sm:$0xff]
    %v554 = vld [vmem:[#allocation8 + $0xf8] sm:$0xff]
    %v555 = vld [vmem:[#allocation8 + $0x100] sm:$0xff]
    %v556 = vld [vmem:[#allocation8 + $0x108] sm:$0xff]
    %v557 = vld [vmem:[#allocation8 + $0x110] sm:$0xff]
    %v558 = vld [vmem:[#allocation8 + $0x118] sm:$0xff]
    %v559 = vld [vmem:[#allocation8 + $0x120] sm:$0xff]
    %v560 = vld [vmem:[#allocation8 + $0x128] sm:$0xff]
    %v561 = vld [vmem:[#allocation8 + $0x130] sm:$0xff]
    %v562 = vld [vmem:[#allocation8 + $0x138] sm:$0xff]
    %v563 = vld [vmem:[#allocation8 + $0x140] sm:$0xff]
    %v564 = vld [vmem:[#allocation8 + $0x148] sm:$0xff]
    %v565 = vld [vmem:[#allocation8 + $0x150] sm:$0xff]
    %v566 = vld [vmem:[#allocation8 + $0x158] sm:$0xff]
    %v567 = vld [vmem:[#allocation8 + $0x160] sm:$0xff]
    %v568 = vld [vmem:[#allocation8 + $0x168] sm:$0xff]
    %v569 = vld [vmem:[#allocation8 + $0x170] sm:$0xff]
    %v570 = vld [vmem:[#allocation8 + $0x178] sm:$0xff]
    %v571 = vld [vmem:[#allocation8 + $0x180] sm:$0xff]
    %v572 = vld [vmem:[#allocation8 + $0x188] sm:$0xff]
    %v573 = vld [vmem:[#allocation8 + $0x190] sm:$0xff]
    %v574 = vld [vmem:[#allocation8 + $0x198] sm:$0xff]
    %v575 = vld [vmem:[#allocation8 + $0x1a0] sm:$0xff]
    %v576 = vld [vmem:[#allocation8 + $0x1a8] sm:$0xff]
    %v577 = vld [vmem:[#allocation8 + $0x1b0] sm:$0xff]
    %v578 = vld [vmem:[#allocation8 + $0x1b8] sm:$0xff]
    %v579 = vld [vmem:[#allocation8 + $0x1c0] sm:$0xff]
    %v580 = vld [vmem:[#allocation8 + $0x1c8] sm:$0xff]
    %v581 = vld [vmem:[#allocation8 + $0x1d0] sm:$0xff]
    %v582 = vld [vmem:[#allocation8 + $0x1d8] sm:$0xff]
    %v583 = vld [vmem:[#allocation8 + $0x1e0] sm:$0xff]
    %v584 = vld [vmem:[#allocation8 + $0x1e8] sm:$0xff]
    %v585 = vld [vmem:[#allocation8 + $0x1f0] sm:$0xff]
    %v586 = vld [vmem:[#allocation8 + $0x1f8] sm:$0xff]
    %v587 = vld [vmem:[#allocation9] sm:$0xff]
    %v588 = vld [vmem:[#allocation9 + $0x8] sm:$0xff]
    %v589 = vld [vmem:[#allocation9 + $0x10] sm:$0xff]
    %v590 = vld [vmem:[#allocation9 + $0x18] sm:$0xff]
    %v591 = vld [vmem:[#allocation9 + $0x20] sm:$0xff]
    %v592 = vld [vmem:[#allocation9 + $0x28] sm:$0xff]
    %v593 = vld [vmem:[#allocation9 + $0x30] sm:$0xff]
    %v594 = vld [vmem:[#allocation9 + $0x38] sm:$0xff]
    %v595 = vld [vmem:[#allocation9 + $0x40] sm:$0xff]
    %v596 = vld [vmem:[#allocation9 + $0x48] sm:$0xff]
    %v597 = vld [vmem:[#allocation9 + $0x50] sm:$0xff]
    %v598 = vld [vmem:[#allocation9 + $0x58] sm:$0xff]
    %v599 = vld [vmem:[#allocation9 + $0x60] sm:$0xff]
    %v600 = vld [vmem:[#allocation9 + $0x68] sm:$0xff]
    %v601 = vld [vmem:[#allocation9 + $0x70] sm:$0xff]
    %v602 = vld [vmem:[#allocation9 + $0x78] sm:$0xff]
    %v603 = vld [vmem:[#allocation9 + $0x80] sm:$0xff]
    %v604 = vld [vmem:[#allocation9 + $0x88] sm:$0xff]
    %v605 = vld [vmem:[#allocation9 + $0x90] sm:$0xff]
    %v606 = vld [vmem:[#allocation9 + $0x98] sm:$0xff]
    %v607 = vld [vmem:[#allocation9 + $0xa0] sm:$0xff]
    %v608 = vld [vmem:[#allocation9 + $0xa8] sm:$0xff]
    %v609 = vld [vmem:[#allocation9 + $0xb0] sm:$0xff]
    %v610 = vld [vmem:[#allocation9 + $0xb8] sm:$0xff]
    %v611 = vld [vmem:[#allocation9 + $0xc0] sm:$0xff]
    %v612 = vld [vmem:[#allocation9 + $0xc8] sm:$0xff]
    %v613 = vld [vmem:[#allocation9 + $0xd0] sm:$0xff]
    %v614 = vld [vmem:[#allocation9 + $0xd8] sm:$0xff]
    %v615 = vld [vmem:[#allocation9 + $0xe0] sm:$0xff]
    %v616 = vld [vmem:[#allocation9 + $0xe8] sm:$0xff]
    %v617 = vld [vmem:[#allocation9 + $0xf0] sm:$0xff]
    %v618 = vld [vmem:[#allocation9 + $0xf8] sm:$0xff]
    %v619 = vld [vmem:[%s5] sm:$0xf]
    %v621 = vlaneseq
    %v622 = vshrl.u32 %v621, 7
    %v623 = vsub.s32 0, %v622
    %v624 = vrot.slane %v619, %v623
    %v625 = vlaneseq
    %v626 = vshrl.u32 %v625, 7
    %v627 = vsub.s32 1, %v626
    %v628 = vrot.slane %v619, %v627
    %v629 = vlaneseq
    %v630 = vshrl.u32 %v629, 7
    %v631 = vsub.s32 2, %v630
    %v632 = vrot.slane %v619, %v631
    %v633 = vlaneseq
    %v634 = vshrl.u32 %v633, 7
    %v635 = vsub.s32 3, %v634
    %v636 = vrot.slane %v619, %v635
    %v641 = vld [vmem:[#allocation2] sm:$0xff]
    %v642 = vld [vmem:[#allocation2 + $0x8] sm:$0xff]
    %v643 = vld [vmem:[#allocation2 + $0x10] sm:$0xff]
    %v644 = vld [vmem:[#allocation2 + $0x18] sm:$0xff]
    %v645 = vsub.f32 0.0, %v641
    %v646 = vmul.f32 %v645, 1.442695
    %v647 = vpow.pop %v646
    %v648 = vadd.f32 %v647, 1.0
    %v649 = vrcp.pop %v648
    %v650 = vsub.f32 0.0, %v642
    %v651 = vmul.f32 %v650, 1.442695
    %v652 = vpow.pop %v651
    %v653 = vadd.f32 %v652, 1.0
    %v654 = vrcp.pop %v653
    %v655 = vtanh.pop %v643
    %v656 = vsub.f32 0.0, %v644
    %v657 = vmul.f32 %v656, 1.442695
    %v658 = vpow.pop %v657
    %v659 = vadd.f32 %v658, 1.0
    %v660 = vrcp.pop %v659
    %v661 = vmul.f32 %v654, 0.0
    %v662 = vmul.f32 %v649, %v655
    %v663 = vadd.f32 %v661, %v662
    %v664 = vtanh.pop %v663
    %v665 = vmul.f32 %v660, %v664
    %v666 = vpack.c.bf16 %v665, %v665
    %v731 = vunpack.c.l.b16 %v523
    %v732 = vunpack.c.h.b16 %v523
    %v733 = vunpack.c.l.b16 %v524
    %v734 = vunpack.c.h.b16 %v524
    %v735 = vunpack.c.l.b16 %v525
    %v736 = vunpack.c.h.b16 %v525
    %v737 = vunpack.c.l.b16 %v526
    %v738 = vunpack.c.h.b16 %v526
    %v739 = vunpack.c.l.b16 %v527
    %v740 = vunpack.c.h.b16 %v527
    %v741 = vunpack.c.l.b16 %v528
    %v742 = vunpack.c.h.b16 %v528
    %v743 = vunpack.c.l.b16 %v529
    %v744 = vunpack.c.h.b16 %v529
    %v745 = vunpack.c.l.b16 %v530
    %v746 = vunpack.c.h.b16 %v530
    %v747 = vunpack.c.l.b16 %v531
    %v748 = vunpack.c.h.b16 %v531
    %v749 = vunpack.c.l.b16 %v532
    %v750 = vunpack.c.h.b16 %v532
    %v751 = vunpack.c.l.b16 %v533
    %v752 = vunpack.c.h.b16 %v533
    %v753 = vunpack.c.l.b16 %v534
    %v754 = vunpack.c.h.b16 %v534
    %v755 = vunpack.c.l.b16 %v535
    %v756 = vunpack.c.h.b16 %v535
    %v757 = vunpack.c.l.b16 %v536
    %v758 = vunpack.c.h.b16 %v536
    %v759 = vunpack.c.l.b16 %v537
    %v760 = vunpack.c.h.b16 %v537
    %v761 = vunpack.c.l.b16 %v538
    %v762 = vunpack.c.h.b16 %v538
    %v763 = vunpack.c.l.b16 %v539
    %v764 = vunpack.c.h.b16 %v539
    %v765 = vunpack.c.l.b16 %v540
    %v766 = vunpack.c.h.b16 %v540
    %v767 = vunpack.c.l.b16 %v541
    %v768 = vunpack.c.h.b16 %v541
    %v769 = vunpack.c.l.b16 %v542
    %v770 = vunpack.c.h.b16 %v542
    %v771 = vunpack.c.l.b16 %v543
    %v772 = vunpack.c.h.b16 %v543
    %v773 = vunpack.c.l.b16 %v544
    %v774 = vunpack.c.h.b16 %v544
    %v775 = vunpack.c.l.b16 %v545
    %v776 = vunpack.c.h.b16 %v545
    %v777 = vunpack.c.l.b16 %v546
    %v778 = vunpack.c.h.b16 %v546
    %v779 = vunpack.c.l.b16 %v547
    %v780 = vunpack.c.h.b16 %v547
    %v781 = vunpack.c.l.b16 %v548
    %v782 = vunpack.c.h.b16 %v548
    %v783 = vunpack.c.l.b16 %v549
    %v784 = vunpack.c.h.b16 %v549
    %v785 = vunpack.c.l.b16 %v550
    %v786 = vunpack.c.h.b16 %v550
    %v787 = vunpack.c.l.b16 %v551
    %v788 = vunpack.c.h.b16 %v551
    %v789 = vunpack.c.l.b16 %v552
    %v790 = vunpack.c.h.b16 %v552
    %v791 = vunpack.c.l.b16 %v553
    %v792 = vunpack.c.h.b16 %v553
    %v793 = vunpack.c.l.b16 %v554
    %v794 = vunpack.c.h.b16 %v554
    %v795 = vunpack.c.l.b16 %v555
    %v796 = vunpack.c.h.b16 %v555
    %v797 = vunpack.c.l.b16 %v556
    %v798 = vunpack.c.h.b16 %v556
    %v799 = vunpack.c.l.b16 %v557
    %v800 = vunpack.c.h.b16 %v557
    %v801 = vunpack.c.l.b16 %v558
    %v802 = vunpack.c.h.b16 %v558
    %v803 = vunpack.c.l.b16 %v559
    %v804 = vunpack.c.h.b16 %v559
    %v805 = vunpack.c.l.b16 %v560
    %v806 = vunpack.c.h.b16 %v560
    %v807 = vunpack.c.l.b16 %v561
    %v808 = vunpack.c.h.b16 %v561
    %v809 = vunpack.c.l.b16 %v562
    %v810 = vunpack.c.h.b16 %v562
    %v811 = vunpack.c.l.b16 %v563
    %v812 = vunpack.c.h.b16 %v563
    %v813 = vunpack.c.l.b16 %v564
    %v814 = vunpack.c.h.b16 %v564
    %v815 = vunpack.c.l.b16 %v565
    %v816 = vunpack.c.h.b16 %v565
    %v817 = vunpack.c.l.b16 %v566
    %v818 = vunpack.c.h.b16 %v566
    %v819 = vunpack.c.l.b16 %v567
    %v820 = vunpack.c.h.b16 %v567
    %v821 = vunpack.c.l.b16 %v568
    %v822 = vunpack.c.h.b16 %v568
    %v823 = vunpack.c.l.b16 %v569
    %v824 = vunpack.c.h.b16 %v569
    %v825 = vunpack.c.l.b16 %v570
    %v826 = vunpack.c.h.b16 %v570
    %v827 = vunpack.c.l.b16 %v571
    %v828 = vunpack.c.h.b16 %v571
    %v829 = vunpack.c.l.b16 %v572
    %v830 = vunpack.c.h.b16 %v572
    %v831 = vunpack.c.l.b16 %v573
    %v832 = vunpack.c.h.b16 %v573
    %v833 = vunpack.c.l.b16 %v574
    %v834 = vunpack.c.h.b16 %v574
    %v835 = vunpack.c.l.b16 %v575
    %v836 = vunpack.c.h.b16 %v575
    %v837 = vunpack.c.l.b16 %v576
    %v838 = vunpack.c.h.b16 %v576
    %v839 = vunpack.c.l.b16 %v577
    %v840 = vunpack.c.h.b16 %v577
    %v841 = vunpack.c.l.b16 %v578
    %v842 = vunpack.c.h.b16 %v578
    %v843 = vunpack.c.l.b16 %v579
    %v844 = vunpack.c.h.b16 %v579
    %v845 = vunpack.c.l.b16 %v580
    %v846 = vunpack.c.h.b16 %v580
    %v847 = vunpack.c.l.b16 %v581
    %v848 = vunpack.c.h.b16 %v581
    %v849 = vunpack.c.l.b16 %v582
    %v850 = vunpack.c.h.b16 %v582
    %v851 = vunpack.c.l.b16 %v583
    %v852 = vunpack.c.h.b16 %v583
    %v853 = vunpack.c.l.b16 %v584
    %v854 = vunpack.c.h.b16 %v584
    %v855 = vunpack.c.l.b16 %v585
    %v856 = vunpack.c.h.b16 %v585
    %v857 = vunpack.c.l.b16 %v586
    %v858 = vunpack.c.h.b16 %v586
    %v859 = vpack.c.b16 %v739, %v731
    %v860 = vpack.c.b16 %v740, %v732
    %v861 = vpack.c.b16 %v741, %v733
    %v862 = vpack.c.b16 %v742, %v734
    %v863 = vpack.c.b16 %v743, %v735
    %v864 = vpack.c.b16 %v744, %v736
    %v865 = vpack.c.b16 %v745, %v737
    %v866 = vpack.c.b16 %v746, %v738
    %v867 = vpack.c.b16 %v755, %v747
    %v868 = vpack.c.b16 %v756, %v748
    %v869 = vpack.c.b16 %v757, %v749
    %v870 = vpack.c.b16 %v758, %v750
    %v871 = vpack.c.b16 %v759, %v751
    %v872 = vpack.c.b16 %v760, %v752
    %v873 = vpack.c.b16 %v761, %v753
    %v874 = vpack.c.b16 %v762, %v754
    %v875 = vpack.c.b16 %v771, %v763
    %v876 = vpack.c.b16 %v772, %v764
    %v877 = vpack.c.b16 %v773, %v765
    %v878 = vpack.c.b16 %v774, %v766
    %v879 = vpack.c.b16 %v775, %v767
    %v880 = vpack.c.b16 %v776, %v768
    %v881 = vpack.c.b16 %v777, %v769
    %v882 = vpack.c.b16 %v778, %v770
    %v883 = vpack.c.b16 %v787, %v779
    %v884 = vpack.c.b16 %v788, %v780
    %v885 = vpack.c.b16 %v789, %v781
    %v886 = vpack.c.b16 %v790, %v782
    %v887 = vpack.c.b16 %v791, %v783
    %v888 = vpack.c.b16 %v792, %v784
    %v889 = vpack.c.b16 %v793, %v785
    %v890 = vpack.c.b16 %v794, %v786
    %v891 = vpack.c.b16 %v803, %v795
    %v892 = vpack.c.b16 %v804, %v796
    %v893 = vpack.c.b16 %v805, %v797
    %v894 = vpack.c.b16 %v806, %v798
    %v895 = vpack.c.b16 %v807, %v799
    %v896 = vpack.c.b16 %v808, %v800
    %v897 = vpack.c.b16 %v809, %v801
    %v898 = vpack.c.b16 %v810, %v802
    %v899 = vpack.c.b16 %v819, %v811
    %v900 = vpack.c.b16 %v820, %v812
    %v901 = vpack.c.b16 %v821, %v813
    %v902 = vpack.c.b16 %v822, %v814
    %v903 = vpack.c.b16 %v823, %v815
    %v904 = vpack.c.b16 %v824, %v816
    %v905 = vpack.c.b16 %v825, %v817
    %v906 = vpack.c.b16 %v826, %v818
    %v907 = vpack.c.b16 %v835, %v827
    %v908 = vpack.c.b16 %v836, %v828
    %v909 = vpack.c.b16 %v837, %v829
    %v910 = vpack.c.b16 %v838, %v830
    %v911 = vpack.c.b16 %v839, %v831
    %v912 = vpack.c.b16 %v840, %v832
    %v913 = vpack.c.b16 %v841, %v833
    %v914 = vpack.c.b16 %v842, %v834
    %v915 = vpack.c.b16 %v851, %v843
    %v916 = vpack.c.b16 %v852, %v844
    %v917 = vpack.c.b16 %v853, %v845
    %v918 = vpack.c.b16 %v854, %v846
    %v919 = vpack.c.b16 %v855, %v847
    %v920 = vpack.c.b16 %v856, %v848
    %v921 = vpack.c.b16 %v857, %v849
    %v922 = vpack.c.b16 %v858, %v850
    %987 = vmatprep.subr.bf16.mxu0 %v860
    %988 = vmatpush1.bf16.msra.mxu0 %v859
    %989 = vmatprep.subr.bf16.mxu0 %v868
    %990 = vmatpush1.bf16.msra.mxu0 %v867
    %991 = vmatprep.subr.bf16.mxu0 %v876
    %992 = vmatpush1.bf16.msra.mxu0 %v875
    %993 = vmatprep.subr.bf16.mxu0 %v884
    %994 = vmatpush1.bf16.msra.mxu0 %v883
    %995 = vmatprep.subr.bf16.mxu0 %v892
    %996 = vmatpush1.bf16.msra.mxu0 %v891
    %997 = vmatprep.subr.bf16.mxu0 %v900
    %998 = vmatpush1.bf16.msra.mxu0 %v899
    %999 = vmatprep.subr.bf16.mxu0 %v908
    %1000 = vmatpush1.bf16.msra.mxu0 %v907
    %1001 = vmatprep.subr.bf16.mxu0 %v916
    %1002 = vmatpush1.bf16.msra.mxu0 %v915
    %1003 = vmatprep.subr.bf16.mxu0 0
    %1004 = vmatpush1.bf16.msra.mxu0 0
    %1005 = vmatprep.subr.bf16.mxu0 0
    %1006 = vmatpush1.bf16.msra.mxu0 0
    %1007 = vmatprep.subr.bf16.mxu0 0
    %1008 = vmatpush1.bf16.msra.mxu0 0
    %1009 = vmatprep.subr.bf16.mxu0 0
    %1010 = vmatpush1.bf16.msra.mxu0 0
    %1011 = vmatprep.subr.bf16.mxu0 0
    %1012 = vmatpush1.bf16.msra.mxu0 0
    %1013 = vmatprep.subr.bf16.mxu0 0
    %1014 = vmatpush1.bf16.msra.mxu0 0
    %1015 = vmatprep.subr.bf16.mxu0 0
    %1016 = vmatpush1.bf16.msra.mxu0 0
    %1017 = vmatprep.subr.bf16.mxu0 0
    %1018 = vmatpush1.bf16.msra.mxu0 0
    %1019 = vmatprep.mubr.bf16.mxu0 0
    %1020 = vmatmul.mubr.bf16.gmra.mrb[0].mxu0 %v666
    %v1021 = vpop.f32.mrb[0].mxu0
    %v1022 = vadd.f32 0.0, %v1021
    %v1023 = vpop.f32.mrb[0].mxu0
    %v1024 = vadd.f32 0.0, %v1023
    %v1025 = vpop.f32.mrb[0].mxu0
    %v1026 = vpop.f32.mrb[0].mxu0
    %1027 = vdwg.mxu0
    %1028 = vmatprep.subr.bf16.mxu0 %v862
    %1029 = vmatpush1.bf16.msra.mxu0 %v861
    %1030 = vmatprep.subr.bf16.mxu0 %v870
    %1031 = vmatpush1.bf16.msra.mxu0 %v869
    %1032 = vmatprep.subr.bf16.mxu0 %v878
    %1033 = vmatpush1.bf16.msra.mxu0 %v877
    %1034 = vmatprep.subr.bf16.mxu0 %v886
    %1035 = vmatpush1.bf16.msra.mxu0 %v885
    %1036 = vmatprep.subr.bf16.mxu0 %v894
    %1037 = vmatpush1.bf16.msra.mxu0 %v893
    %1038 = vmatprep.subr.bf16.mxu0 %v902
    %1039 = vmatpush1.bf16.msra.mxu0 %v901
    %1040 = vmatprep.subr.bf16.mxu0 %v910
    %1041 = vmatpush1.bf16.msra.mxu0 %v909
    %1042 = vmatprep.subr.bf16.mxu0 %v918
    %1043 = vmatpush1.bf16.msra.mxu0 %v917
    %1044 = vmatprep.subr.bf16.mxu0 0
    %1045 = vmatpush1.bf16.msra.mxu0 0
    %1046 = vmatprep.subr.bf16.mxu0 0
    %1047 = vmatpush1.bf16.msra.mxu0 0
    %1048 = vmatprep.subr.bf16.mxu0 0
    %1049 = vmatpush1.bf16.msra.mxu0 0
    %1050 = vmatprep.subr.bf16.mxu0 0
    %1051 = vmatpush1.bf16.msra.mxu0 0
    %1052 = vmatprep.subr.bf16.mxu0 0
    %1053 = vmatpush1.bf16.msra.mxu0 0
    %1054 = vmatprep.subr.bf16.mxu0 0
    %1055 = vmatpush1.bf16.msra.mxu0 0
    %1056 = vmatprep.subr.bf16.mxu0 0
    %1057 = vmatpush1.bf16.msra.mxu0 0
    %1058 = vmatprep.subr.bf16.mxu0 0
    %1059 = vmatpush1.bf16.msra.mxu0 0
    %1060 = vmatprep.mubr.bf16.mxu0 0
    %1061 = vmatmul.mubr.bf16.gmra.mrb[0].mxu0 %v666
    %v1062 = vpop.f32.mrb[0].mxu0
    %v1063 = vadd.f32 0.0, %v1062
    %v1064 = vpop.f32.mrb[0].mxu0
    %v1065 = vadd.f32 0.0, %v1064
    %v1066 = vpop.f32.mrb[0].mxu0
    %v1067 = vpop.f32.mrb[0].mxu0
    %1068 = vdwg.mxu0
    %1069 = vmatprep.subr.bf16.mxu0 %v864
    %1070 = vmatpush1.bf16.msra.mxu0 %v863
    %1071 = vmatprep.subr.bf16.mxu0 %v872
    %1072 = vmatpush1.bf16.msra.mxu0 %v871
    %1073 = vmatprep.subr.bf16.mxu0 %v880
    %1074 = vmatpush1.bf16.msra.mxu0 %v879
    %1075 = vmatprep.subr.bf16.mxu0 %v888
    %1076 = vmatpush1.bf16.msra.mxu0 %v887
    %1077 = vmatprep.subr.bf16.mxu0 %v896
    %1078 = vmatpush1.bf16.msra.mxu0 %v895
    %1079 = vmatprep.subr.bf16.mxu0 %v904
    %1080 = vmatpush1.bf16.msra.mxu0 %v903
    %1081 = vmatprep.subr.bf16.mxu0 %v912
    %1082 = vmatpush1.bf16.msra.mxu0 %v911
    %1083 = vmatprep.subr.bf16.mxu0 %v920
    %1084 = vmatpush1.bf16.msra.mxu0 %v919
    %1085 = vmatprep.subr.bf16.mxu0 0
    %1086 = vmatpush1.bf16.msra.mxu0 0
    %1087 = vmatprep.subr.bf16.mxu0 0
    %1088 = vmatpush1.bf16.msra.mxu0 0
    %1089 = vmatprep.subr.bf16.mxu0 0
    %1090 = vmatpush1.bf16.msra.mxu0 0
    %1091 = vmatprep.subr.bf16.mxu0 0
    %1092 = vmatpush1.bf16.msra.mxu0 0
    %1093 = vmatprep.subr.bf16.mxu0 0
    %1094 = vmatpush1.bf16.msra.mxu0 0
    %1095 = vmatprep.subr.bf16.mxu0 0
    %1096 = vmatpush1.bf16.msra.mxu0 0
    %1097 = vmatprep.subr.bf16.mxu0 0
    %1098 = vmatpush1.bf16.msra.mxu0 0
    %1099 = vmatprep.subr.bf16.mxu0 0
    %1100 = vmatpush1.bf16.msra.mxu0 0
    %1101 = vmatprep.mubr.bf16.mxu0 0
    %1102 = vmatmul.mubr.bf16.gmra.mrb[0].mxu0 %v666
    %v1103 = vpop.f32.mrb[0].mxu0
    %v1104 = vadd.f32 0.0, %v1103
    %v1105 = vpop.f32.mrb[0].mxu0
    %v1106 = vadd.f32 0.0, %v1105
    %v1107 = vpop.f32.mrb[0].mxu0
    %v1108 = vpop.f32.mrb[0].mxu0
    %1109 = vdwg.mxu0
    %1110 = vmatprep.subr.bf16.mxu0 %v866
    %1111 = vmatpush1.bf16.msra.mxu0 %v865
    %1112 = vmatprep.subr.bf16.mxu0 %v874
    %1113 = vmatpush1.bf16.msra.mxu0 %v873
    %1114 = vmatprep.subr.bf16.mxu0 %v882
    %1115 = vmatpush1.bf16.msra.mxu0 %v881
    %1116 = vmatprep.subr.bf16.mxu0 %v890
    %1117 = vmatpush1.bf16.msra.mxu0 %v889
    %1118 = vmatprep.subr.bf16.mxu0 %v898
    %1119 = vmatpush1.bf16.msra.mxu0 %v897
    %1120 = vmatprep.subr.bf16.mxu0 %v906
    %1121 = vmatpush1.bf16.msra.mxu0 %v905
    %1122 = vmatprep.subr.bf16.mxu0 %v914
    %1123 = vmatpush1.bf16.msra.mxu0 %v913
    %1124 = vmatprep.subr.bf16.mxu0 %v922
    %1125 = vmatpush1.bf16.msra.mxu0 %v921
    %1126 = vmatprep.subr.bf16.mxu0 0
    %1127 = vmatpush1.bf16.msra.mxu0 0
    %1128 = vmatprep.subr.bf16.mxu0 0
    %1129 = vmatpush1.bf16.msra.mxu0 0
    %1130 = vmatprep.subr.bf16.mxu0 0
    %1131 = vmatpush1.bf16.msra.mxu0 0
    %1132 = vmatprep.subr.bf16.mxu0 0
    %1133 = vmatpush1.bf16.msra.mxu0 0
    %1134 = vmatprep.subr.bf16.mxu0 0
    %1135 = vmatpush1.bf16.msra.mxu0 0
    %1136 = vmatprep.subr.bf16.mxu0 0
    %1137 = vmatpush1.bf16.msra.mxu0 0
    %1138 = vmatprep.subr.bf16.mxu0 0
    %1139 = vmatpush1.bf16.msra.mxu0 0
    %1140 = vmatprep.subr.bf16.mxu0 0
    %1141 = vmatpush1.bf16.msra.mxu0 0
    %1142 = vmatprep.mubr.bf16.mxu0 0
    %1143 = vmatmul.mubr.bf16.gmra.mrb[0].mxu0 %v666
    %v1144 = vpop.f32.mrb[0].mxu0
    %v1145 = vadd.f32 0.0, %v1144
    %v1146 = vpop.f32.mrb[0].mxu0
    %v1147 = vadd.f32 0.0, %v1146
    %v1148 = vpop.f32.mrb[0].mxu0
    %v1149 = vpop.f32.mrb[0].mxu0
    %1150 = vdwg.mxu0
    %v1183 = vunpack.c.l.b16 %v587
    %v1184 = vunpack.c.h.b16 %v587
    %v1185 = vunpack.c.l.b16 %v588
    %v1186 = vunpack.c.h.b16 %v588
    %v1187 = vunpack.c.l.b16 %v589
    %v1188 = vunpack.c.h.b16 %v589
    %v1189 = vunpack.c.l.b16 %v590
    %v1190 = vunpack.c.h.b16 %v590
    %v1191 = vunpack.c.l.b16 %v591
    %v1192 = vunpack.c.h.b16 %v591
    %v1193 = vunpack.c.l.b16 %v592
    %v1194 = vunpack.c.h.b16 %v592
    %v1195 = vunpack.c.l.b16 %v593
    %v1196 = vunpack.c.h.b16 %v593
    %v1197 = vunpack.c.l.b16 %v594
    %v1198 = vunpack.c.h.b16 %v594
    %v1199 = vunpack.c.l.b16 %v595
    %v1200 = vunpack.c.h.b16 %v595
    %v1201 = vunpack.c.l.b16 %v596
    %v1202 = vunpack.c.h.b16 %v596
    %v1203 = vunpack.c.l.b16 %v597
    %v1204 = vunpack.c.h.b16 %v597
    %v1205 = vunpack.c.l.b16 %v598
    %v1206 = vunpack.c.h.b16 %v598
    %v1207 = vunpack.c.l.b16 %v599
    %v1208 = vunpack.c.h.b16 %v599
    %v1209 = vunpack.c.l.b16 %v600
    %v1210 = vunpack.c.h.b16 %v600
    %v1211 = vunpack.c.l.b16 %v601
    %v1212 = vunpack.c.h.b16 %v601
    %v1213 = vunpack.c.l.b16 %v602
    %v1214 = vunpack.c.h.b16 %v602
    %v1215 = vunpack.c.l.b16 %v603
    %v1216 = vunpack.c.h.b16 %v603
    %v1217 = vunpack.c.l.b16 %v604
    %v1218 = vunpack.c.h.b16 %v604
    %v1219 = vunpack.c.l.b16 %v605
    %v1220 = vunpack.c.h.b16 %v605
    %v1221 = vunpack.c.l.b16 %v606
    %v1222 = vunpack.c.h.b16 %v606
    %v1223 = vunpack.c.l.b16 %v607
    %v1224 = vunpack.c.h.b16 %v607
    %v1225 = vunpack.c.l.b16 %v608
    %v1226 = vunpack.c.h.b16 %v608
    %v1227 = vunpack.c.l.b16 %v609
    %v1228 = vunpack.c.h.b16 %v609
    %v1229 = vunpack.c.l.b16 %v610
    %v1230 = vunpack.c.h.b16 %v610
    %v1231 = vunpack.c.l.b16 %v611
    %v1232 = vunpack.c.h.b16 %v611
    %v1233 = vunpack.c.l.b16 %v612
    %v1234 = vunpack.c.h.b16 %v612
    %v1235 = vunpack.c.l.b16 %v613
    %v1236 = vunpack.c.h.b16 %v613
    %v1237 = vunpack.c.l.b16 %v614
    %v1238 = vunpack.c.h.b16 %v614
    %v1239 = vunpack.c.l.b16 %v615
    %v1240 = vunpack.c.h.b16 %v615
    %v1241 = vunpack.c.l.b16 %v616
    %v1242 = vunpack.c.h.b16 %v616
    %v1243 = vunpack.c.l.b16 %v617
    %v1244 = vunpack.c.h.b16 %v617
    %v1245 = vunpack.c.l.b16 %v618
    %v1246 = vunpack.c.h.b16 %v618
    %v1247 = vpack.c.b16 %v1187, %v1183
    %v1248 = vpack.c.b16 %v1188, %v1184
    %v1249 = vpack.c.b16 %v1189, %v1185
    %v1250 = vpack.c.b16 %v1190, %v1186
    %v1251 = vpack.c.b16 %v1195, %v1191
    %v1252 = vpack.c.b16 %v1196, %v1192
    %v1253 = vpack.c.b16 %v1197, %v1193
    %v1254 = vpack.c.b16 %v1198, %v1194
    %v1255 = vpack.c.b16 %v1203, %v1199
    %v1256 = vpack.c.b16 %v1204, %v1200
    %v1257 = vpack.c.b16 %v1205, %v1201
    %v1258 = vpack.c.b16 %v1206, %v1202
    %v1259 = vpack.c.b16 %v1211, %v1207
    %v1260 = vpack.c.b16 %v1212, %v1208
    %v1261 = vpack.c.b16 %v1213, %v1209
    %v1262 = vpack.c.b16 %v1214, %v1210
    %v1263 = vpack.c.b16 %v1219, %v1215
    %v1264 = vpack.c.b16 %v1220, %v1216
    %v1265 = vpack.c.b16 %v1221, %v1217
    %v1266 = vpack.c.b16 %v1222, %v1218
    %v1267 = vpack.c.b16 %v1227, %v1223
    %v1268 = vpack.c.b16 %v1228, %v1224
    %v1269 = vpack.c.b16 %v1229, %v1225
    %v1270 = vpack.c.b16 %v1230, %v1226
    %v1271 = vpack.c.b16 %v1235, %v1231
    %v1272 = vpack.c.b16 %v1236, %v1232
    %v1273 = vpack.c.b16 %v1237, %v1233
    %v1274 = vpack.c.b16 %v1238, %v1234
    %v1275 = vpack.c.b16 %v1243, %v1239
    %v1276 = vpack.c.b16 %v1244, %v1240
    %v1277 = vpack.c.b16 %v1245, %v1241
    %v1278 = vpack.c.b16 %v1246, %v1242
    %1311 = vmatprep.subr.bf16.mxu0 %v1248
    %1312 = vmatpush1.bf16.msra.mxu0 %v1247
    %1313 = vmatprep.subr.bf16.mxu0 %v1252
    %1314 = vmatpush1.bf16.msra.mxu0 %v1251
    %1315 = vmatprep.subr.bf16.mxu0 %v1256
    %1316 = vmatpush1.bf16.msra.mxu0 %v1255
    %1317 = vmatprep.subr.bf16.mxu0 %v1260
    %1318 = vmatpush1.bf16.msra.mxu0 %v1259
    %1319 = vmatprep.subr.bf16.mxu0 %v1264
    %1320 = vmatpush1.bf16.msra.mxu0 %v1263
    %1321 = vmatprep.subr.bf16.mxu0 %v1268
    %1322 = vmatpush1.bf16.msra.mxu0 %v1267
    %1323 = vmatprep.subr.bf16.mxu0 %v1272
    %1324 = vmatpush1.bf16.msra.mxu0 %v1271
    %1325 = vmatprep.subr.bf16.mxu0 %v1276
    %1326 = vmatpush1.bf16.msra.mxu0 %v1275
    %1327 = vmatprep.subr.bf16.mxu0 0
    %1328 = vmatpush1.bf16.msra.mxu0 0
    %1329 = vmatprep.subr.bf16.mxu0 0
    %1330 = vmatpush1.bf16.msra.mxu0 0
    %1331 = vmatprep.subr.bf16.mxu0 0
    %1332 = vmatpush1.bf16.msra.mxu0 0
    %1333 = vmatprep.subr.bf16.mxu0 0
    %1334 = vmatpush1.bf16.msra.mxu0 0
    %1335 = vmatprep.subr.bf16.mxu0 0
    %1336 = vmatpush1.bf16.msra.mxu0 0
    %1337 = vmatprep.subr.bf16.mxu0 0
    %1338 = vmatpush1.bf16.msra.mxu0 0
    %1339 = vmatprep.subr.bf16.mxu0 0
    %1340 = vmatpush1.bf16.msra.mxu0 0
    %1341 = vmatprep.subr.bf16.mxu0 0
    %1342 = vmatpush1.bf16.msra.mxu0 0
    %1343 = vmatprep.mubr.bf16.mxu0 0
    %1344 = vmatmul.mubr.bf16.gmra.mrb[0].mxu0 0
    %v1345 = vpop.f32.mrb[0].mxu0
    %v1346 = vadd.f32 0.0, %v1345
    %v1347 = vpop.f32.mrb[0].mxu0
    %v1348 = vadd.f32 0.0, %v1347
    %v1349 = vpop.f32.mrb[0].mxu0
    %v1350 = vpop.f32.mrb[0].mxu0
    %1351 = vdwg.mxu0
    %1352 = vmatprep.subr.bf16.mxu0 %v1250
    %1353 = vmatpush1.bf16.msra.mxu0 %v1249
    %1354 = vmatprep.subr.bf16.mxu0 %v1254
    %1355 = vmatpush1.bf16.msra.mxu0 %v1253
    %1356 = vmatprep.subr.bf16.mxu0 %v1258
    %1357 = vmatpush1.bf16.msra.mxu0 %v1257
    %1358 = vmatprep.subr.bf16.mxu0 %v1262
    %1359 = vmatpush1.bf16.msra.mxu0 %v1261
    %1360 = vmatprep.subr.bf16.mxu0 %v1266
    %1361 = vmatpush1.bf16.msra.mxu0 %v1265
    %1362 = vmatprep.subr.bf16.mxu0 %v1270
    %1363 = vmatpush1.bf16.msra.mxu0 %v1269
    %1364 = vmatprep.subr.bf16.mxu0 %v1274
    %1365 = vmatpush1.bf16.msra.mxu0 %v1273
    %1366 = vmatprep.subr.bf16.mxu0 %v1278
    %1367 = vmatpush1.bf16.msra.mxu0 %v1277
    %1368 = vmatprep.subr.bf16.mxu0 0
    %1369 = vmatpush1.bf16.msra.mxu0 0
    %1370 = vmatprep.subr.bf16.mxu0 0
    %1371 = vmatpush1.bf16.msra.mxu0 0
    %1372 = vmatprep.subr.bf16.mxu0 0
    %1373 = vmatpush1.bf16.msra.mxu0 0
    %1374 = vmatprep.subr.bf16.mxu0 0
    %1375 = vmatpush1.bf16.msra.mxu0 0
    %1376 = vmatprep.subr.bf16.mxu0 0
    %1377 = vmatpush1.bf16.msra.mxu0 0
    %1378 = vmatprep.subr.bf16.mxu0 0
    %1379 = vmatpush1.bf16.msra.mxu0 0
    %1380 = vmatprep.subr.bf16.mxu0 0
    %1381 = vmatpush1.bf16.msra.mxu0 0
    %1382 = vmatprep.subr.bf16.mxu0 0
    %1383 = vmatpush1.bf16.msra.mxu0 0
    %1384 = vmatprep.mubr.bf16.mxu0 0
    %1385 = vmatmul.mubr.bf16.gmra.mrb[0].mxu0 0
    %v1386 = vpop.f32.mrb[0].mxu0
    %v1387 = vadd.f32 0.0, %v1386
    %v1388 = vpop.f32.mrb[0].mxu0
    %v1389 = vadd.f32 0.0, %v1388
    %v1390 = vpop.f32.mrb[0].mxu0
    %v1391 = vpop.f32.mrb[0].mxu0
    %1392 = vdwg.mxu0
    %v1393 = vadd.f32 %v1104, %v1346
    %v1394 = vadd.f32 %v1106, %v1348
    %v1395 = vadd.f32 %v1145, %v1387
    %v1396 = vadd.f32 %v1147, %v1389
    %v1397 = vadd.f32 %v1393, %v624
    %v1398 = vadd.f32 %v1394, %v628
    %v1399 = vadd.f32 %v1395, %v632
    %v1400 = vadd.f32 %v1396, %v636
    %v1401 = vsub.f32 0.0, %v1397
    %v1402 = vmul.f32 %v1401, 1.442695
    %v1403 = vpow.pop %v1402
    %v1404 = vadd.f32 %v1403, 1.0
    %v1405 = vrcp.pop %v1404
    %v1406 = vsub.f32 0.0, %v1398
    %v1407 = vmul.f32 %v1406, 1.442695
    %v1408 = vpow.pop %v1407
    %v1409 = vadd.f32 %v1408, 1.0
    %v1410 = vrcp.pop %v1409
    %v1411 = vtanh.pop %v1399
    %v1412 = vsub.f32 0.0, %v1400
    %v1413 = vmul.f32 %v1412, 1.442695
    %v1414 = vpow.pop %v1413
    %v1415 = vadd.f32 %v1414, 1.0
    %v1416 = vrcp.pop %v1415
    %v1417 = vmul.f32 %v1410, 0.0
    %v1418 = vmul.f32 %v1405, %v1411
    %v1419 = vadd.f32 %v1417, %v1418
    %v1420 = vtanh.pop %v1419
    %v1421 = vmul.f32 %v1416, %v1420
    %s1422 = scalar_lea.vmem [#allocation2], 32
    %v1423 = vld [vmem:[%s1422] sm:$0xff]
    %v1424 = vld [vmem:[%s1422 + $0x8] sm:$0xff]
    %v1425 = vld [vmem:[%s1422 + $0x10] sm:$0xff]
    %v1426 = vld [vmem:[%s1422 + $0x18] sm:$0xff]
    %v1427 = vadd.f32 %v1022, %v1423
    %v1428 = vadd.f32 %v1024, %v1424
    %v1429 = vadd.f32 %v1063, %v1425
    %v1430 = vadd.f32 %v1065, %v1426
    %v1431 = vsub.f32 0.0, %v1427
    %v1432 = vmul.f32 %v1431, 1.442695
    %v1433 = vpow.pop %v1432
    %v1434 = vadd.f32 %v1433, 1.0
    %v1435 = vrcp.pop %v1434
    %v1436 = vsub.f32 0.0, %v1428
    %v1437 = vmul.f32 %v1436, 1.442695
    %v1438 = vpow.pop %v1437
    %v1439 = vadd.f32 %v1438, 1.0
    %v1440 = vrcp.pop %v1439
    %v1441 = vtanh.pop %v1429
    %v1442 = vsub.f32 0.0, %v1430
    %v1443 = vmul.f32 %v1442, 1.442695
    %v1444 = vpow.pop %v1443
    %v1445 = vadd.f32 %v1444, 1.0
    %v1446 = vrcp.pop %v1445
    %v1447 = vmul.f32 %v1440, %v663
    %v1448 = vmul.f32 %v1435, %v1441
    %v1449 = vadd.f32 %v1447, %v1448
    %v1450 = vtanh.pop %v1449
    %v1451 = vmul.f32 %v1446, %v1450
    %v1452 = vpack.c.bf16 %v1451, %v1451
    %1453 = vmatprep.subr.bf16.mxu0 %v860
    %1454 = vmatpush1.bf16.msra.mxu0 %v859
    %1455 = vmatprep.subr.bf16.mxu0 %v868
    %1456 = vmatpush1.bf16.msra.mxu0 %v867
    %1457 = vmatprep.subr.bf16.mxu0 %v876
    %1458 = vmatpush1.bf16.msra.mxu0 %v875
    %1459 = vmatprep.subr.bf16.mxu0 %v884
    %1460 = vmatpush1.bf16.msra.mxu0 %v883
    %1461 = vmatprep.subr.bf16.mxu0 %v892
    %1462 = vmatpush1.bf16.msra.mxu0 %v891
    %1463 = vmatprep.subr.bf16.mxu0 %v900
    %1464 = vmatpush1.bf16.msra.mxu0 %v899
    %1465 = vmatprep.subr.bf16.mxu0 %v908
    %1466 = vmatpush1.bf16.msra.mxu0 %v907
    %1467 = vmatprep.subr.bf16.mxu0 %v916
    %1468 = vmatpush1.bf16.msra.mxu0 %v915
    %1469 = vmatprep.subr.bf16.mxu0 0
    %1470 = vmatpush1.bf16.msra.mxu0 0
    %1471 = vmatprep.subr.bf16.mxu0 0
    %1472 = vmatpush1.bf16.msra.mxu0 0
    %1473 = vmatprep.subr.bf16.mxu0 0
    %1474 = vmatpush1.bf16.msra.mxu0 0
    %1475 = vmatprep.subr.bf16.mxu0 0
    %1476 = vmatpush1.bf16.msra.mxu0 0
    %1477 = vmatprep.subr.bf16.mxu0 0
    %1478 = vmatpush1.bf16.msra.mxu0 0
    %1479 = vmatprep.subr.bf16.mxu0 0
    %1480 = vmatpush1.bf16.msra.mxu0 0
    %1481 = vmatprep.subr.bf16.mxu0 0
    %1482 = vmatpush1.bf16.msra.mxu0 0
    %1483 = vmatprep.subr.bf16.mxu0 0
    %1484 = vmatpush1.bf16.msra.mxu0 0
    %1485 = vmatprep.mubr.bf16.mxu0 0
    %1486 = vmatmul.mubr.bf16.gmra.mrb[0].mxu0 %v1452
    %v1487 = vpop.f32.mrb[0].mxu0
    %v1488 = vadd.f32 0.0, %v1487
    %v1489 = vpop.f32.mrb[0].mxu0
    %v1490 = vadd.f32 0.0, %v1489
    %v1491 = vpop.f32.mrb[0].mxu0
    %v1492 = vpop.f32.mrb[0].mxu0
    %1493 = vdwg.mxu0
    %1494 = vmatprep.subr.bf16.mxu0 %v862
    %1495 = vmatpush1.bf16.msra.mxu0 %v861
    %1496 = vmatprep.subr.bf16.mxu0 %v870
    %1497 = vmatpush1.bf16.msra.mxu0 %v869
    %1498 = vmatprep.subr.bf16.mxu0 %v878
    %1499 = vmatpush1.bf16.msra.mxu0 %v877
    %1500 = vmatprep.subr.bf16.mxu0 %v886
    %1501 = vmatpush1.bf16.msra.mxu0 %v885
    %1502 = vmatprep.subr.bf16.mxu0 %v894
    %1503 = vmatpush1.bf16.msra.mxu0 %v893
    %1504 = vmatprep.subr.bf16.mxu0 %v902
    %1505 = vmatpush1.bf16.msra.mxu0 %v901
    %1506 = vmatprep.subr.bf16.mxu0 %v910
    %1507 = vmatpush1.bf16.msra.mxu0 %v909
    %1508 = vmatprep.subr.bf16.mxu0 %v918
    %1509 = vmatpush1.bf16.msra.mxu0 %v917
    %1510 = vmatprep.subr.bf16.mxu0 0
    %1511 = vmatpush1.bf16.msra.mxu0 0
    %1512 = vmatprep.subr.bf16.mxu0 0
    %1513 = vmatpush1.bf16.msra.mxu0 0
    %1514 = vmatprep.subr.bf16.mxu0 0
    %1515 = vmatpush1.bf16.msra.mxu0 0
    %1516 = vmatprep.subr.bf16.mxu0 0
    %1517 = vmatpush1.bf16.msra.mxu0 0
    %1518 = vmatprep.subr.bf16.mxu0 0
    %1519 = vmatpush1.bf16.msra.mxu0 0
    %1520 = vmatprep.subr.bf16.mxu0 0
    %1521 = vmatpush1.bf16.msra.mxu0 0
    %1522 = vmatprep.subr.bf16.mxu0 0
    %1523 = vmatpush1.bf16.msra.mxu0 0
    %1524 = vmatprep.subr.bf16.mxu0 0
    %1525 = vmatpush1.bf16.msra.mxu0 0
    %1526 = vmatprep.mubr.bf16.mxu0 0
    %1527 = vmatmul.mubr.bf16.gmra.mrb[0].mxu0 %v1452
    %v1528 = vpop.f32.mrb[0].mxu0
    %v1529 = vadd.f32 0.0, %v1528
    %v1530 = vpop.f32.mrb[0].mxu0
    %v1531 = vadd.f32 0.0, %v1530
    %v1532 = vpop.f32.mrb[0].mxu0
    %v1533 = vpop.f32.mrb[0].mxu0
    %1534 = vdwg.mxu0
    %1535 = vmatprep.subr.bf16.mxu0 %v864
    %1536 = vmatpush1.bf16.msra.mxu0 %v863
    %1537 = vmatprep.subr.bf16.mxu0 %v872
    %1538 = vmatpush1.bf16.msra.mxu0 %v871
    %1539 = vmatprep.subr.bf16.mxu0 %v880
    %1540 = vmatpush1.bf16.msra.mxu0 %v879
    %1541 = vmatprep.subr.bf16.mxu0 %v888
    %1542 = vmatpush1.bf16.msra.mxu0 %v887
    %1543 = vmatprep.subr.bf16.mxu0 %v896
    %1544 = vmatpush1.bf16.msra.mxu0 %v895
    %1545 = vmatprep.subr.bf16.mxu0 %v904
    %1546 = vmatpush1.bf16.msra.mxu0 %v903
    %1547 = vmatprep.subr.bf16.mxu0 %v912
    %1548 = vmatpush1.bf16.msra.mxu0 %v911
    %1549 = vmatprep.subr.bf16.mxu0 %v920
    %1550 = vmatpush1.bf16.msra.mxu0 %v919
    %1551 = vmatprep.subr.bf16.mxu0 0
    %1552 = vmatpush1.bf16.msra.mxu0 0
    %1553 = vmatprep.subr.bf16.mxu0 0
    %1554 = vmatpush1.bf16.msra.mxu0 0
    %1555 = vmatprep.subr.bf16.mxu0 0
    %1556 = vmatpush1.bf16.msra.mxu0 0
    %1557 = vmatprep.subr.bf16.mxu0 0
    %1558 = vmatpush1.bf16.msra.mxu0 0
    %1559 = vmatprep.subr.bf16.mxu0 0
    %1560 = vmatpush1.bf16.msra.mxu0 0
    %1561 = vmatprep.subr.bf16.mxu0 0
    %1562 = vmatpush1.bf16.msra.mxu0 0
    %1563 = vmatprep.subr.bf16.mxu0 0
    %1564 = vmatpush1.bf16.msra.mxu0 0
    %1565 = vmatprep.subr.bf16.mxu0 0
    %1566 = vmatpush1.bf16.msra.mxu0 0
    %1567 = vmatprep.mubr.bf16.mxu0 0
    %1568 = vmatmul.mubr.bf16.gmra.mrb[0].mxu0 %v1452
    %v1569 = vpop.f32.mrb[0].mxu0
    %v1570 = vadd.f32 0.0, %v1569
    %v1571 = vpop.f32.mrb[0].mxu0
    %v1572 = vadd.f32 0.0, %v1571
    %v1573 = vpop.f32.mrb[0].mxu0
    %v1574 = vpop.f32.mrb[0].mxu0
    %1575 = vdwg.mxu0
    %1576 = vmatprep.subr.bf16.mxu0 %v866
    %1577 = vmatpush1.bf16.msra.mxu0 %v865
    %1578 = vmatprep.subr.bf16.mxu0 %v874
    %1579 = vmatpush1.bf16.msra.mxu0 %v873
    %1580 = vmatprep.subr.bf16.mxu0 %v882
    %1581 = vmatpush1.bf16.msra.mxu0 %v881
    %1582 = vmatprep.subr.bf16.mxu0 %v890
    %1583 = vmatpush1.bf16.msra.mxu0 %v889
    %1584 = vmatprep.subr.bf16.mxu0 %v898
    %1585 = vmatpush1.bf16.msra.mxu0 %v897
    %1586 = vmatprep.subr.bf16.mxu0 %v906
    %1587 = vmatpush1.bf16.msra.mxu0 %v905
    %1588 = vmatprep.subr.bf16.mxu0 %v914
    %1589 = vmatpush1.bf16.msra.mxu0 %v913
    %1590 = vmatprep.subr.bf16.mxu0 %v922
    %1591 = vmatpush1.bf16.msra.mxu0 %v921
    %1592 = vmatprep.subr.bf16.mxu0 0
    %1593 = vmatpush1.bf16.msra.mxu0 0
    %1594 = vmatprep.subr.bf16.mxu0 0
    %1595 = vmatpush1.bf16.msra.mxu0 0
    %1596 = vmatprep.subr.bf16.mxu0 0
    %1597 = vmatpush1.bf16.msra.mxu0 0
    %1598 = vmatprep.subr.bf16.mxu0 0
    %1599 = vmatpush1.bf16.msra.mxu0 0
    %1600 = vmatprep.subr.bf16.mxu0 0
    %1601 = vmatpush1.bf16.msra.mxu0 0
    %1602 = vmatprep.subr.bf16.mxu0 0
    %1603 = vmatpush1.bf16.msra.mxu0 0
    %1604 = vmatprep.subr.bf16.mxu0 0
    %1605 = vmatpush1.bf16.msra.mxu0 0
    %1606 = vmatprep.subr.bf16.mxu0 0
    %1607 = vmatpush1.bf16.msra.mxu0 0
    %1608 = vmatprep.mubr.bf16.mxu0 0
    %1609 = vmatmul.mubr.bf16.gmra.mrb[0].mxu0 %v1452
    %v1610 = vpop.f32.mrb[0].mxu0
    %v1611 = vadd.f32 0.0, %v1610
    %v1612 = vpop.f32.mrb[0].mxu0
    %v1613 = vadd.f32 0.0, %v1612
    %v1614 = vpop.f32.mrb[0].mxu0
    %v1615 = vpop.f32.mrb[0].mxu0
    %1616 = vdwg.mxu0
    %v1617 = vpack.c.bf16 %v1421, %v1421
    %1618 = vmatprep.subr.bf16.mxu0 %v1248
    %1619 = vmatpush1.bf16.msra.mxu0 %v1247
    %1620 = vmatprep.subr.bf16.mxu0 %v1252
    %1621 = vmatpush1.bf16.msra.mxu0 %v1251
    %1622 = vmatprep.subr.bf16.mxu0 %v1256
    %1623 = vmatpush1.bf16.msra.mxu0 %v1255
    %1624 = vmatprep.subr.bf16.mxu0 %v1260
    %1625 = vmatpush1.bf16.msra.mxu0 %v1259
    %1626 = vmatprep.subr.bf16.mxu0 %v1264
    %1627 = vmatpush1.bf16.msra.mxu0 %v1263
    %1628 = vmatprep.subr.bf16.mxu0 %v1268
    %1629 = vmatpush1.bf16.msra.mxu0 %v1267
    %1630 = vmatprep.subr.bf16.mxu0 %v1272
    %1631 = vmatpush1.bf16.msra.mxu0 %v1271
    %1632 = vmatprep.subr.bf16.mxu0 %v1276
    %1633 = vmatpush1.bf16.msra.mxu0 %v1275
    %1634 = vmatprep.subr.bf16.mxu0 0
    %1635 = vmatpush1.bf16.msra.mxu0 0
    %1636 = vmatprep.subr.bf16.mxu0 0
    %1637 = vmatpush1.bf16.msra.mxu0 0
    %1638 = vmatprep.subr.bf16.mxu0 0
    %1639 = vmatpush1.bf16.msra.mxu0 0
    %1640 = vmatprep.subr.bf16.mxu0 0
    %1641 = vmatpush1.bf16.msra.mxu0 0
    %1642 = vmatprep.subr.bf16.mxu0 0
    %1643 = vmatpush1.bf16.msra.mxu0 0
    %1644 = vmatprep.subr.bf16.mxu0 0
    %1645 = vmatpush1.bf16.msra.mxu0 0
    %1646 = vmatprep.subr.bf16.mxu0 0
    %1647 = vmatpush1.bf16.msra.mxu0 0
    %1648 = vmatprep.subr.bf16.mxu0 0
    %1649 = vmatpush1.bf16.msra.mxu0 0
    %1650 = vmatprep.mubr.bf16.mxu0 0
    %1651 = vmatmul.mubr.bf16.gmra.mrb[0].mxu0 %v1617
    %v1652 = vpop.f32.mrb[0].mxu0
    %v1653 = vadd.f32 0.0, %v1652
    %v1654 = vpop.f32.mrb[0].mxu0
    %v1655 = vadd.f32 0.0, %v1654
    %v1656 = vpop.f32.mrb[0].mxu0
    %v1657 = vpop.f32.mrb[0].mxu0
    %1658 = vdwg.mxu0
    %1659 = vmatprep.subr.bf16.mxu0 %v1250
    %1660 = vmatpush1.bf16.msra.mxu0 %v1249
    %1661 = vmatprep.subr.bf16.mxu0 %v1254
    %1662 = vmatpush1.bf16.msra.mxu0 %v1253
    %1663 = vmatprep.subr.bf16.mxu0 %v1258
    %1664 = vmatpush1.bf16.msra.mxu0 %v1257
    %1665 = vmatprep.subr.bf16.mxu0 %v1262
    %1666 = vmatpush1.bf16.msra.mxu0 %v1261
    %1667 = vmatprep.subr.bf16.mxu0 %v1266
    %1668 = vmatpush1.bf16.msra.mxu0 %v1265
    %1669 = vmatprep.subr.bf16.mxu0 %v1270
    %1670 = vmatpush1.bf16.msra.mxu0 %v1269
    %1671 = vmatprep.subr.bf16.mxu0 %v1274
    %1672 = vmatpush1.bf16.msra.mxu0 %v1273
    %1673 = vmatprep.subr.bf16.mxu0 %v1278
    %1674 = vmatpush1.bf16.msra.mxu0 %v1277
    %1675 = vmatprep.subr.bf16.mxu0 0
    %1676 = vmatpush1.bf16.msra.mxu0 0
    %1677 = vmatprep.subr.bf16.mxu0 0
    %1678 = vmatpush1.bf16.msra.mxu0 0
    %1679 = vmatprep.subr.bf16.mxu0 0
    %1680 = vmatpush1.bf16.msra.mxu0 0
    %1681 = vmatprep.subr.bf16.mxu0 0
    %1682 = vmatpush1.bf16.msra.mxu0 0
    %1683 = vmatprep.subr.bf16.mxu0 0
    %1684 = vmatpush1.bf16.msra.mxu0 0
    %1685 = vmatprep.subr.bf16.mxu0 0
    %1686 = vmatpush1.bf16.msra.mxu0 0
    %1687 = vmatprep.subr.bf16.mxu0 0
    %1688 = vmatpush1.bf16.msra.mxu0 0
    %1689 = vmatprep.subr.bf16.mxu0 0
    %1690 = vmatpush1.bf16.msra.mxu0 0
    %1691 = vmatprep.mubr.bf16.mxu0 0
    %1692 = vmatmul.mubr.bf16.gmra.mrb[0].mxu0 %v1617
    %v1693 = vpop.f32.mrb[0].mxu0
    %v1694 = vadd.f32 0.0, %v1693
    %v1695 = vpop.f32.mrb[0].mxu0
    %v1696 = vadd.f32 0.0, %v1695
    %v1697 = vpop.f32.mrb[0].mxu0
    %v1698 = vpop.f32.mrb[0].mxu0
    %1699 = vdwg.mxu0
    %v1700 = vadd.f32 %v1570, %v1653
    %v1701 = vadd.f32 %v1572, %v1655
    %v1702 = vadd.f32 %v1611, %v1694
    %v1703 = vadd.f32 %v1613, %v1696
    %v1704 = vadd.f32 %v1700, %v624
    %v1705 = vadd.f32 %v1701, %v628
    %v1706 = vadd.f32 %v1702, %v632
    %v1707 = vadd.f32 %v1703, %v636
    %v1708 = vsub.f32 0.0, %v1704
    %v1709 = vmul.f32 %v1708, 1.442695
    %v1710 = vpow.pop %v1709
    %v1711 = vadd.f32 %v1710, 1.0
    %v1712 = vrcp.pop %v1711
    %v1713 = vsub.f32 0.0, %v1705
    %v1714 = vmul.f32 %v1713, 1.442695
    %v1715 = vpow.pop %v1714
    %v1716 = vadd.f32 %v1715, 1.0
    %v1717 = vrcp.pop %v1716
    %v1718 = vtanh.pop %v1706
    %v1719 = vsub.f32 0.0, %v1707
    %v1720 = vmul.f32 %v1719, 1.442695
    %v1721 = vpow.pop %v1720
    %v1722 = vadd.f32 %v1721, 1.0
    %v1723 = vrcp.pop %v1722
    %v1724 = vmul.f32 %v1717, %v1419
    %v1725 = vmul.f32 %v1712, %v1718
    %v1726 = vadd.f32 %v1724, %v1725
    %v1727 = vtanh.pop %v1726
    %v1728 = vmul.f32 %v1723, %v1727
    %s1729 = scalar_lea.vmem [#allocation2], 64
    %v1730 = vld [vmem:[%s1729] sm:$0xff]
    %v1731 = vld [vmem:[%s1729 + $0x8] sm:$0xff]
    %v1732 = vld [vmem:[%s1729 + $0x10] sm:$0xff]
    %v1733 = vld [vmem:[%s1729 + $0x18] sm:$0xff]
    %v1734 = vadd.f32 %v1488, %v1730
    %v1735 = vadd.f32 %v1490, %v1731
    %v1736 = vadd.f32 %v1529, %v1732
    %v1737 = vadd.f32 %v1531, %v1733
    %v1738 = vsub.f32 0.0, %v1734
    %v1739 = vmul.f32 %v1738, 1.442695
    %v1740 = vpow.pop %v1739
    %v1741 = vadd.f32 %v1740, 1.0
    %v1742 = vrcp.pop %v1741
    %v1743 = vsub.f32 0.0, %v1735
    %v1744 = vmul.f32 %v1743, 1.442695
    %v1745 = vpow.pop %v1744
    %v1746 = vadd.f32 %v1745, 1.0
    %v1747 = vrcp.pop %v1746
    %v1748 = vtanh.pop %v1736
    %v1749 = vsub.f32 0.0, %v1737
    %v1750 = vmul.f32 %v1749, 1.442695
    %v1751 = vpow.pop %v1750
    %v1752 = vadd.f32 %v1751, 1.0
    %v1753 = vrcp.pop %v1752
    %v1754 = vmul.f32 %v1747, %v1449
    %v1755 = vmul.f32 %v1742, %v1748
    %v1756 = vadd.f32 %v1754, %v1755
    %v1757 = vtanh.pop %v1756
    %v1758 = vmul.f32 %v1753, %v1757
    %v1759 = vpack.c.bf16 %v1758, %v1758
    %1760 = vmatprep.subr.bf16.mxu0 %v860
    %1761 = vmatpush1.bf16.msra.mxu0 %v859
    %1762 = vmatprep.subr.bf16.mxu0 %v868
    %1763 = vmatpush1.bf16.msra.mxu0 %v867
    %1764 = vmatprep.subr.bf16.mxu0 %v876
    %1765 = vmatpush1.bf16.msra.mxu0 %v875
    %1766 = vmatprep.subr.bf16.mxu0 %v884
    %1767 = vmatpush1.bf16.msra.mxu0 %v883
    %1768 = vmatprep.subr.bf16.mxu0 %v892
    %1769 = vmatpush1.bf16.msra.mxu0 %v891
    %1770 = vmatprep.subr.bf16.mxu0 %v900
    %1771 = vmatpush1.bf16.msra.mxu0 %v899
    %1772 = vmatprep.subr.bf16.mxu0 %v908
    %1773 = vmatpush1.bf16.msra.mxu0 %v907
    %1774 = vmatprep.subr.bf16.mxu0 %v916
    %1775 = vmatpush1.bf16.msra.mxu0 %v915
    %1776 = vmatprep.subr.bf16.mxu0 0
    %1777 = vmatpush1.bf16.msra.mxu0 0
    %1778 = vmatprep.subr.bf16.mxu0 0
    %1779 = vmatpush1.bf16.msra.mxu0 0
    %1780 = vmatprep.subr.bf16.mxu0 0
    %1781 = vmatpush1.bf16.msra.mxu0 0
    %1782 = vmatprep.subr.bf16.mxu0 0
    %1783 = vmatpush1.bf16.msra.mxu0 0
    %1784 = vmatprep.subr.bf16.mxu0 0
    %1785 = vmatpush1.bf16.msra.mxu0 0
    %1786 = vmatprep.subr.bf16.mxu0 0
    %1787 = vmatpush1.bf16.msra.mxu0 0
    %1788 = vmatprep.subr.bf16.mxu0 0
    %1789 = vmatpush1.bf16.msra.mxu0 0
    %1790 = vmatprep.subr.bf16.mxu0 0
    %1791 = vmatpush1.bf16.msra.mxu0 0
    %1792 = vmatprep.mubr.bf16.mxu0 0
    %1793 = vmatmul.mubr.bf16.gmra.mrb[0].mxu0 %v1759
    %v1794 = vpop.f32.mrb[0].mxu0
    %v1795 = vadd.f32 0.0, %v1794
    %v1796 = vpop.f32.mrb[0].mxu0
    %v1797 = vadd.f32 0.0, %v1796
    %v1798 = vpop.f32.mrb[0].mxu0
    %v1799 = vpop.f32.mrb[0].mxu0
    %1800 = vdwg.mxu0
    %1801 = vmatprep.subr.bf16.mxu0 %v862
    %1802 = vmatpush1.bf16.msra.mxu0 %v861
    %1803 = vmatprep.subr.bf16.mxu0 %v870
    %1804 = vmatpush1.bf16.msra.mxu0 %v869
    %1805 = vmatprep.subr.bf16.mxu0 %v878
    %1806 = vmatpush1.bf16.msra.mxu0 %v877
    %1807 = vmatprep.subr.bf16.mxu0 %v886
    %1808 = vmatpush1.bf16.msra.mxu0 %v885
    %1809 = vmatprep.subr.bf16.mxu0 %v894
    %1810 = vmatpush1.bf16.msra.mxu0 %v893
    %1811 = vmatprep.subr.bf16.mxu0 %v902
    %1812 = vmatpush1.bf16.msra.mxu0 %v901
    %1813 = vmatprep.subr.bf16.mxu0 %v910
    %1814 = vmatpush1.bf16.msra.mxu0 %v909
    %1815 = vmatprep.subr.bf16.mxu0 %v918
    %1816 = vmatpush1.bf16.msra.mxu0 %v917
    %1817 = vmatprep.subr.bf16.mxu0 0
    %1818 = vmatpush1.bf16.msra.mxu0 0
    %1819 = vmatprep.subr.bf16.mxu0 0
    %1820 = vmatpush1.bf16.msra.mxu0 0
    %1821 = vmatprep.subr.bf16.mxu0 0
    %1822 = vmatpush1.bf16.msra.mxu0 0
    %1823 = vmatprep.subr.bf16.mxu0 0
    %1824 = vmatpush1.bf16.msra.mxu0 0
    %1825 = vmatprep.subr.bf16.mxu0 0
    %1826 = vmatpush1.bf16.msra.mxu0 0
    %1827 = vmatprep.subr.bf16.mxu0 0
    %1828 = vmatpush1.bf16.msra.mxu0 0
    %1829 = vmatprep.subr.bf16.mxu0 0
    %1830 = vmatpush1.bf16.msra.mxu0 0
    %1831 = vmatprep.subr.bf16.mxu0 0
    %1832 = vmatpush1.bf16.msra.mxu0 0
    %1833 = vmatprep.mubr.bf16.mxu0 0
    %1834 = vmatmul.mubr.bf16.gmra.mrb[0].mxu0 %v1759
    %v1835 = vpop.f32.mrb[0].mxu0
    %v1836 = vadd.f32 0.0, %v1835
    %v1837 = vpop.f32.mrb[0].mxu0
    %v1838 = vadd.f32 0.0, %v1837
    %v1839 = vpop.f32.mrb[0].mxu0
    %v1840 = vpop.f32.mrb[0].mxu0
    %1841 = vdwg.mxu0
    %1842 = vmatprep.subr.bf16.mxu0 %v864
    %1843 = vmatpush1.bf16.msra.mxu0 %v863
    %1844 = vmatprep.subr.bf16.mxu0 %v872
    %1845 = vmatpush1.bf16.msra.mxu0 %v871
    %1846 = vmatprep.subr.bf16.mxu0 %v880
    %1847 = vmatpush1.bf16.msra.mxu0 %v879
    %1848 = vmatprep.subr.bf16.mxu0 %v888
    %1849 = vmatpush1.bf16.msra.mxu0 %v887
    %1850 = vmatprep.subr.bf16.mxu0 %v896
    %1851 = vmatpush1.bf16.msra.mxu0 %v895
    %1852 = vmatprep.subr.bf16.mxu0 %v904
    %1853 = vmatpush1.bf16.msra.mxu0 %v903
    %1854 = vmatprep.subr.bf16.mxu0 %v912
    %1855 = vmatpush1.bf16.msra.mxu0 %v911
    %1856 = vmatprep.subr.bf16.mxu0 %v920
    %1857 = vmatpush1.bf16.msra.mxu0 %v919
    %1858 = vmatprep.subr.bf16.mxu0 0
    %1859 = vmatpush1.bf16.msra.mxu0 0
    %1860 = vmatprep.subr.bf16.mxu0 0
    %1861 = vmatpush1.bf16.msra.mxu0 0
    %1862 = vmatprep.subr.bf16.mxu0 0
    %1863 = vmatpush1.bf16.msra.mxu0 0
    %1864 = vmatprep.subr.bf16.mxu0 0
    %1865 = vmatpush1.bf16.msra.mxu0 0
    %1866 = vmatprep.subr.bf16.mxu0 0
    %1867 = vmatpush1.bf16.msra.mxu0 0
    %1868 = vmatprep.subr.bf16.mxu0 0
    %1869 = vmatpush1.bf16.msra.mxu0 0
    %1870 = vmatprep.subr.bf16.mxu0 0
    %1871 = vmatpush1.bf16.msra.mxu0 0
    %1872 = vmatprep.subr.bf16.mxu0 0
    %1873 = vmatpush1.bf16.msra.mxu0 0
    %1874 = vmatprep.mubr.bf16.mxu0 0
    %1875 = vmatmul.mubr.bf16.gmra.mrb[0].mxu0 %v1759
    %v1876 = vpop.f32.mrb[0].mxu0
    %v1877 = vadd.f32 0.0, %v1876
    %v1878 = vpop.f32.mrb[0].mxu0
    %v1879 = vadd.f32 0.0, %v1878
    %v1880 = vpop.f32.mrb[0].mxu0
    %v1881 = vpop.f32.mrb[0].mxu0
    %1882 = vdwg.mxu0
    %1883 = vmatprep.subr.bf16.mxu0 %v866
    %1884 = vmatpush1.bf16.msra.mxu0 %v865
    %1885 = vmatprep.subr.bf16.mxu0 %v874
    %1886 = vmatpush1.bf16.msra.mxu0 %v873
    %1887 = vmatprep.subr.bf16.mxu0 %v882
    %1888 = vmatpush1.bf16.msra.mxu0 %v881
    %1889 = vmatprep.subr.bf16.mxu0 %v890
    %1890 = vmatpush1.bf16.msra.mxu0 %v889
    %1891 = vmatprep.subr.bf16.mxu0 %v898
    %1892 = vmatpush1.bf16.msra.mxu0 %v897
    %1893 = vmatprep.subr.bf16.mxu0 %v906
    %1894 = vmatpush1.bf16.msra.mxu0 %v905
    %1895 = vmatprep.subr.bf16.mxu0 %v914
    %1896 = vmatpush1.bf16.msra.mxu0 %v913
    %1897 = vmatprep.subr.bf16.mxu0 %v922
    %1898 = vmatpush1.bf16.msra.mxu0 %v921
    %1899 = vmatprep.subr.bf16.mxu0 0
    %1900 = vmatpush1.bf16.msra.mxu0 0
    %1901 = vmatprep.subr.bf16.mxu0 0
    %1902 = vmatpush1.bf16.msra.mxu0 0
    %1903 = vmatprep.subr.bf16.mxu0 0
    %1904 = vmatpush1.bf16.msra.mxu0 0
    %1905 = vmatprep.subr.bf16.mxu0 0
    %1906 = vmatpush1.bf16.msra.mxu0 0
    %1907 = vmatprep.subr.bf16.mxu0 0
    %1908 = vmatpush1.bf16.msra.mxu0 0
    %1909 = vmatprep.subr.bf16.mxu0 0
    %1910 = vmatpush1.bf16.msra.mxu0 0
    %1911 = vmatprep.subr.bf16.mxu0 0
    %1912 = vmatpush1.bf16.msra.mxu0 0
    %1913 = vmatprep.subr.bf16.mxu0 0
    %1914 = vmatpush1.bf16.msra.mxu0 0
    %1915 = vmatprep.mubr.bf16.mxu0 0
    %1916 = vmatmul.mubr.bf16.gmra.mrb[0].mxu0 %v1759
    %v1917 = vpop.f32.mrb[0].mxu0
    %v1918 = vadd.f32 0.0, %v1917
    %v1919 = vpop.f32.mrb[0].mxu0
    %v1920 = vadd.f32 0.0, %v1919
    %v1921 = vpop.f32.mrb[0].mxu0
    %v1922 = vpop.f32.mrb[0].mxu0
    %1923 = vdwg.mxu0
    %v1924 = vpack.c.bf16 %v1728, %v1728
    %1925 = vmatprep.subr.bf16.mxu0 %v1248
    %1926 = vmatpush1.bf16.msra.mxu0 %v1247
    %1927 = vmatprep.subr.bf16.mxu0 %v1252
    %1928 = vmatpush1.bf16.msra.mxu0 %v1251
    %1929 = vmatprep.subr.bf16.mxu0 %v1256
    %1930 = vmatpush1.bf16.msra.mxu0 %v1255
    %1931 = vmatprep.subr.bf16.mxu0 %v1260
    %1932 = vmatpush1.bf16.msra.mxu0 %v1259
    %1933 = vmatprep.subr.bf16.mxu0 %v1264
    %1934 = vmatpush1.bf16.msra.mxu0 %v1263
    %1935 = vmatprep.subr.bf16.mxu0 %v1268
    %1936 = vmatpush1.bf16.msra.mxu0 %v1267
    %1937 = vmatprep.subr.bf16.mxu0 %v1272
    %1938 = vmatpush1.bf16.msra.mxu0 %v1271
    %1939 = vmatprep.subr.bf16.mxu0 %v1276
    %1940 = vmatpush1.bf16.msra.mxu0 %v1275
    %1941 = vmatprep.subr.bf16.mxu0 0
    %1942 = vmatpush1.bf16.msra.mxu0 0
    %1943 = vmatprep.subr.bf16.mxu0 0
    %1944 = vmatpush1.bf16.msra.mxu0 0
    %1945 = vmatprep.subr.bf16.mxu0 0
    %1946 = vmatpush1.bf16.msra.mxu0 0
    %1947 = vmatprep.subr.bf16.mxu0 0
    %1948 = vmatpush1.bf16.msra.mxu0 0
    %1949 = vmatprep.subr.bf16.mxu0 0
    %1950 = vmatpush1.bf16.msra.mxu0 0
    %1951 = vmatprep.subr.bf16.mxu0 0
    %1952 = vmatpush1.bf16.msra.mxu0 0
    %1953 = vmatprep.subr.bf16.mxu0 0
    %1954 = vmatpush1.bf16.msra.mxu0 0
    %1955 = vmatprep.subr.bf16.mxu0 0
    %1956 = vmatpush1.bf16.msra.mxu0 0
    %1957 = vmatprep.mubr.bf16.mxu0 0
    %1958 = vmatmul.mubr.bf16.gmra.mrb[0].mxu0 %v1924
    %v1959 = vpop.f32.mrb[0].mxu0
    %v1960 = vadd.f32 0.0, %v1959
    %v1961 = vpop.f32.mrb[0].mxu0
    %v1962 = vadd.f32 0.0, %v1961
    %v1963 = vpop.f32.mrb[0].mxu0
    %v1964 = vpop.f32.mrb[0].mxu0
    %1965 = vdwg.mxu0
    %1966 = vmatprep.subr.bf16.mxu0 %v1250
    %1967 = vmatpush1.bf16.msra.mxu0 %v1249
    %1968 = vmatprep.subr.bf16.mxu0 %v1254
    %1969 = vmatpush1.bf16.msra.mxu0 %v1253
    %1970 = vmatprep.subr.bf16.mxu0 %v1258
    %1971 = vmatpush1.bf16.msra.mxu0 %v1257
    %1972 = vmatprep.subr.bf16.mxu0 %v1262
    %1973 = vmatpush1.bf16.msra.mxu0 %v1261
    %1974 = vmatprep.subr.bf16.mxu0 %v1266
    %1975 = vmatpush1.bf16.msra.mxu0 %v1265
    %1976 = vmatprep.subr.bf16.mxu0 %v1270
    %1977 = vmatpush1.bf16.msra.mxu0 %v1269
    %1978 = vmatprep.subr.bf16.mxu0 %v1274
    %1979 = vmatpush1.bf16.msra.mxu0 %v1273
    %1980 = vmatprep.subr.bf16.mxu0 %v1278
    %1981 = vmatpush1.bf16.msra.mxu0 %v1277
    %1982 = vmatprep.subr.bf16.mxu0 0
    %1983 = vmatpush1.bf16.msra.mxu0 0
    %1984 = vmatprep.subr.bf16.mxu0 0
    %1985 = vmatpush1.bf16.msra.mxu0 0
    %1986 = vmatprep.subr.bf16.mxu0 0
    %1987 = vmatpush1.bf16.msra.mxu0 0
    %1988 = vmatprep.subr.bf16.mxu0 0
    %1989 = vmatpush1.bf16.msra.mxu0 0
    %1990 = vmatprep.subr.bf16.mxu0 0
    %1991 = vmatpush1.bf16.msra.mxu0 0
    %1992 = vmatprep.subr.bf16.mxu0 0
    %1993 = vmatpush1.bf16.msra.mxu0 0
    %1994 = vmatprep.subr.bf16.mxu0 0
    %1995 = vmatpush1.bf16.msra.mxu0 0
    %1996 = vmatprep.subr.bf16.mxu0 0
    %1997 = vmatpush1.bf16.msra.mxu0 0
    %1998 = vmatprep.mubr.bf16.mxu0 0
    %1999 = vmatmul.mubr.bf16.gmra.mrb[0].mxu0 %v1924
    %v2000 = vpop.f32.mrb[0].mxu0
    %v2001 = vadd.f32 0.0, %v2000
    %v2002 = vpop.f32.mrb[0].mxu0
    %v2003 = vadd.f32 0.0, %v2002
    %v2004 = vpop.f32.mrb[0].mxu0
    %v2005 = vpop.f32.mrb[0].mxu0
    %2006 = vdwg.mxu0
    %v2007 = vadd.f32 %v1877, %v1960
    %v2008 = vadd.f32 %v1879, %v1962
    %v2009 = vadd.f32 %v1918, %v2001
    %v2010 = vadd.f32 %v1920, %v2003
    %v2011 = vadd.f32 %v2007, %v624
    %v2012 = vadd.f32 %v2008, %v628
    %v2013 = vadd.f32 %v2009, %v632
    %v2014 = vadd.f32 %v2010, %v636
    %v2015 = vsub.f32 0.0, %v2011
    %v2016 = vmul.f32 %v2015, 1.442695
    %v2017 = vpow.pop %v2016
    %v2018 = vadd.f32 %v2017, 1.0
    %v2019 = vrcp.pop %v2018
    %v2020 = vsub.f32 0.0, %v2012
    %v2021 = vmul.f32 %v2020, 1.442695
    %v2022 = vpow.pop %v2021
    %v2023 = vadd.f32 %v2022, 1.0
    %v2024 = vrcp.pop %v2023
    %v2025 = vtanh.pop %v2013
    %v2026 = vsub.f32 0.0, %v2014
    %v2027 = vmul.f32 %v2026, 1.442695
    %v2028 = vpow.pop %v2027
    %v2029 = vadd.f32 %v2028, 1.0
    %v2030 = vrcp.pop %v2029
    %v2031 = vmul.f32 %v2024, %v1726
    %v2032 = vmul.f32 %v2019, %v2025
    %v2033 = vadd.f32 %v2031, %v2032
    %v2034 = vtanh.pop %v2033
    %v2035 = vmul.f32 %v2030, %v2034
    %s2036 = scalar_lea.vmem [#allocation2], 96
    %v2037 = vld [vmem:[%s2036] sm:$0xff]
    %v2038 = vld [vmem:[%s2036 + $0x8] sm:$0xff]
    %v2039 = vld [vmem:[%s2036 + $0x10] sm:$0xff]
    %v2040 = vld [vmem:[%s2036 + $0x18] sm:$0xff]
    %v2041 = vadd.f32 %v1795, %v2037
    %v2042 = vadd.f32 %v1797, %v2038
    %v2043 = vadd.f32 %v1836, %v2039
    %v2044 = vadd.f32 %v1838, %v2040
    %v2045 = vsub.f32 0.0, %v2041
    %v2046 = vmul.f32 %v2045, 1.442695
    %v2047 = vpow.pop %v2046
    %v2048 = vadd.f32 %v2047, 1.0
    %v2049 = vrcp.pop %v2048
    %v2050 = vsub.f32 0.0, %v2042
    %v2051 = vmul.f32 %v2050, 1.442695
    %v2052 = vpow.pop %v2051
    %v2053 = vadd.f32 %v2052, 1.0
    %v2054 = vrcp.pop %v2053
    %v2055 = vtanh.pop %v2043
    %v2056 = vsub.f32 0.0, %v2044
    %v2057 = vmul.f32 %v2056, 1.442695
    %v2058 = vpow.pop %v2057
    %v2059 = vadd.f32 %v2058, 1.0
    %v2060 = vrcp.pop %v2059
    %v2061 = vmul.f32 %v2054, %v1756
    %v2062 = vmul.f32 %v2049, %v2055
    %v2063 = vadd.f32 %v2061, %v2062
    %v2064 = vtanh.pop %v2063
    %v2065 = vmul.f32 %v2060, %v2064
    %v2066 = vpack.c.bf16 %v2065, %v2065
    %2067 = vmatprep.subr.bf16.mxu0 %v860
    %2068 = vmatpush1.bf16.msra.mxu0 %v859
    %2069 = vmatprep.subr.bf16.mxu0 %v868
    %2070 = vmatpush1.bf16.msra.mxu0 %v867
    %2071 = vmatprep.subr.bf16.mxu0 %v876
    %2072 = vmatpush1.bf16.msra.mxu0 %v875
    %2073 = vmatprep.subr.bf16.mxu0 %v884
    %2074 = vmatpush1.bf16.msra.mxu0 %v883
    %2075 = vmatprep.subr.bf16.mxu0 %v892
    %2076 = vmatpush1.bf16.msra.mxu0 %v891
    %2077 = vmatprep.subr.bf16.mxu0 %v900
    %2078 = vmatpush1.bf16.msra.mxu0 %v899
    %2079 = vmatprep.subr.bf16.mxu0 %v908
    %2080 = vmatpush1.bf16.msra.mxu0 %v907
    %2081 = vmatprep.subr.bf16.mxu0 %v916
    %2082 = vmatpush1.bf16.msra.mxu0 %v915
    %2083 = vmatprep.subr.bf16.mxu0 0
    %2084 = vmatpush1.bf16.msra.mxu0 0
    %2085 = vmatprep.subr.bf16.mxu0 0
    %2086 = vmatpush1.bf16.msra.mxu0 0
    %2087 = vmatprep.subr.bf16.mxu0 0
    %2088 = vmatpush1.bf16.msra.mxu0 0
    %2089 = vmatprep.subr.bf16.mxu0 0
    %2090 = vmatpush1.bf16.msra.mxu0 0
    %2091 = vmatprep.subr.bf16.mxu0 0
    %2092 = vmatpush1.bf16.msra.mxu0 0
    %2093 = vmatprep.subr.bf16.mxu0 0
    %2094 = vmatpush1.bf16.msra.mxu0 0
    %2095 = vmatprep.subr.bf16.mxu0 0
    %2096 = vmatpush1.bf16.msra.mxu0 0
    %2097 = vmatprep.subr.bf16.mxu0 0
    %2098 = vmatpush1.bf16.msra.mxu0 0
    %2099 = vmatprep.mubr.bf16.mxu0 0
    %2100 = vmatmul.mubr.bf16.gmra.mrb[0].mxu0 %v2066
    %v2101 = vpop.f32.mrb[0].mxu0
    %v2102 = vadd.f32 0.0, %v2101
    %v2103 = vpop.f32.mrb[0].mxu0
    %v2104 = vadd.f32 0.0, %v2103
    %v2105 = vpop.f32.mrb[0].mxu0
    %v2106 = vpop.f32.mrb[0].mxu0
    %2107 = vdwg.mxu0
    %2108 = vmatprep.subr.bf16.mxu0 %v862
    %2109 = vmatpush1.bf16.msra.mxu0 %v861
    %2110 = vmatprep.subr.bf16.mxu0 %v870
    %2111 = vmatpush1.bf16.msra.mxu0 %v869
    %2112 = vmatprep.subr.bf16.mxu0 %v878
    %2113 = vmatpush1.bf16.msra.mxu0 %v877
    %2114 = vmatprep.subr.bf16.mxu0 %v886
    %2115 = vmatpush1.bf16.msra.mxu0 %v885
    %2116 = vmatprep.subr.bf16.mxu0 %v894
    %2117 = vmatpush1.bf16.msra.mxu0 %v893
    %2118 = vmatprep.subr.bf16.mxu0 %v902
    %2119 = vmatpush1.bf16.msra.mxu0 %v901
    %2120 = vmatprep.subr.bf16.mxu0 %v910
    %2121 = vmatpush1.bf16.msra.mxu0 %v909
    %2122 = vmatprep.subr.bf16.mxu0 %v918
    %2123 = vmatpush1.bf16.msra.mxu0 %v917
    %2124 = vmatprep.subr.bf16.mxu0 0
    %2125 = vmatpush1.bf16.msra.mxu0 0
    %2126 = vmatprep.subr.bf16.mxu0 0
    %2127 = vmatpush1.bf16.msra.mxu0 0
    %2128 = vmatprep.subr.bf16.mxu0 0
    %2129 = vmatpush1.bf16.msra.mxu0 0
    %2130 = vmatprep.subr.bf16.mxu0 0
    %2131 = vmatpush1.bf16.msra.mxu0 0
    %2132 = vmatprep.subr.bf16.mxu0 0
    %2133 = vmatpush1.bf16.msra.mxu0 0
    %2134 = vmatprep.subr.bf16.mxu0 0
    %2135 = vmatpush1.bf16.msra.mxu0 0
    %2136 = vmatprep.subr.bf16.mxu0 0
    %2137 = vmatpush1.bf16.msra.mxu0 0
    %2138 = vmatprep.subr.bf16.mxu0 0
    %2139 = vmatpush1.bf16.msra.mxu0 0
    %2140 = vmatprep.mubr.bf16.mxu0 0
    %2141 = vmatmul.mubr.bf16.gmra.mrb[0].mxu0 %v2066
    %v2142 = vpop.f32.mrb[0].mxu0
    %v2143 = vadd.f32 0.0, %v2142
    %v2144 = vpop.f32.mrb[0].mxu0
    %v2145 = vadd.f32 0.0, %v2144
    %v2146 = vpop.f32.mrb[0].mxu0
    %v2147 = vpop.f32.mrb[0].mxu0
    %2148 = vdwg.mxu0
    %2149 = vmatprep.subr.bf16.mxu0 %v864
    %2150 = vmatpush1.bf16.msra.mxu0 %v863
    %2151 = vmatprep.subr.bf16.mxu0 %v872
    %2152 = vmatpush1.bf16.msra.mxu0 %v871
    %2153 = vmatprep.subr.bf16.mxu0 %v880
    %2154 = vmatpush1.bf16.msra.mxu0 %v879
    %2155 = vmatprep.subr.bf16.mxu0 %v888
    %2156 = vmatpush1.bf16.msra.mxu0 %v887
    %2157 = vmatprep.subr.bf16.mxu0 %v896
    %2158 = vmatpush1.bf16.msra.mxu0 %v895
    %2159 = vmatprep.subr.bf16.mxu0 %v904
    %2160 = vmatpush1.bf16.msra.mxu0 %v903
    %2161 = vmatprep.subr.bf16.mxu0 %v912
    %2162 = vmatpush1.bf16.msra.mxu0 %v911
    %2163 = vmatprep.subr.bf16.mxu0 %v920
    %2164 = vmatpush1.bf16.msra.mxu0 %v919
    %2165 = vmatprep.subr.bf16.mxu0 0
    %2166 = vmatpush1.bf16.msra.mxu0 0
    %2167 = vmatprep.subr.bf16.mxu0 0
    %2168 = vmatpush1.bf16.msra.mxu0 0
    %2169 = vmatprep.subr.bf16.mxu0 0
    %2170 = vmatpush1.bf16.msra.mxu0 0
    %2171 = vmatprep.subr.bf16.mxu0 0
    %2172 = vmatpush1.bf16.msra.mxu0 0
    %2173 = vmatprep.subr.bf16.mxu0 0
    %2174 = vmatpush1.bf16.msra.mxu0 0
    %2175 = vmatprep.subr.bf16.mxu0 0
    %2176 = vmatpush1.bf16.msra.mxu0 0
    %2177 = vmatprep.subr.bf16.mxu0 0
    %2178 = vmatpush1.bf16.msra.mxu0 0
    %2179 = vmatprep.subr.bf16.mxu0 0
    %2180 = vmatpush1.bf16.msra.mxu0 0
    %2181 = vmatprep.mubr.bf16.mxu0 0
    %2182 = vmatmul.mubr.bf16.gmra.mrb[0].mxu0 %v2066
    %v2183 = vpop.f32.mrb[0].mxu0
    %v2184 = vadd.f32 0.0, %v2183
    %v2185 = vpop.f32.mrb[0].mxu0
    %v2186 = vadd.f32 0.0, %v2185
    %v2187 = vpop.f32.mrb[0].mxu0
    %v2188 = vpop.f32.mrb[0].mxu0
    %2189 = vdwg.mxu0
    %2190 = vmatprep.subr.bf16.mxu0 %v866
    %2191 = vmatpush1.bf16.msra.mxu0 %v865
    %2192 = vmatprep.subr.bf16.mxu0 %v874
    %2193 = vmatpush1.bf16.msra.mxu0 %v873
    %2194 = vmatprep.subr.bf16.mxu0 %v882
    %2195 = vmatpush1.bf16.msra.mxu0 %v881
    %2196 = vmatprep.subr.bf16.mxu0 %v890
    %2197 = vmatpush1.bf16.msra.mxu0 %v889
    %2198 = vmatprep.subr.bf16.mxu0 %v898
    %2199 = vmatpush1.bf16.msra.mxu0 %v897
    %2200 = vmatprep.subr.bf16.mxu0 %v906
    %2201 = vmatpush1.bf16.msra.mxu0 %v905
    %2202 = vmatprep.subr.bf16.mxu0 %v914
    %2203 = vmatpush1.bf16.msra.mxu0 %v913
    %2204 = vmatprep.subr.bf16.mxu0 %v922
    %2205 = vmatpush1.bf16.msra.mxu0 %v921
    %2206 = vmatprep.subr.bf16.mxu0 0
    %2207 = vmatpush1.bf16.msra.mxu0 0
    %2208 = vmatprep.subr.bf16.mxu0 0
    %2209 = vmatpush1.bf16.msra.mxu0 0
    %2210 = vmatprep.subr.bf16.mxu0 0
    %2211 = vmatpush1.bf16.msra.mxu0 0
    %2212 = vmatprep.subr.bf16.mxu0 0
    %2213 = vmatpush1.bf16.msra.mxu0 0
    %2214 = vmatprep.subr.bf16.mxu0 0
    %2215 = vmatpush1.bf16.msra.mxu0 0
    %2216 = vmatprep.subr.bf16.mxu0 0
    %2217 = vmatpush1.bf16.msra.mxu0 0
    %2218 = vmatprep.subr.bf16.mxu0 0
    %2219 = vmatpush1.bf16.msra.mxu0 0
    %2220 = vmatprep.subr.bf16.mxu0 0
    %2221 = vmatpush1.bf16.msra.mxu0 0
    %2222 = vmatprep.mubr.bf16.mxu0 0
    %2223 = vmatmul.mubr.bf16.gmra.mrb[0].mxu0 %v2066
    %v2224 = vpop.f32.mrb[0].mxu0
    %v2225 = vadd.f32 0.0, %v2224
    %v2226 = vpop.f32.mrb[0].mxu0
    %v2227 = vadd.f32 0.0, %v2226
    %v2228 = vpop.f32.mrb[0].mxu0
    %v2229 = vpop.f32.mrb[0].mxu0
    %2230 = vdwg.mxu0
    %v2231 = vpack.c.bf16 %v2035, %v2035
    %2232 = vmatprep.subr.bf16.mxu0 %v1248
    %2233 = vmatpush1.bf16.msra.mxu0 %v1247
    %2234 = vmatprep.subr.bf16.mxu0 %v1252
    %2235 = vmatpush1.bf16.msra.mxu0 %v1251
    %2236 = vmatprep.subr.bf16.mxu0 %v1256
    %2237 = vmatpush1.bf16.msra.mxu0 %v1255
    %2238 = vmatprep.subr.bf16.mxu0 %v1260
    %2239 = vmatpush1.bf16.msra.mxu0 %v1259
    %2240 = vmatprep.subr.bf16.mxu0 %v1264
    %2241 = vmatpush1.bf16.msra.mxu0 %v1263
    %2242 = vmatprep.subr.bf16.mxu0 %v1268
    %2243 = vmatpush1.bf16.msra.mxu0 %v1267
    %2244 = vmatprep.subr.bf16.mxu0 %v1272
    %2245 = vmatpush1.bf16.msra.mxu0 %v1271
    %2246 = vmatprep.subr.bf16.mxu0 %v1276
    %2247 = vmatpush1.bf16.msra.mxu0 %v1275
    %2248 = vmatprep.subr.bf16.mxu0 0
    %2249 = vmatpush1.bf16.msra.mxu0 0
    %2250 = vmatprep.subr.bf16.mxu0 0
    %2251 = vmatpush1.bf16.msra.mxu0 0
    %2252 = vmatprep.subr.bf16.mxu0 0
    %2253 = vmatpush1.bf16.msra.mxu0 0
    %2254 = vmatprep.subr.bf16.mxu0 0
    %2255 = vmatpush1.bf16.msra.mxu0 0
    %2256 = vmatprep.subr.bf16.mxu0 0
    %2257 = vmatpush1.bf16.msra.mxu0 0
    %2258 = vmatprep.subr.bf16.mxu0 0
    %2259 = vmatpush1.bf16.msra.mxu0 0
    %2260 = vmatprep.subr.bf16.mxu0 0
    %2261 = vmatpush1.bf16.msra.mxu0 0
    %2262 = vmatprep.subr.bf16.mxu0 0
    %2263 = vmatpush1.bf16.msra.mxu0 0
    %2264 = vmatprep.mubr.bf16.mxu0 0
    %2265 = vmatmul.mubr.bf16.gmra.mrb[0].mxu0 %v2231
    %v2266 = vpop.f32.mrb[0].mxu0
    %v2267 = vadd.f32 0.0, %v2266
    %v2268 = vpop.f32.mrb[0].mxu0
    %v2269 = vadd.f32 0.0, %v2268
    %v2270 = vpop.f32.mrb[0].mxu0
    %v2271 = vpop.f32.mrb[0].mxu0
    %2272 = vdwg.mxu0
    %2273 = vmatprep.subr.bf16.mxu0 %v1250
    %2274 = vmatpush1.bf16.msra.mxu0 %v1249
    %2275 = vmatprep.subr.bf16.mxu0 %v1254
    %2276 = vmatpush1.bf16.msra.mxu0 %v1253
    %2277 = vmatprep.subr.bf16.mxu0 %v1258
    %2278 = vmatpush1.bf16.msra.mxu0 %v1257
    %2279 = vmatprep.subr.bf16.mxu0 %v1262
    %2280 = vmatpush1.bf16.msra.mxu0 %v1261
    %2281 = vmatprep.subr.bf16.mxu0 %v1266
    %2282 = vmatpush1.bf16.msra.mxu0 %v1265
    %2283 = vmatprep.subr.bf16.mxu0 %v1270
    %2284 = vmatpush1.bf16.msra.mxu0 %v1269
    %2285 = vmatprep.subr.bf16.mxu0 %v1274
    %2286 = vmatpush1.bf16.msra.mxu0 %v1273
    %2287 = vmatprep.subr.bf16.mxu0 %v1278
    %2288 = vmatpush1.bf16.msra.mxu0 %v1277
    %2289 = vmatprep.subr.bf16.mxu0 0
    %2290 = vmatpush1.bf16.msra.mxu0 0
    %2291 = vmatprep.subr.bf16.mxu0 0
    %2292 = vmatpush1.bf16.msra.mxu0 0
    %2293 = vmatprep.subr.bf16.mxu0 0
    %2294 = vmatpush1.bf16.msra.mxu0 0
    %2295 = vmatprep.subr.bf16.mxu0 0
    %2296 = vmatpush1.bf16.msra.mxu0 0
    %2297 = vmatprep.subr.bf16.mxu0 0
    %2298 = vmatpush1.bf16.msra.mxu0 0
    %2299 = vmatprep.subr.bf16.mxu0 0
    %2300 = vmatpush1.bf16.msra.mxu0 0
    %2301 = vmatprep.subr.bf16.mxu0 0
    %2302 = vmatpush1.bf16.msra.mxu0 0
    %2303 = vmatprep.subr.bf16.mxu0 0
    %2304 = vmatpush1.bf16.msra.mxu0 0
    %2305 = vmatprep.mubr.bf16.mxu0 0
    %2306 = vmatmul.mubr.bf16.gmra.mrb[0].mxu0 %v2231
    %v2307 = vpop.f32.mrb[0].mxu0
    %v2308 = vadd.f32 0.0, %v2307
    %v2309 = vpop.f32.mrb[0].mxu0
    %v2310 = vadd.f32 0.0, %v2309
    %v2311 = vpop.f32.mrb[0].mxu0
    %v2312 = vpop.f32.mrb[0].mxu0
    %2313 = vdwg.mxu0
    %v2314 = vadd.f32 %v2184, %v2267
    %v2315 = vadd.f32 %v2186, %v2269
    %v2316 = vadd.f32 %v2225, %v2308
    %v2317 = vadd.f32 %v2227, %v2310
    %v2318 = vadd.f32 %v2314, %v624
    %v2319 = vadd.f32 %v2315, %v628
    %v2320 = vadd.f32 %v2316, %v632
    %v2321 = vadd.f32 %v2317, %v636
    %v2322 = vsub.f32 0.0, %v2318
    %v2323 = vmul.f32 %v2322, 1.442695
    %v2324 = vpow.pop %v2323
    %v2325 = vadd.f32 %v2324, 1.0
    %v2326 = vrcp.pop %v2325
    %v2327 = vsub.f32 0.0, %v2319
    %v2328 = vmul.f32 %v2327, 1.442695
    %v2329 = vpow.pop %v2328
    %v2330 = vadd.f32 %v2329, 1.0
    %v2331 = vrcp.pop %v2330
    %v2332 = vtanh.pop %v2320
    %v2333 = vsub.f32 0.0, %v2321
    %v2334 = vmul.f32 %v2333, 1.442695
    %v2335 = vpow.pop %v2334
    %v2336 = vadd.f32 %v2335, 1.0
    %v2337 = vrcp.pop %v2336
    %v2338 = vmul.f32 %v2331, %v2033
    %v2339 = vmul.f32 %v2326, %v2332
    %v2340 = vadd.f32 %v2338, %v2339
    %v2341 = vtanh.pop %v2340
    %v2342 = vmul.f32 %v2337, %v2341
    %s2343 = scalar_lea.vmem [#allocation2], 128
    %v2344 = vld [vmem:[%s2343] sm:$0xff]
    %v2345 = vld [vmem:[%s2343 + $0x8] sm:$0xff]
    %v2346 = vld [vmem:[%s2343 + $0x10] sm:$0xff]
    %v2347 = vld [vmem:[%s2343 + $0x18] sm:$0xff]
    %v2348 = vadd.f32 %v2102, %v2344
    %v2349 = vadd.f32 %v2104, %v2345
    %v2350 = vadd.f32 %v2143, %v2346
    %v2351 = vadd.f32 %v2145, %v2347
    %v2352 = vsub.f32 0.0, %v2348
    %v2353 = vmul.f32 %v2352, 1.442695
    %v2354 = vpow.pop %v2353
    %v2355 = vadd.f32 %v2354, 1.0
    %v2356 = vrcp.pop %v2355
    %v2357 = vsub.f32 0.0, %v2349
    %v2358 = vmul.f32 %v2357, 1.442695
    %v2359 = vpow.pop %v2358
    %v2360 = vadd.f32 %v2359, 1.0
    %v2361 = vrcp.pop %v2360
    %v2362 = vtanh.pop %v2350
    %v2363 = vsub.f32 0.0, %v2351
    %v2364 = vmul.f32 %v2363, 1.442695
    %v2365 = vpow.pop %v2364
    %v2366 = vadd.f32 %v2365, 1.0
    %v2367 = vrcp.pop %v2366
    %v2368 = vmul.f32 %v2361, %v2063
    %v2369 = vmul.f32 %v2356, %v2362
    %v2370 = vadd.f32 %v2368, %v2369
    %v2371 = vtanh.pop %v2370
    %v2372 = vmul.f32 %v2367, %v2371
    %v2373 = vpack.c.bf16 %v2372, %v2372
    %2374 = vmatprep.subr.bf16.mxu0 %v860
    %2375 = vmatpush1.bf16.msra.mxu0 %v859
    %2376 = vmatprep.subr.bf16.mxu0 %v868
    %2377 = vmatpush1.bf16.msra.mxu0 %v867
    %2378 = vmatprep.subr.bf16.mxu0 %v876
    %2379 = vmatpush1.bf16.msra.mxu0 %v875
    %2380 = vmatprep.subr.bf16.mxu0 %v884
    %2381 = vmatpush1.bf16.msra.mxu0 %v883
    %2382 = vmatprep.subr.bf16.mxu0 %v892
    %2383 = vmatpush1.bf16.msra.mxu0 %v891
    %2384 = vmatprep.subr.bf16.mxu0 %v900
    %2385 = vmatpush1.bf16.msra.mxu0 %v899
    %2386 = vmatprep.subr.bf16.mxu0 %v908
    %2387 = vmatpush1.bf16.msra.mxu0 %v907
    %2388 = vmatprep.subr.bf16.mxu0 %v916
    %2389 = vmatpush1.bf16.msra.mxu0 %v915
    %2390 = vmatprep.subr.bf16.mxu0 0
    %2391 = vmatpush1.bf16.msra.mxu0 0
    %2392 = vmatprep.subr.bf16.mxu0 0
    %2393 = vmatpush1.bf16.msra.mxu0 0
    %2394 = vmatprep.subr.bf16.mxu0 0
    %2395 = vmatpush1.bf16.msra.mxu0 0
    %2396 = vmatprep.subr.bf16.mxu0 0
    %2397 = vmatpush1.bf16.msra.mxu0 0
    %2398 = vmatprep.subr.bf16.mxu0 0
    %2399 = vmatpush1.bf16.msra.mxu0 0
    %2400 = vmatprep.subr.bf16.mxu0 0
    %2401 = vmatpush1.bf16.msra.mxu0 0
    %2402 = vmatprep.subr.bf16.mxu0 0
    %2403 = vmatpush1.bf16.msra.mxu0 0
    %2404 = vmatprep.subr.bf16.mxu0 0
    %2405 = vmatpush1.bf16.msra.mxu0 0
    %2406 = vmatprep.mubr.bf16.mxu0 0
    %2407 = vmatmul.mubr.bf16.gmra.mrb[0].mxu0 %v2373
    %v2408 = vpop.f32.mrb[0].mxu0
    %v2409 = vadd.f32 0.0, %v2408
    %v2410 = vpop.f32.mrb[0].mxu0
    %v2411 = vadd.f32 0.0, %v2410
    %v2412 = vpop.f32.mrb[0].mxu0
    %v2413 = vpop.f32.mrb[0].mxu0
    %2414 = vdwg.mxu0
    %2415 = vmatprep.subr.bf16.mxu0 %v862
    %2416 = vmatpush1.bf16.msra.mxu0 %v861
    %2417 = vmatprep.subr.bf16.mxu0 %v870
    %2418 = vmatpush1.bf16.msra.mxu0 %v869
    %2419 = vmatprep.subr.bf16.mxu0 %v878
    %2420 = vmatpush1.bf16.msra.mxu0 %v877
    %2421 = vmatprep.subr.bf16.mxu0 %v886
    %2422 = vmatpush1.bf16.msra.mxu0 %v885
    %2423 = vmatprep.subr.bf16.mxu0 %v894
    %2424 = vmatpush1.bf16.msra.mxu0 %v893
    %2425 = vmatprep.subr.bf16.mxu0 %v902
    %2426 = vmatpush1.bf16.msra.mxu0 %v901
    %2427 = vmatprep.subr.bf16.mxu0 %v910
    %2428 = vmatpush1.bf16.msra.mxu0 %v909
    %2429 = vmatprep.subr.bf16.mxu0 %v918
    %2430 = vmatpush1.bf16.msra.mxu0 %v917
    %2431 = vmatprep.subr.bf16.mxu0 0
    %2432 = vmatpush1.bf16.msra.mxu0 0
    %2433 = vmatprep.subr.bf16.mxu0 0
    %2434 = vmatpush1.bf16.msra.mxu0 0
    %2435 = vmatprep.subr.bf16.mxu0 0
    %2436 = vmatpush1.bf16.msra.mxu0 0
    %2437 = vmatprep.subr.bf16.mxu0 0
    %2438 = vmatpush1.bf16.msra.mxu0 0
    %2439 = vmatprep.subr.bf16.mxu0 0
    %2440 = vmatpush1.bf16.msra.mxu0 0
    %2441 = vmatprep.subr.bf16.mxu0 0
    %2442 = vmatpush1.bf16.msra.mxu0 0
    %2443 = vmatprep.subr.bf16.mxu0 0
    %2444 = vmatpush1.bf16.msra.mxu0 0
    %2445 = vmatprep.subr.bf16.mxu0 0
    %2446 = vmatpush1.bf16.msra.mxu0 0
    %2447 = vmatprep.mubr.bf16.mxu0 0
    %2448 = vmatmul.mubr.bf16.gmra.mrb[0].mxu0 %v2373
    %v2449 = vpop.f32.mrb[0].mxu0
    %v2450 = vadd.f32 0.0, %v2449
    %v2451 = vpop.f32.mrb[0].mxu0
    %v2452 = vadd.f32 0.0, %v2451
    %v2453 = vpop.f32.mrb[0].mxu0
    %v2454 = vpop.f32.mrb[0].mxu0
    %2455 = vdwg.mxu0
    %2456 = vmatprep.subr.bf16.mxu0 %v864
    %2457 = vmatpush1.bf16.msra.mxu0 %v863
    %2458 = vmatprep.subr.bf16.mxu0 %v872
    %2459 = vmatpush1.bf16.msra.mxu0 %v871
    %2460 = vmatprep.subr.bf16.mxu0 %v880
    %2461 = vmatpush1.bf16.msra.mxu0 %v879
    %2462 = vmatprep.subr.bf16.mxu0 %v888
    %2463 = vmatpush1.bf16.msra.mxu0 %v887
    %2464 = vmatprep.subr.bf16.mxu0 %v896
    %2465 = vmatpush1.bf16.msra.mxu0 %v895
    %2466 = vmatprep.subr.bf16.mxu0 %v904
    %2467 = vmatpush1.bf16.msra.mxu0 %v903
    %2468 = vmatprep.subr.bf16.mxu0 %v912
    %2469 = vmatpush1.bf16.msra.mxu0 %v911
    %2470 = vmatprep.subr.bf16.mxu0 %v920
    %2471 = vmatpush1.bf16.msra.mxu0 %v919
    %2472 = vmatprep.subr.bf16.mxu0 0
    %2473 = vmatpush1.bf16.msra.mxu0 0
    %2474 = vmatprep.subr.bf16.mxu0 0
    %2475 = vmatpush1.bf16.msra.mxu0 0
    %2476 = vmatprep.subr.bf16.mxu0 0
    %2477 = vmatpush1.bf16.msra.mxu0 0
    %2478 = vmatprep.subr.bf16.mxu0 0
    %2479 = vmatpush1.bf16.msra.mxu0 0
    %2480 = vmatprep.subr.bf16.mxu0 0
    %2481 = vmatpush1.bf16.msra.mxu0 0
    %2482 = vmatprep.subr.bf16.mxu0 0
    %2483 = vmatpush1.bf16.msra.mxu0 0
    %2484 = vmatprep.subr.bf16.mxu0 0
    %2485 = vmatpush1.bf16.msra.mxu0 0
    %2486 = vmatprep.subr.bf16.mxu0 0
    %2487 = vmatpush1.bf16.msra.mxu0 0
    %2488 = vmatprep.mubr.bf16.mxu0 0
    %2489 = vmatmul.mubr.bf16.gmra.mrb[0].mxu0 %v2373
    %v2490 = vpop.f32.mrb[0].mxu0
    %v2491 = vadd.f32 0.0, %v2490
    %v2492 = vpop.f32.mrb[0].mxu0
    %v2493 = vadd.f32 0.0, %v2492
    %v2494 = vpop.f32.mrb[0].mxu0
    %v2495 = vpop.f32.mrb[0].mxu0
    %2496 = vdwg.mxu0
    %2497 = vmatprep.subr.bf16.mxu0 %v866
    %2498 = vmatpush1.bf16.msra.mxu0 %v865
    %2499 = vmatprep.subr.bf16.mxu0 %v874
    %2500 = vmatpush1.bf16.msra.mxu0 %v873
    %2501 = vmatprep.subr.bf16.mxu0 %v882
    %2502 = vmatpush1.bf16.msra.mxu0 %v881
    %2503 = vmatprep.subr.bf16.mxu0 %v890
    %2504 = vmatpush1.bf16.msra.mxu0 %v889
    %2505 = vmatprep.subr.bf16.mxu0 %v898
    %2506 = vmatpush1.bf16.msra.mxu0 %v897
    %2507 = vmatprep.subr.bf16.mxu0 %v906
    %2508 = vmatpush1.bf16.msra.mxu0 %v905
    %2509 = vmatprep.subr.bf16.mxu0 %v914
    %2510 = vmatpush1.bf16.msra.mxu0 %v913
    %2511 = vmatprep.subr.bf16.mxu0 %v922
    %2512 = vmatpush1.bf16.msra.mxu0 %v921
    %2513 = vmatprep.subr.bf16.mxu0 0
    %2514 = vmatpush1.bf16.msra.mxu0 0
    %2515 = vmatprep.subr.bf16.mxu0 0
    %2516 = vmatpush1.bf16.msra.mxu0 0
    %2517 = vmatprep.subr.bf16.mxu0 0
    %2518 = vmatpush1.bf16.msra.mxu0 0
    %2519 = vmatprep.subr.bf16.mxu0 0
    %2520 = vmatpush1.bf16.msra.mxu0 0
    %2521 = vmatprep.subr.bf16.mxu0 0
    %2522 = vmatpush1.bf16.msra.mxu0 0
    %2523 = vmatprep.subr.bf16.mxu0 0
    %2524 = vmatpush1.bf16.msra.mxu0 0
    %2525 = vmatprep.subr.bf16.mxu0 0
    %2526 = vmatpush1.bf16.msra.mxu0 0
    %2527 = vmatprep.subr.bf16.mxu0 0
    %2528 = vmatpush1.bf16.msra.mxu0 0
    %2529 = vmatprep.mubr.bf16.mxu0 0
    %2530 = vmatmul.mubr.bf16.gmra.mrb[0].mxu0 %v2373
    %v2531 = vpop.f32.mrb[0].mxu0
    %v2532 = vadd.f32 0.0, %v2531
    %v2533 = vpop.f32.mrb[0].mxu0
    %v2534 = vadd.f32 0.0, %v2533
    %v2535 = vpop.f32.mrb[0].mxu0
    %v2536 = vpop.f32.mrb[0].mxu0
    %2537 = vdwg.mxu0
    %v2538 = vpack.c.bf16 %v2342, %v2342
    %2539 = vmatprep.subr.bf16.mxu0 %v1248
    %2540 = vmatpush1.bf16.msra.mxu0 %v1247
    %2541 = vmatprep.subr.bf16.mxu0 %v1252
    %2542 = vmatpush1.bf16.msra.mxu0 %v1251
    %2543 = vmatprep.subr.bf16.mxu0 %v1256
    %2544 = vmatpush1.bf16.msra.mxu0 %v1255
    %2545 = vmatprep.subr.bf16.mxu0 %v1260
    %2546 = vmatpush1.bf16.msra.mxu0 %v1259
    %2547 = vmatprep.subr.bf16.mxu0 %v1264
    %2548 = vmatpush1.bf16.msra.mxu0 %v1263
    %2549 = vmatprep.subr.bf16.mxu0 %v1268
    %2550 = vmatpush1.bf16.msra.mxu0 %v1267
    %2551 = vmatprep.subr.bf16.mxu0 %v1272
    %2552 = vmatpush1.bf16.msra.mxu0 %v1271
    %2553 = vmatprep.subr.bf16.mxu0 %v1276
    %2554 = vmatpush1.bf16.msra.mxu0 %v1275
    %2555 = vmatprep.subr.bf16.mxu0 0
    %2556 = vmatpush1.bf16.msra.mxu0 0
    %2557 = vmatprep.subr.bf16.mxu0 0
    %2558 = vmatpush1.bf16.msra.mxu0 0
    %2559 = vmatprep.subr.bf16.mxu0 0
    %2560 = vmatpush1.bf16.msra.mxu0 0
    %2561 = vmatprep.subr.bf16.mxu0 0
    %2562 = vmatpush1.bf16.msra.mxu0 0
    %2563 = vmatprep.subr.bf16.mxu0 0
    %2564 = vmatpush1.bf16.msra.mxu0 0
    %2565 = vmatprep.subr.bf16.mxu0 0
    %2566 = vmatpush1.bf16.msra.mxu0 0
    %2567 = vmatprep.subr.bf16.mxu0 0
    %2568 = vmatpush1.bf16.msra.mxu0 0
    %2569 = vmatprep.subr.bf16.mxu0 0
    %2570 = vmatpush1.bf16.msra.mxu0 0
    %2571 = vmatprep.mubr.bf16.mxu0 0
    %2572 = vmatmul.mubr.bf16.gmra.mrb[0].mxu0 %v2538
    %v2573 = vpop.f32.mrb[0].mxu0
    %v2574 = vadd.f32 0.0, %v2573
    %v2575 = vpop.f32.mrb[0].mxu0
    %v2576 = vadd.f32 0.0, %v2575
    %v2577 = vpop.f32.mrb[0].mxu0
    %v2578 = vpop.f32.mrb[0].mxu0
    %2579 = vdwg.mxu0
    %2580 = vmatprep.subr.bf16.mxu0 %v1250
    %2581 = vmatpush1.bf16.msra.mxu0 %v1249
    %2582 = vmatprep.subr.bf16.mxu0 %v1254
    %2583 = vmatpush1.bf16.msra.mxu0 %v1253
    %2584 = vmatprep.subr.bf16.mxu0 %v1258
    %2585 = vmatpush1.bf16.msra.mxu0 %v1257
    %2586 = vmatprep.subr.bf16.mxu0 %v1262
    %2587 = vmatpush1.bf16.msra.mxu0 %v1261
    %2588 = vmatprep.subr.bf16.mxu0 %v1266
    %2589 = vmatpush1.bf16.msra.mxu0 %v1265
    %2590 = vmatprep.subr.bf16.mxu0 %v1270
    %2591 = vmatpush1.bf16.msra.mxu0 %v1269
    %2592 = vmatprep.subr.bf16.mxu0 %v1274
    %2593 = vmatpush1.bf16.msra.mxu0 %v1273
    %2594 = vmatprep.subr.bf16.mxu0 %v1278
    %2595 = vmatpush1.bf16.msra.mxu0 %v1277
    %2596 = vmatprep.subr.bf16.mxu0 0
    %2597 = vmatpush1.bf16.msra.mxu0 0
    %2598 = vmatprep.subr.bf16.mxu0 0
    %2599 = vmatpush1.bf16.msra.mxu0 0
    %2600 = vmatprep.subr.bf16.mxu0 0
    %2601 = vmatpush1.bf16.msra.mxu0 0
    %2602 = vmatprep.subr.bf16.mxu0 0
    %2603 = vmatpush1.bf16.msra.mxu0 0
    %2604 = vmatprep.subr.bf16.mxu0 0
    %2605 = vmatpush1.bf16.msra.mxu0 0
    %2606 = vmatprep.subr.bf16.mxu0 0
    %2607 = vmatpush1.bf16.msra.mxu0 0
    %2608 = vmatprep.subr.bf16.mxu0 0
    %2609 = vmatpush1.bf16.msra.mxu0 0
    %2610 = vmatprep.subr.bf16.mxu0 0
    %2611 = vmatpush1.bf16.msra.mxu0 0
    %2612 = vmatprep.mubr.bf16.mxu0 0
    %2613 = vmatmul.mubr.bf16.gmra.mrb[0].mxu0 %v2538
    %v2614 = vpop.f32.mrb[0].mxu0
    %v2615 = vadd.f32 0.0, %v2614
    %v2616 = vpop.f32.mrb[0].mxu0
    %v2617 = vadd.f32 0.0, %v2616
    %v2618 = vpop.f32.mrb[0].mxu0
    %v2619 = vpop.f32.mrb[0].mxu0
    %2620 = vdwg.mxu0
    %v2621 = vadd.f32 %v2491, %v2574
    %v2622 = vadd.f32 %v2493, %v2576
    %v2623 = vadd.f32 %v2532, %v2615
    %v2624 = vadd.f32 %v2534, %v2617
    %v2625 = vadd.f32 %v2621, %v624
    %v2626 = vadd.f32 %v2622, %v628
    %v2627 = vadd.f32 %v2623, %v632
    %v2628 = vadd.f32 %v2624, %v636
    %v2629 = vsub.f32 0.0, %v2625
    %v2630 = vmul.f32 %v2629, 1.442695
    %v2631 = vpow.pop %v2630
    %v2632 = vadd.f32 %v2631, 1.0
    %v2633 = vrcp.pop %v2632
    %v2634 = vsub.f32 0.0, %v2626
    %v2635 = vmul.f32 %v2634, 1.442695
    %v2636 = vpow.pop %v2635
    %v2637 = vadd.f32 %v2636, 1.0
    %v2638 = vrcp.pop %v2637
    %v2639 = vtanh.pop %v2627
    %v2640 = vsub.f32 0.0, %v2628
    %v2641 = vmul.f32 %v2640, 1.442695
    %v2642 = vpow.pop %v2641
    %v2643 = vadd.f32 %v2642, 1.0
    %v2644 = vrcp.pop %v2643
    %v2645 = vmul.f32 %v2638, %v2340
    %v2646 = vmul.f32 %v2633, %v2639
    %v2647 = vadd.f32 %v2645, %v2646
    %v2648 = vtanh.pop %v2647
    %v2649 = vmul.f32 %v2644, %v2648
    %s2650 = scalar_lea.vmem [#allocation2], 160
    %v2651 = vld [vmem:[%s2650] sm:$0xff]
    %v2652 = vld [vmem:[%s2650 + $0x8] sm:$0xff]
    %v2653 = vld [vmem:[%s2650 + $0x10] sm:$0xff]
    %v2654 = vld [vmem:[%s2650 + $0x18] sm:$0xff]
    %v2655 = vadd.f32 %v2409, %v2651
    %v2656 = vadd.f32 %v2411, %v2652
    %v2657 = vadd.f32 %v2450, %v2653
    %v2658 = vadd.f32 %v2452, %v2654
    %v2659 = vsub.f32 0.0, %v2655
    %v2660 = vmul.f32 %v2659, 1.442695
    %v2661 = vpow.pop %v2660
    %v2662 = vadd.f32 %v2661, 1.0
    %v2663 = vrcp.pop %v2662
    %v2664 = vsub.f32 0.0, %v2656
    %v2665 = vmul.f32 %v2664, 1.442695
    %v2666 = vpow.pop %v2665
    %v2667 = vadd.f32 %v2666, 1.0
    %v2668 = vrcp.pop %v2667
    %v2669 = vtanh.pop %v2657
    %v2670 = vsub.f32 0.0, %v2658
    %v2671 = vmul.f32 %v2670, 1.442695
    %v2672 = vpow.pop %v2671
    %v2673 = vadd.f32 %v2672, 1.0
    %v2674 = vrcp.pop %v2673
    %v2675 = vmul.f32 %v2668, %v2370
    %v2676 = vmul.f32 %v2663, %v2669
    %v2677 = vadd.f32 %v2675, %v2676
    %v2678 = vtanh.pop %v2677
    %v2679 = vmul.f32 %v2674, %v2678
    %v2680 = vpack.c.bf16 %v2679, %v2679
    %2681 = vmatprep.subr.bf16.mxu0 %v860
    %2682 = vmatpush1.bf16.msra.mxu0 %v859
    %2683 = vmatprep.subr.bf16.mxu0 %v868
    %2684 = vmatpush1.bf16.msra.mxu0 %v867
    %2685 = vmatprep.subr.bf16.mxu0 %v876
    %2686 = vmatpush1.bf16.msra.mxu0 %v875
    %2687 = vmatprep.subr.bf16.mxu0 %v884
    %2688 = vmatpush1.bf16.msra.mxu0 %v883
    %2689 = vmatprep.subr.bf16.mxu0 %v892
    %2690 = vmatpush1.bf16.msra.mxu0 %v891
    %2691 = vmatprep.subr.bf16.mxu0 %v900
    %2692 = vmatpush1.bf16.msra.mxu0 %v899
    %2693 = vmatprep.subr.bf16.mxu0 %v908
    %2694 = vmatpush1.bf16.msra.mxu0 %v907
    %2695 = vmatprep.subr.bf16.mxu0 %v916
    %2696 = vmatpush1.bf16.msra.mxu0 %v915
    %2697 = vmatprep.subr.bf16.mxu0 0
    %2698 = vmatpush1.bf16.msra.mxu0 0
    %2699 = vmatprep.subr.bf16.mxu0 0
    %2700 = vmatpush1.bf16.msra.mxu0 0
    %2701 = vmatprep.subr.bf16.mxu0 0
    %2702 = vmatpush1.bf16.msra.mxu0 0
    %2703 = vmatprep.subr.bf16.mxu0 0
    %2704 = vmatpush1.bf16.msra.mxu0 0
    %2705 = vmatprep.subr.bf16.mxu0 0
    %2706 = vmatpush1.bf16.msra.mxu0 0
    %2707 = vmatprep.subr.bf16.mxu0 0
    %2708 = vmatpush1.bf16.msra.mxu0 0
    %2709 = vmatprep.subr.bf16.mxu0 0
    %2710 = vmatpush1.bf16.msra.mxu0 0
    %2711 = vmatprep.subr.bf16.mxu0 0
    %2712 = vmatpush1.bf16.msra.mxu0 0
    %2713 = vmatprep.mubr.bf16.mxu0 0
    %2714 = vmatmul.mubr.bf16.gmra.mrb[0].mxu0 %v2680
    %v2715 = vpop.f32.mrb[0].mxu0
    %v2716 = vadd.f32 0.0, %v2715
    %v2717 = vpop.f32.mrb[0].mxu0
    %v2718 = vadd.f32 0.0, %v2717
    %v2719 = vpop.f32.mrb[0].mxu0
    %v2720 = vpop.f32.mrb[0].mxu0
    %2721 = vdwg.mxu0
    %2722 = vmatprep.subr.bf16.mxu0 %v862
    %2723 = vmatpush1.bf16.msra.mxu0 %v861
    %2724 = vmatprep.subr.bf16.mxu0 %v870
    %2725 = vmatpush1.bf16.msra.mxu0 %v869
    %2726 = vmatprep.subr.bf16.mxu0 %v878
    %2727 = vmatpush1.bf16.msra.mxu0 %v877
    %2728 = vmatprep.subr.bf16.mxu0 %v886
    %2729 = vmatpush1.bf16.msra.mxu0 %v885
    %2730 = vmatprep.subr.bf16.mxu0 %v894
    %2731 = vmatpush1.bf16.msra.mxu0 %v893
    %2732 = vmatprep.subr.bf16.mxu0 %v902
    %2733 = vmatpush1.bf16.msra.mxu0 %v901
    %2734 = vmatprep.subr.bf16.mxu0 %v910
    %2735 = vmatpush1.bf16.msra.mxu0 %v909
    %2736 = vmatprep.subr.bf16.mxu0 %v918
    %2737 = vmatpush1.bf16.msra.mxu0 %v917
    %2738 = vmatprep.subr.bf16.mxu0 0
    %2739 = vmatpush1.bf16.msra.mxu0 0
    %2740 = vmatprep.subr.bf16.mxu0 0
    %2741 = vmatpush1.bf16.msra.mxu0 0
    %2742 = vmatprep.subr.bf16.mxu0 0
    %2743 = vmatpush1.bf16.msra.mxu0 0
    %2744 = vmatprep.subr.bf16.mxu0 0
    %2745 = vmatpush1.bf16.msra.mxu0 0
    %2746 = vmatprep.subr.bf16.mxu0 0
    %2747 = vmatpush1.bf16.msra.mxu0 0
    %2748 = vmatprep.subr.bf16.mxu0 0
    %2749 = vmatpush1.bf16.msra.mxu0 0
    %2750 = vmatprep.subr.bf16.mxu0 0
    %2751 = vmatpush1.bf16.msra.mxu0 0
    %2752 = vmatprep.subr.bf16.mxu0 0
    %2753 = vmatpush1.bf16.msra.mxu0 0
    %2754 = vmatprep.mubr.bf16.mxu0 0
    %2755 = vmatmul.mubr.bf16.gmra.mrb[0].mxu0 %v2680
    %v2756 = vpop.f32.mrb[0].mxu0
    %v2757 = vadd.f32 0.0, %v2756
    %v2758 = vpop.f32.mrb[0].mxu0
    %v2759 = vadd.f32 0.0, %v2758
    %v2760 = vpop.f32.mrb[0].mxu0
    %v2761 = vpop.f32.mrb[0].mxu0
    %2762 = vdwg.mxu0
    %2763 = vmatprep.subr.bf16.mxu0 %v864
    %2764 = vmatpush1.bf16.msra.mxu0 %v863
    %2765 = vmatprep.subr.bf16.mxu0 %v872
    %2766 = vmatpush1.bf16.msra.mxu0 %v871
    %2767 = vmatprep.subr.bf16.mxu0 %v880
    %2768 = vmatpush1.bf16.msra.mxu0 %v879
    %2769 = vmatprep.subr.bf16.mxu0 %v888
    %2770 = vmatpush1.bf16.msra.mxu0 %v887
    %2771 = vmatprep.subr.bf16.mxu0 %v896
    %2772 = vmatpush1.bf16.msra.mxu0 %v895
    %2773 = vmatprep.subr.bf16.mxu0 %v904
    %2774 = vmatpush1.bf16.msra.mxu0 %v903
    %2775 = vmatprep.subr.bf16.mxu0 %v912
    %2776 = vmatpush1.bf16.msra.mxu0 %v911
    %2777 = vmatprep.subr.bf16.mxu0 %v920
    %2778 = vmatpush1.bf16.msra.mxu0 %v919
    %2779 = vmatprep.subr.bf16.mxu0 0
    %2780 = vmatpush1.bf16.msra.mxu0 0
    %2781 = vmatprep.subr.bf16.mxu0 0
    %2782 = vmatpush1.bf16.msra.mxu0 0
    %2783 = vmatprep.subr.bf16.mxu0 0
    %2784 = vmatpush1.bf16.msra.mxu0 0
    %2785 = vmatprep.subr.bf16.mxu0 0
    %2786 = vmatpush1.bf16.msra.mxu0 0
    %2787 = vmatprep.subr.bf16.mxu0 0
    %2788 = vmatpush1.bf16.msra.mxu0 0
    %2789 = vmatprep.subr.bf16.mxu0 0
    %2790 = vmatpush1.bf16.msra.mxu0 0
    %2791 = vmatprep.subr.bf16.mxu0 0
    %2792 = vmatpush1.bf16.msra.mxu0 0
    %2793 = vmatprep.subr.bf16.mxu0 0
    %2794 = vmatpush1.bf16.msra.mxu0 0
    %2795 = vmatprep.mubr.bf16.mxu0 0
    %2796 = vmatmul.mubr.bf16.gmra.mrb[0].mxu0 %v2680
    %v2797 = vpop.f32.mrb[0].mxu0
    %v2798 = vadd.f32 0.0, %v2797
    %v2799 = vpop.f32.mrb[0].mxu0
    %v2800 = vadd.f32 0.0, %v2799
    %v2801 = vpop.f32.mrb[0].mxu0
    %v2802 = vpop.f32.mrb[0].mxu0
    %2803 = vdwg.mxu0
    %2804 = vmatprep.subr.bf16.mxu0 %v866
    %2805 = vmatpush1.bf16.msra.mxu0 %v865
    %2806 = vmatprep.subr.bf16.mxu0 %v874
    %2807 = vmatpush1.bf16.msra.mxu0 %v873
    %2808 = vmatprep.subr.bf16.mxu0 %v882
    %2809 = vmatpush1.bf16.msra.mxu0 %v881
    %2810 = vmatprep.subr.bf16.mxu0 %v890
    %2811 = vmatpush1.bf16.msra.mxu0 %v889
    %2812 = vmatprep.subr.bf16.mxu0 %v898
    %2813 = vmatpush1.bf16.msra.mxu0 %v897
    %2814 = vmatprep.subr.bf16.mxu0 %v906
    %2815 = vmatpush1.bf16.msra.mxu0 %v905
    %2816 = vmatprep.subr.bf16.mxu0 %v914
    %2817 = vmatpush1.bf16.msra.mxu0 %v913
    %2818 = vmatprep.subr.bf16.mxu0 %v922
    %2819 = vmatpush1.bf16.msra.mxu0 %v921
    %2820 = vmatprep.subr.bf16.mxu0 0
    %2821 = vmatpush1.bf16.msra.mxu0 0
    %2822 = vmatprep.subr.bf16.mxu0 0
    %2823 = vmatpush1.bf16.msra.mxu0 0
    %2824 = vmatprep.subr.bf16.mxu0 0
    %2825 = vmatpush1.bf16.msra.mxu0 0
    %2826 = vmatprep.subr.bf16.mxu0 0
    %2827 = vmatpush1.bf16.msra.mxu0 0
    %2828 = vmatprep.subr.bf16.mxu0 0
    %2829 = vmatpush1.bf16.msra.mxu0 0
    %2830 = vmatprep.subr.bf16.mxu0 0
    %2831 = vmatpush1.bf16.msra.mxu0 0
    %2832 = vmatprep.subr.bf16.mxu0 0
    %2833 = vmatpush1.bf16.msra.mxu0 0
    %2834 = vmatprep.subr.bf16.mxu0 0
    %2835 = vmatpush1.bf16.msra.mxu0 0
    %2836 = vmatprep.mubr.bf16.mxu0 0
    %2837 = vmatmul.mubr.bf16.gmra.mrb[0].mxu0 %v2680
    %v2838 = vpop.f32.mrb[0].mxu0
    %v2839 = vadd.f32 0.0, %v2838
    %v2840 = vpop.f32.mrb[0].mxu0
    %v2841 = vadd.f32 0.0, %v2840
    %v2842 = vpop.f32.mrb[0].mxu0
    %v2843 = vpop.f32.mrb[0].mxu0
    %2844 = vdwg.mxu0
    %v2845 = vpack.c.bf16 %v2649, %v2649
    %2846 = vmatprep.subr.bf16.mxu0 %v1248
    %2847 = vmatpush1.bf16.msra.mxu0 %v1247
    %2848 = vmatprep.subr.bf16.mxu0 %v1252
    %2849 = vmatpush1.bf16.msra.mxu0 %v1251
    %2850 = vmatprep.subr.bf16.mxu0 %v1256
    %2851 = vmatpush1.bf16.msra.mxu0 %v1255
    %2852 = vmatprep.subr.bf16.mxu0 %v1260
    %2853 = vmatpush1.bf16.msra.mxu0 %v1259
    %2854 = vmatprep.subr.bf16.mxu0 %v1264
    %2855 = vmatpush1.bf16.msra.mxu0 %v1263
    %2856 = vmatprep.subr.bf16.mxu0 %v1268
    %2857 = vmatpush1.bf16.msra.mxu0 %v1267
    %2858 = vmatprep.subr.bf16.mxu0 %v1272
    %2859 = vmatpush1.bf16.msra.mxu0 %v1271
    %2860 = vmatprep.subr.bf16.mxu0 %v1276
    %2861 = vmatpush1.bf16.msra.mxu0 %v1275
    %2862 = vmatprep.subr.bf16.mxu0 0
    %2863 = vmatpush1.bf16.msra.mxu0 0
    %2864 = vmatprep.subr.bf16.mxu0 0
    %2865 = vmatpush1.bf16.msra.mxu0 0
    %2866 = vmatprep.subr.bf16.mxu0 0
    %2867 = vmatpush1.bf16.msra.mxu0 0
    %2868 = vmatprep.subr.bf16.mxu0 0
    %2869 = vmatpush1.bf16.msra.mxu0 0
    %2870 = vmatprep.subr.bf16.mxu0 0
    %2871 = vmatpush1.bf16.msra.mxu0 0
    %2872 = vmatprep.subr.bf16.mxu0 0
    %2873 = vmatpush1.bf16.msra.mxu0 0
    %2874 = vmatprep.subr.bf16.mxu0 0
    %2875 = vmatpush1.bf16.msra.mxu0 0
    %2876 = vmatprep.subr.bf16.mxu0 0
    %2877 = vmatpush1.bf16.msra.mxu0 0
    %2878 = vmatprep.mubr.bf16.mxu0 0
    %2879 = vmatmul.mubr.bf16.gmra.mrb[0].mxu0 %v2845
    %v2880 = vpop.f32.mrb[0].mxu0
    %v2881 = vadd.f32 0.0, %v2880
    %v2882 = vpop.f32.mrb[0].mxu0
    %v2883 = vadd.f32 0.0, %v2882
    %v2884 = vpop.f32.mrb[0].mxu0
    %v2885 = vpop.f32.mrb[0].mxu0
    %2886 = vdwg.mxu0
    %2887 = vmatprep.subr.bf16.mxu0 %v1250
    %2888 = vmatpush1.bf16.msra.mxu0 %v1249
    %2889 = vmatprep.subr.bf16.mxu0 %v1254
    %2890 = vmatpush1.bf16.msra.mxu0 %v1253
    %2891 = vmatprep.subr.bf16.mxu0 %v1258
    %2892 = vmatpush1.bf16.msra.mxu0 %v1257
    %2893 = vmatprep.subr.bf16.mxu0 %v1262
    %2894 = vmatpush1.bf16.msra.mxu0 %v1261
    %2895 = vmatprep.subr.bf16.mxu0 %v1266
    %2896 = vmatpush1.bf16.msra.mxu0 %v1265
    %2897 = vmatprep.subr.bf16.mxu0 %v1270
    %2898 = vmatpush1.bf16.msra.mxu0 %v1269
    %2899 = vmatprep.subr.bf16.mxu0 %v1274
    %2900 = vmatpush1.bf16.msra.mxu0 %v1273
    %2901 = vmatprep.subr.bf16.mxu0 %v1278
    %2902 = vmatpush1.bf16.msra.mxu0 %v1277
    %2903 = vmatprep.subr.bf16.mxu0 0
    %2904 = vmatpush1.bf16.msra.mxu0 0
    %2905 = vmatprep.subr.bf16.mxu0 0
    %2906 = vmatpush1.bf16.msra.mxu0 0
    %2907 = vmatprep.subr.bf16.mxu0 0
    %2908 = vmatpush1.bf16.msra.mxu0 0
    %2909 = vmatprep.subr.bf16.mxu0 0
    %2910 = vmatpush1.bf16.msra.mxu0 0
    %2911 = vmatprep.subr.bf16.mxu0 0
    %2912 = vmatpush1.bf16.msra.mxu0 0
    %2913 = vmatprep.subr.bf16.mxu0 0
    %2914 = vmatpush1.bf16.msra.mxu0 0
    %2915 = vmatprep.subr.bf16.mxu0 0
    %2916 = vmatpush1.bf16.msra.mxu0 0
    %2917 = vmatprep.subr.bf16.mxu0 0
    %2918 = vmatpush1.bf16.msra.mxu0 0
    %2919 = vmatprep.mubr.bf16.mxu0 0
    %2920 = vmatmul.mubr.bf16.gmra.mrb[0].mxu0 %v2845
    %v2921 = vpop.f32.mrb[0].mxu0
    %v2922 = vadd.f32 0.0, %v2921
    %v2923 = vpop.f32.mrb[0].mxu0
    %v2924 = vadd.f32 0.0, %v2923
    %v2925 = vpop.f32.mrb[0].mxu0
    %v2926 = vpop.f32.mrb[0].mxu0
    %2927 = vdwg.mxu0
    %v2928 = vadd.f32 %v2798, %v2881
    %v2929 = vadd.f32 %v2800, %v2883
    %v2930 = vadd.f32 %v2839, %v2922
    %v2931 = vadd.f32 %v2841, %v2924
    %v2932 = vadd.f32 %v2928, %v624
    %v2933 = vadd.f32 %v2929, %v628
    %v2934 = vadd.f32 %v2930, %v632
    %v2935 = vadd.f32 %v2931, %v636
    %v2936 = vsub.f32 0.0, %v2932
    %v2937 = vmul.f32 %v2936, 1.442695
    %v2938 = vpow.pop %v2937
    %v2939 = vadd.f32 %v2938, 1.0
    %v2940 = vrcp.pop %v2939
    %v2941 = vsub.f32 0.0, %v2933
    %v2942 = vmul.f32 %v2941, 1.442695
    %v2943 = vpow.pop %v2942
    %v2944 = vadd.f32 %v2943, 1.0
    %v2945 = vrcp.pop %v2944
    %v2946 = vtanh.pop %v2934
    %v2947 = vsub.f32 0.0, %v2935
    %v2948 = vmul.f32 %v2947, 1.442695
    %v2949 = vpow.pop %v2948
    %v2950 = vadd.f32 %v2949, 1.0
    %v2951 = vrcp.pop %v2950
    %v2952 = vmul.f32 %v2945, %v2647
    %v2953 = vmul.f32 %v2940, %v2946
    %v2954 = vadd.f32 %v2952, %v2953
    %v2955 = vtanh.pop %v2954
    %v2956 = vmul.f32 %v2951, %v2955
    %s2957 = scalar_lea.vmem [#allocation2], 192
    %v2958 = vld [vmem:[%s2957] sm:$0xff]
    %v2959 = vld [vmem:[%s2957 + $0x8] sm:$0xff]
    %v2960 = vld [vmem:[%s2957 + $0x10] sm:$0xff]
    %v2961 = vld [vmem:[%s2957 + $0x18] sm:$0xff]
    %v2962 = vadd.f32 %v2716, %v2958
    %v2963 = vadd.f32 %v2718, %v2959
    %v2964 = vadd.f32 %v2757, %v2960
    %v2965 = vadd.f32 %v2759, %v2961
    %v2966 = vsub.f32 0.0, %v2962
    %v2967 = vmul.f32 %v2966, 1.442695
    %v2968 = vpow.pop %v2967
    %v2969 = vadd.f32 %v2968, 1.0
    %v2970 = vrcp.pop %v2969
    %v2971 = vsub.f32 0.0, %v2963
    %v2972 = vmul.f32 %v2971, 1.442695
    %v2973 = vpow.pop %v2972
    %v2974 = vadd.f32 %v2973, 1.0
    %v2975 = vrcp.pop %v2974
    %v2976 = vtanh.pop %v2964
    %v2977 = vsub.f32 0.0, %v2965
    %v2978 = vmul.f32 %v2977, 1.442695
    %v2979 = vpow.pop %v2978
    %v2980 = vadd.f32 %v2979, 1.0
    %v2981 = vrcp.pop %v2980
    %v2982 = vmul.f32 %v2975, %v2677
    %v2983 = vmul.f32 %v2970, %v2976
    %v2984 = vadd.f32 %v2982, %v2983
    %v2985 = vtanh.pop %v2984
    %v2986 = vmul.f32 %v2981, %v2985
    %v2987 = vpack.c.bf16 %v2986, %v2986
    %2988 = vmatprep.subr.bf16.mxu0 %v860
    %2989 = vmatpush1.bf16.msra.mxu0 %v859
    %2990 = vmatprep.subr.bf16.mxu0 %v868
    %2991 = vmatpush1.bf16.msra.mxu0 %v867
    %2992 = vmatprep.subr.bf16.mxu0 %v876
    %2993 = vmatpush1.bf16.msra.mxu0 %v875
    %2994 = vmatprep.subr.bf16.mxu0 %v884
    %2995 = vmatpush1.bf16.msra.mxu0 %v883
    %2996 = vmatprep.subr.bf16.mxu0 %v892
    %2997 = vmatpush1.bf16.msra.mxu0 %v891
    %2998 = vmatprep.subr.bf16.mxu0 %v900
    %2999 = vmatpush1.bf16.msra.mxu0 %v899
    %3000 = vmatprep.subr.bf16.mxu0 %v908
    %3001 = vmatpush1.bf16.msra.mxu0 %v907
    %3002 = vmatprep.subr.bf16.mxu0 %v916
    %3003 = vmatpush1.bf16.msra.mxu0 %v915
    %3004 = vmatprep.subr.bf16.mxu0 0
    %3005 = vmatpush1.bf16.msra.mxu0 0
    %3006 = vmatprep.subr.bf16.mxu0 0
    %3007 = vmatpush1.bf16.msra.mxu0 0
    %3008 = vmatprep.subr.bf16.mxu0 0
    %3009 = vmatpush1.bf16.msra.mxu0 0
    %3010 = vmatprep.subr.bf16.mxu0 0
    %3011 = vmatpush1.bf16.msra.mxu0 0
    %3012 = vmatprep.subr.bf16.mxu0 0
    %3013 = vmatpush1.bf16.msra.mxu0 0
    %3014 = vmatprep.subr.bf16.mxu0 0
    %3015 = vmatpush1.bf16.msra.mxu0 0
    %3016 = vmatprep.subr.bf16.mxu0 0
    %3017 = vmatpush1.bf16.msra.mxu0 0
    %3018 = vmatprep.subr.bf16.mxu0 0
    %3019 = vmatpush1.bf16.msra.mxu0 0
    %3020 = vmatprep.mubr.bf16.mxu0 0
    %3021 = vmatmul.mubr.bf16.gmra.mrb[0].mxu0 %v2987
    %v3022 = vpop.f32.mrb[0].mxu0
    %v3023 = vadd.f32 0.0, %v3022
    %v3024 = vpop.f32.mrb[0].mxu0
    %v3025 = vadd.f32 0.0, %v3024
    %v3026 = vpop.f32.mrb[0].mxu0
    %v3027 = vpop.f32.mrb[0].mxu0
    %3028 = vdwg.mxu0
    %3029 = vmatprep.subr.bf16.mxu0 %v862
    %3030 = vmatpush1.bf16.msra.mxu0 %v861
    %3031 = vmatprep.subr.bf16.mxu0 %v870
    %3032 = vmatpush1.bf16.msra.mxu0 %v869
    %3033 = vmatprep.subr.bf16.mxu0 %v878
    %3034 = vmatpush1.bf16.msra.mxu0 %v877
    %3035 = vmatprep.subr.bf16.mxu0 %v886
    %3036 = vmatpush1.bf16.msra.mxu0 %v885
    %3037 = vmatprep.subr.bf16.mxu0 %v894
    %3038 = vmatpush1.bf16.msra.mxu0 %v893
    %3039 = vmatprep.subr.bf16.mxu0 %v902
    %3040 = vmatpush1.bf16.msra.mxu0 %v901
    %3041 = vmatprep.subr.bf16.mxu0 %v910
    %3042 = vmatpush1.bf16.msra.mxu0 %v909
    %3043 = vmatprep.subr.bf16.mxu0 %v918
    %3044 = vmatpush1.bf16.msra.mxu0 %v917
    %3045 = vmatprep.subr.bf16.mxu0 0
    %3046 = vmatpush1.bf16.msra.mxu0 0
    %3047 = vmatprep.subr.bf16.mxu0 0
    %3048 = vmatpush1.bf16.msra.mxu0 0
    %3049 = vmatprep.subr.bf16.mxu0 0
    %3050 = vmatpush1.bf16.msra.mxu0 0
    %3051 = vmatprep.subr.bf16.mxu0 0
    %3052 = vmatpush1.bf16.msra.mxu0 0
    %3053 = vmatprep.subr.bf16.mxu0 0
    %3054 = vmatpush1.bf16.msra.mxu0 0
    %3055 = vmatprep.subr.bf16.mxu0 0
    %3056 = vmatpush1.bf16.msra.mxu0 0
    %3057 = vmatprep.subr.bf16.mxu0 0
    %3058 = vmatpush1.bf16.msra.mxu0 0
    %3059 = vmatprep.subr.bf16.mxu0 0
    %3060 = vmatpush1.bf16.msra.mxu0 0
    %3061 = vmatprep.mubr.bf16.mxu0 0
    %3062 = vmatmul.mubr.bf16.gmra.mrb[0].mxu0 %v2987
    %v3063 = vpop.f32.mrb[0].mxu0
    %v3064 = vadd.f32 0.0, %v3063
    %v3065 = vpop.f32.mrb[0].mxu0
    %v3066 = vadd.f32 0.0, %v3065
    %v3067 = vpop.f32.mrb[0].mxu0
    %v3068 = vpop.f32.mrb[0].mxu0
    %3069 = vdwg.mxu0
    %3070 = vmatprep.subr.bf16.mxu0 %v864
    %3071 = vmatpush1.bf16.msra.mxu0 %v863
    %3072 = vmatprep.subr.bf16.mxu0 %v872
    %3073 = vmatpush1.bf16.msra.mxu0 %v871
    %3074 = vmatprep.subr.bf16.mxu0 %v880
    %3075 = vmatpush1.bf16.msra.mxu0 %v879
    %3076 = vmatprep.subr.bf16.mxu0 %v888
    %3077 = vmatpush1.bf16.msra.mxu0 %v887
    %3078 = vmatprep.subr.bf16.mxu0 %v896
    %3079 = vmatpush1.bf16.msra.mxu0 %v895
    %3080 = vmatprep.subr.bf16.mxu0 %v904
    %3081 = vmatpush1.bf16.msra.mxu0 %v903
    %3082 = vmatprep.subr.bf16.mxu0 %v912
    %3083 = vmatpush1.bf16.msra.mxu0 %v911
    %3084 = vmatprep.subr.bf16.mxu0 %v920
    %3085 = vmatpush1.bf16.msra.mxu0 %v919
    %3086 = vmatprep.subr.bf16.mxu0 0
    %3087 = vmatpush1.bf16.msra.mxu0 0
    %3088 = vmatprep.subr.bf16.mxu0 0
    %3089 = vmatpush1.bf16.msra.mxu0 0
    %3090 = vmatprep.subr.bf16.mxu0 0
    %3091 = vmatpush1.bf16.msra.mxu0 0
    %3092 = vmatprep.subr.bf16.mxu0 0
    %3093 = vmatpush1.bf16.msra.mxu0 0
    %3094 = vmatprep.subr.bf16.mxu0 0
    %3095 = vmatpush1.bf16.msra.mxu0 0
    %3096 = vmatprep.subr.bf16.mxu0 0
    %3097 = vmatpush1.bf16.msra.mxu0 0
    %3098 = vmatprep.subr.bf16.mxu0 0
    %3099 = vmatpush1.bf16.msra.mxu0 0
    %3100 = vmatprep.subr.bf16.mxu0 0
    %3101 = vmatpush1.bf16.msra.mxu0 0
    %3102 = vmatprep.mubr.bf16.mxu0 0
    %3103 = vmatmul.mubr.bf16.gmra.mrb[0].mxu0 %v2987
    %v3104 = vpop.f32.mrb[0].mxu0
    %v3105 = vadd.f32 0.0, %v3104
    %v3106 = vpop.f32.mrb[0].mxu0
    %v3107 = vadd.f32 0.0, %v3106
    %v3108 = vpop.f32.mrb[0].mxu0
    %v3109 = vpop.f32.mrb[0].mxu0
    %3110 = vdwg.mxu0
    %3111 = vmatprep.subr.bf16.mxu0 %v866
    %3112 = vmatpush1.bf16.msra.mxu0 %v865
    %3113 = vmatprep.subr.bf16.mxu0 %v874
    %3114 = vmatpush1.bf16.msra.mxu0 %v873
    %3115 = vmatprep.subr.bf16.mxu0 %v882
    %3116 = vmatpush1.bf16.msra.mxu0 %v881
    %3117 = vmatprep.subr.bf16.mxu0 %v890
    %3118 = vmatpush1.bf16.msra.mxu0 %v889
    %3119 = vmatprep.subr.bf16.mxu0 %v898
    %3120 = vmatpush1.bf16.msra.mxu0 %v897
    %3121 = vmatprep.subr.bf16.mxu0 %v906
    %3122 = vmatpush1.bf16.msra.mxu0 %v905
    %3123 = vmatprep.subr.bf16.mxu0 %v914
    %3124 = vmatpush1.bf16.msra.mxu0 %v913
    %3125 = vmatprep.subr.bf16.mxu0 %v922
    %3126 = vmatpush1.bf16.msra.mxu0 %v921
    %3127 = vmatprep.subr.bf16.mxu0 0
    %3128 = vmatpush1.bf16.msra.mxu0 0
    %3129 = vmatprep.subr.bf16.mxu0 0
    %3130 = vmatpush1.bf16.msra.mxu0 0
    %3131 = vmatprep.subr.bf16.mxu0 0
    %3132 = vmatpush1.bf16.msra.mxu0 0
    %3133 = vmatprep.subr.bf16.mxu0 0
    %3134 = vmatpush1.bf16.msra.mxu0 0
    %3135 = vmatprep.subr.bf16.mxu0 0
    %3136 = vmatpush1.bf16.msra.mxu0 0
    %3137 = vmatprep.subr.bf16.mxu0 0
    %3138 = vmatpush1.bf16.msra.mxu0 0
    %3139 = vmatprep.subr.bf16.mxu0 0
    %3140 = vmatpush1.bf16.msra.mxu0 0
    %3141 = vmatprep.subr.bf16.mxu0 0
    %3142 = vmatpush1.bf16.msra.mxu0 0
    %3143 = vmatprep.mubr.bf16.mxu0 0
    %3144 = vmatmul.mubr.bf16.gmra.mrb[0].mxu0 %v2987
    %v3145 = vpop.f32.mrb[0].mxu0
    %v3146 = vadd.f32 0.0, %v3145
    %v3147 = vpop.f32.mrb[0].mxu0
    %v3148 = vadd.f32 0.0, %v3147
    %v3149 = vpop.f32.mrb[0].mxu0
    %v3150 = vpop.f32.mrb[0].mxu0
    %3151 = vdwg.mxu0
    %v3152 = vpack.c.bf16 %v2956, %v2956
    %3153 = vmatprep.subr.bf16.mxu0 %v1248
    %3154 = vmatpush1.bf16.msra.mxu0 %v1247
    %3155 = vmatprep.subr.bf16.mxu0 %v1252
    %3156 = vmatpush1.bf16.msra.mxu0 %v1251
    %3157 = vmatprep.subr.bf16.mxu0 %v1256
    %3158 = vmatpush1.bf16.msra.mxu0 %v1255
    %3159 = vmatprep.subr.bf16.mxu0 %v1260
    %3160 = vmatpush1.bf16.msra.mxu0 %v1259
    %3161 = vmatprep.subr.bf16.mxu0 %v1264
    %3162 = vmatpush1.bf16.msra.mxu0 %v1263
    %3163 = vmatprep.subr.bf16.mxu0 %v1268
    %3164 = vmatpush1.bf16.msra.mxu0 %v1267
    %3165 = vmatprep.subr.bf16.mxu0 %v1272
    %3166 = vmatpush1.bf16.msra.mxu0 %v1271
    %3167 = vmatprep.subr.bf16.mxu0 %v1276
    %3168 = vmatpush1.bf16.msra.mxu0 %v1275
    %3169 = vmatprep.subr.bf16.mxu0 0
    %3170 = vmatpush1.bf16.msra.mxu0 0
    %3171 = vmatprep.subr.bf16.mxu0 0
    %3172 = vmatpush1.bf16.msra.mxu0 0
    %3173 = vmatprep.subr.bf16.mxu0 0
    %3174 = vmatpush1.bf16.msra.mxu0 0
    %3175 = vmatprep.subr.bf16.mxu0 0
    %3176 = vmatpush1.bf16.msra.mxu0 0
    %3177 = vmatprep.subr.bf16.mxu0 0
    %3178 = vmatpush1.bf16.msra.mxu0 0
    %3179 = vmatprep.subr.bf16.mxu0 0
    %3180 = vmatpush1.bf16.msra.mxu0 0
    %3181 = vmatprep.subr.bf16.mxu0 0
    %3182 = vmatpush1.bf16.msra.mxu0 0
    %3183 = vmatprep.subr.bf16.mxu0 0
    %3184 = vmatpush1.bf16.msra.mxu0 0
    %3185 = vmatprep.mubr.bf16.mxu0 0
    %3186 = vmatmul.mubr.bf16.gmra.mrb[0].mxu0 %v3152
    %v3187 = vpop.f32.mrb[0].mxu0
    %v3188 = vadd.f32 0.0, %v3187
    %v3189 = vpop.f32.mrb[0].mxu0
    %v3190 = vadd.f32 0.0, %v3189
    %v3191 = vpop.f32.mrb[0].mxu0
    %v3192 = vpop.f32.mrb[0].mxu0
    %3193 = vdwg.mxu0
    %3194 = vmatprep.subr.bf16.mxu0 %v1250
    %3195 = vmatpush1.bf16.msra.mxu0 %v1249
    %3196 = vmatprep.subr.bf16.mxu0 %v1254
    %3197 = vmatpush1.bf16.msra.mxu0 %v1253
    %3198 = vmatprep.subr.bf16.mxu0 %v1258
    %3199 = vmatpush1.bf16.msra.mxu0 %v1257
    %3200 = vmatprep.subr.bf16.mxu0 %v1262
    %3201 = vmatpush1.bf16.msra.mxu0 %v1261
    %3202 = vmatprep.subr.bf16.mxu0 %v1266
    %3203 = vmatpush1.bf16.msra.mxu0 %v1265
    %3204 = vmatprep.subr.bf16.mxu0 %v1270
    %3205 = vmatpush1.bf16.msra.mxu0 %v1269
    %3206 = vmatprep.subr.bf16.mxu0 %v1274
    %3207 = vmatpush1.bf16.msra.mxu0 %v1273
    %3208 = vmatprep.subr.bf16.mxu0 %v1278
    %3209 = vmatpush1.bf16.msra.mxu0 %v1277
    %3210 = vmatprep.subr.bf16.mxu0 0
    %3211 = vmatpush1.bf16.msra.mxu0 0
    %3212 = vmatprep.subr.bf16.mxu0 0
    %3213 = vmatpush1.bf16.msra.mxu0 0
    %3214 = vmatprep.subr.bf16.mxu0 0
    %3215 = vmatpush1.bf16.msra.mxu0 0
    %3216 = vmatprep.subr.bf16.mxu0 0
    %3217 = vmatpush1.bf16.msra.mxu0 0
    %3218 = vmatprep.subr.bf16.mxu0 0
    %3219 = vmatpush1.bf16.msra.mxu0 0
    %3220 = vmatprep.subr.bf16.mxu0 0
    %3221 = vmatpush1.bf16.msra.mxu0 0
    %3222 = vmatprep.subr.bf16.mxu0 0
    %3223 = vmatpush1.bf16.msra.mxu0 0
    %3224 = vmatprep.subr.bf16.mxu0 0
    %3225 = vmatpush1.bf16.msra.mxu0 0
    %3226 = vmatprep.mubr.bf16.mxu0 0
    %3227 = vmatmul.mubr.bf16.gmra.mrb[0].mxu0 %v3152
    %v3228 = vpop.f32.mrb[0].mxu0
    %v3229 = vadd.f32 0.0, %v3228
    %v3230 = vpop.f32.mrb[0].mxu0
    %v3231 = vadd.f32 0.0, %v3230
    %v3232 = vpop.f32.mrb[0].mxu0
    %v3233 = vpop.f32.mrb[0].mxu0
    %3234 = vdwg.mxu0
    %v3235 = vadd.f32 %v3105, %v3188
    %v3236 = vadd.f32 %v3107, %v3190
    %v3237 = vadd.f32 %v3146, %v3229
    %v3238 = vadd.f32 %v3148, %v3231
    %v3239 = vadd.f32 %v3235, %v624
    %v3240 = vadd.f32 %v3236, %v628
    %v3241 = vadd.f32 %v3237, %v632
    %v3242 = vadd.f32 %v3238, %v636
    %v3243 = vsub.f32 0.0, %v3239
    %v3244 = vmul.f32 %v3243, 1.442695
    %v3245 = vpow.pop %v3244
    %v3246 = vadd.f32 %v3245, 1.0
    %v3247 = vrcp.pop %v3246
    %v3248 = vsub.f32 0.0, %v3240
    %v3249 = vmul.f32 %v3248, 1.442695
    %v3250 = vpow.pop %v3249
    %v3251 = vadd.f32 %v3250, 1.0
    %v3252 = vrcp.pop %v3251
    %v3253 = vtanh.pop %v3241
    %v3254 = vsub.f32 0.0, %v3242
    %v3255 = vmul.f32 %v3254, 1.442695
    %v3256 = vpow.pop %v3255
    %v3257 = vadd.f32 %v3256, 1.0
    %v3258 = vrcp.pop %v3257
    %v3259 = vmul.f32 %v3252, %v2954
    %v3260 = vmul.f32 %v3247, %v3253
    %v3261 = vadd.f32 %v3259, %v3260
    %v3262 = vtanh.pop %v3261
    %v3263 = vmul.f32 %v3258, %v3262
    %s3264 = scalar_lea.vmem [#allocation2], 224
    %v3265 = vld [vmem:[%s3264] sm:$0xff]
    %v3266 = vld [vmem:[%s3264 + $0x8] sm:$0xff]
    %v3267 = vld [vmem:[%s3264 + $0x10] sm:$0xff]
    %v3268 = vld [vmem:[%s3264 + $0x18] sm:$0xff]
    %v3269 = vadd.f32 %v3023, %v3265
    %v3270 = vadd.f32 %v3025, %v3266
    %v3271 = vadd.f32 %v3064, %v3267
    %v3272 = vadd.f32 %v3066, %v3268
    %v3273 = vsub.f32 0.0, %v3269
    %v3274 = vmul.f32 %v3273, 1.442695
    %v3275 = vpow.pop %v3274
    %v3276 = vadd.f32 %v3275, 1.0
    %v3277 = vrcp.pop %v3276
    %v3278 = vsub.f32 0.0, %v3270
    %v3279 = vmul.f32 %v3278, 1.442695
    %v3280 = vpow.pop %v3279
    %v3281 = vadd.f32 %v3280, 1.0
    %v3282 = vrcp.pop %v3281
    %v3283 = vtanh.pop %v3271
    %v3284 = vsub.f32 0.0, %v3272
    %v3285 = vmul.f32 %v3284, 1.442695
    %v3286 = vpow.pop %v3285
    %v3287 = vadd.f32 %v3286, 1.0
    %v3288 = vrcp.pop %v3287
    %v3289 = vmul.f32 %v3282, %v2984
    %v3290 = vmul.f32 %v3277, %v3283
    %v3291 = vadd.f32 %v3289, %v3290
    %v3292 = vtanh.pop %v3291
    %v3293 = vmul.f32 %v3288, %v3292
    %v3294 = vpack.c.bf16 %v3293, %v3293
    %3295 = vmatprep.subr.bf16.mxu0 %v864
    %3296 = vmatpush1.bf16.msra.mxu0 %v863
    %3297 = vmatprep.subr.bf16.mxu0 %v872
    %3298 = vmatpush1.bf16.msra.mxu0 %v871
    %3299 = vmatprep.subr.bf16.mxu0 %v880
    %3300 = vmatpush1.bf16.msra.mxu0 %v879
    %3301 = vmatprep.subr.bf16.mxu0 %v888
    %3302 = vmatpush1.bf16.msra.mxu0 %v887
    %3303 = vmatprep.subr.bf16.mxu0 %v896
    %3304 = vmatpush1.bf16.msra.mxu0 %v895
    %3305 = vmatprep.subr.bf16.mxu0 %v904
    %3306 = vmatpush1.bf16.msra.mxu0 %v903
    %3307 = vmatprep.subr.bf16.mxu0 %v912
    %3308 = vmatpush1.bf16.msra.mxu0 %v911
    %3309 = vmatprep.subr.bf16.mxu0 %v920
    %3310 = vmatpush1.bf16.msra.mxu0 %v919
    %3311 = vmatprep.subr.bf16.mxu0 0
    %3312 = vmatpush1.bf16.msra.mxu0 0
    %3313 = vmatprep.subr.bf16.mxu0 0
    %3314 = vmatpush1.bf16.msra.mxu0 0
    %3315 = vmatprep.subr.bf16.mxu0 0
    %3316 = vmatpush1.bf16.msra.mxu0 0
    %3317 = vmatprep.subr.bf16.mxu0 0
    %3318 = vmatpush1.bf16.msra.mxu0 0
    %3319 = vmatprep.subr.bf16.mxu0 0
    %3320 = vmatpush1.bf16.msra.mxu0 0
    %3321 = vmatprep.subr.bf16.mxu0 0
    %3322 = vmatpush1.bf16.msra.mxu0 0
    %3323 = vmatprep.subr.bf16.mxu0 0
    %3324 = vmatpush1.bf16.msra.mxu0 0
    %3325 = vmatprep.subr.bf16.mxu0 0
    %3326 = vmatpush1.bf16.msra.mxu0 0
    %3327 = vmatprep.mubr.bf16.mxu0 0
    %3328 = vmatmul.mubr.bf16.gmra.mrb[0].mxu0 %v3294
    %v3329 = vpop.f32.mrb[0].mxu0
    %v3330 = vadd.f32 0.0, %v3329
    %v3331 = vpop.f32.mrb[0].mxu0
    %v3332 = vadd.f32 0.0, %v3331
    %v3333 = vpop.f32.mrb[0].mxu0
    %v3334 = vpop.f32.mrb[0].mxu0
    %3335 = vdwg.mxu0
    %3336 = vmatprep.subr.bf16.mxu0 %v866
    %3337 = vmatpush1.bf16.msra.mxu0 %v865
    %3338 = vmatprep.subr.bf16.mxu0 %v874
    %3339 = vmatpush1.bf16.msra.mxu0 %v873
    %3340 = vmatprep.subr.bf16.mxu0 %v882
    %3341 = vmatpush1.bf16.msra.mxu0 %v881
    %3342 = vmatprep.subr.bf16.mxu0 %v890
    %3343 = vmatpush1.bf16.msra.mxu0 %v889
    %3344 = vmatprep.subr.bf16.mxu0 %v898
    %3345 = vmatpush1.bf16.msra.mxu0 %v897
    %3346 = vmatprep.subr.bf16.mxu0 %v906
    %3347 = vmatpush1.bf16.msra.mxu0 %v905
    %3348 = vmatprep.subr.bf16.mxu0 %v914
    %3349 = vmatpush1.bf16.msra.mxu0 %v913
    %3350 = vmatprep.subr.bf16.mxu0 %v922
    %3351 = vmatpush1.bf16.msra.mxu0 %v921
    %3352 = vmatprep.subr.bf16.mxu0 0
    %3353 = vmatpush1.bf16.msra.mxu0 0
    %3354 = vmatprep.subr.bf16.mxu0 0
    %3355 = vmatpush1.bf16.msra.mxu0 0
    %3356 = vmatprep.subr.bf16.mxu0 0
    %3357 = vmatpush1.bf16.msra.mxu0 0
    %3358 = vmatprep.subr.bf16.mxu0 0
    %3359 = vmatpush1.bf16.msra.mxu0 0
    %3360 = vmatprep.subr.bf16.mxu0 0
    %3361 = vmatpush1.bf16.msra.mxu0 0
    %3362 = vmatprep.subr.bf16.mxu0 0
    %3363 = vmatpush1.bf16.msra.mxu0 0
    %3364 = vmatprep.subr.bf16.mxu0 0
    %3365 = vmatpush1.bf16.msra.mxu0 0
    %3366 = vmatprep.subr.bf16.mxu0 0
    %3367 = vmatpush1.bf16.msra.mxu0 0
    %3368 = vmatprep.mubr.bf16.mxu0 0
    %3369 = vmatmul.mubr.bf16.gmra.mrb[0].mxu0 %v3294
    %v3370 = vpop.f32.mrb[0].mxu0
    %v3371 = vadd.f32 0.0, %v3370
    %v3372 = vpop.f32.mrb[0].mxu0
    %v3373 = vadd.f32 0.0, %v3372
    %v3374 = vpop.f32.mrb[0].mxu0
    %v3375 = vpop.f32.mrb[0].mxu0
    %3376 = vdwg.mxu0
    %v3377 = vpack.c.bf16 %v3263, %v3263
    %3378 = vmatprep.subr.bf16.mxu0 %v1248
    %3379 = vmatpush1.bf16.msra.mxu0 %v1247
    %3380 = vmatprep.subr.bf16.mxu0 %v1252
    %3381 = vmatpush1.bf16.msra.mxu0 %v1251
    %3382 = vmatprep.subr.bf16.mxu0 %v1256
    %3383 = vmatpush1.bf16.msra.mxu0 %v1255
    %3384 = vmatprep.subr.bf16.mxu0 %v1260
    %3385 = vmatpush1.bf16.msra.mxu0 %v1259
    %3386 = vmatprep.subr.bf16.mxu0 %v1264
    %3387 = vmatpush1.bf16.msra.mxu0 %v1263
    %3388 = vmatprep.subr.bf16.mxu0 %v1268
    %3389 = vmatpush1.bf16.msra.mxu0 %v1267
    %3390 = vmatprep.subr.bf16.mxu0 %v1272
    %3391 = vmatpush1.bf16.msra.mxu0 %v1271
    %3392 = vmatprep.subr.bf16.mxu0 %v1276
    %3393 = vmatpush1.bf16.msra.mxu0 %v1275
    %3394 = vmatprep.subr.bf16.mxu0 0
    %3395 = vmatpush1.bf16.msra.mxu0 0
    %3396 = vmatprep.subr.bf16.mxu0 0
    %3397 = vmatpush1.bf16.msra.mxu0 0
    %3398 = vmatprep.subr.bf16.mxu0 0
    %3399 = vmatpush1.bf16.msra.mxu0 0
    %3400 = vmatprep.subr.bf16.mxu0 0
    %3401 = vmatpush1.bf16.msra.mxu0 0
    %3402 = vmatprep.subr.bf16.mxu0 0
    %3403 = vmatpush1.bf16.msra.mxu0 0
    %3404 = vmatprep.subr.bf16.mxu0 0
    %3405 = vmatpush1.bf16.msra.mxu0 0
    %3406 = vmatprep.subr.bf16.mxu0 0
    %3407 = vmatpush1.bf16.msra.mxu0 0
    %3408 = vmatprep.subr.bf16.mxu0 0
    %3409 = vmatpush1.bf16.msra.mxu0 0
    %3410 = vmatprep.mubr.bf16.mxu0 0
    %3411 = vmatmul.mubr.bf16.gmra.mrb[0].mxu0 %v3377
    %v3412 = vpop.f32.mrb[0].mxu0
    %v3413 = vadd.f32 0.0, %v3412
    %v3414 = vpop.f32.mrb[0].mxu0
    %v3415 = vadd.f32 0.0, %v3414
    %v3416 = vpop.f32.mrb[0].mxu0
    %v3417 = vpop.f32.mrb[0].mxu0
    %3418 = vdwg.mxu0
    %3419 = vmatprep.subr.bf16.mxu0 %v1250
    %3420 = vmatpush1.bf16.msra.mxu0 %v1249
    %3421 = vmatprep.subr.bf16.mxu0 %v1254
    %3422 = vmatpush1.bf16.msra.mxu0 %v1253
    %3423 = vmatprep.subr.bf16.mxu0 %v1258
    %3424 = vmatpush1.bf16.msra.mxu0 %v1257
    %3425 = vmatprep.subr.bf16.mxu0 %v1262
    %3426 = vmatpush1.bf16.msra.mxu0 %v1261
    %3427 = vmatprep.subr.bf16.mxu0 %v1266
    %3428 = vmatpush1.bf16.msra.mxu0 %v1265
    %3429 = vmatprep.subr.bf16.mxu0 %v1270
    %3430 = vmatpush1.bf16.msra.mxu0 %v1269
    %3431 = vmatprep.subr.bf16.mxu0 %v1274
    %3432 = vmatpush1.bf16.msra.mxu0 %v1273
    %3433 = vmatprep.subr.bf16.mxu0 %v1278
    %3434 = vmatpush1.bf16.msra.mxu0 %v1277
    %3435 = vmatprep.subr.bf16.mxu0 0
    %3436 = vmatpush1.bf16.msra.mxu0 0
    %3437 = vmatprep.subr.bf16.mxu0 0
    %3438 = vmatpush1.bf16.msra.mxu0 0
    %3439 = vmatprep.subr.bf16.mxu0 0
    %3440 = vmatpush1.bf16.msra.mxu0 0
    %3441 = vmatprep.subr.bf16.mxu0 0
    %3442 = vmatpush1.bf16.msra.mxu0 0
    %3443 = vmatprep.subr.bf16.mxu0 0
    %3444 = vmatpush1.bf16.msra.mxu0 0
    %3445 = vmatprep.subr.bf16.mxu0 0
    %3446 = vmatpush1.bf16.msra.mxu0 0
    %3447 = vmatprep.subr.bf16.mxu0 0
    %3448 = vmatpush1.bf16.msra.mxu0 0
    %3449 = vmatprep.subr.bf16.mxu0 0
    %3450 = vmatpush1.bf16.msra.mxu0 0
    %3451 = vmatprep.mubr.bf16.mxu0 0
    %3452 = vmatmul.mubr.bf16.gmra.mrb[0].mxu0 %v3377
    %v3453 = vpop.f32.mrb[0].mxu0
    %v3454 = vadd.f32 0.0, %v3453
    %v3455 = vpop.f32.mrb[0].mxu0
    %v3456 = vadd.f32 0.0, %v3455
    %v3457 = vpop.f32.mrb[0].mxu0
    %v3458 = vpop.f32.mrb[0].mxu0
    %3459 = vdwg.mxu0
    %v3460 = vadd.f32 %v3330, %v3413
    %v3461 = vadd.f32 %v3332, %v3415
    %v3462 = vadd.f32 %v3371, %v3454
    %v3463 = vadd.f32 %v3373, %v3456
    %v3464 = vadd.f32 %v3460, %v624
    %v3465 = vadd.f32 %v3461, %v628
    %v3466 = vadd.f32 %v3462, %v632
    %v3467 = vadd.f32 %v3463, %v636
    %v3468 = vsub.f32 0.0, %v3464
    %v3469 = vmul.f32 %v3468, 1.442695
    %v3470 = vpow.pop %v3469
    %v3471 = vadd.f32 %v3470, 1.0
    %v3472 = vrcp.pop %v3471
    %v3473 = vsub.f32 0.0, %v3465
    %v3474 = vmul.f32 %v3473, 1.442695
    %v3475 = vpow.pop %v3474
    %v3476 = vadd.f32 %v3475, 1.0
    %v3477 = vrcp.pop %v3476
    %v3478 = vtanh.pop %v3466
    %v3479 = vsub.f32 0.0, %v3467
    %v3480 = vmul.f32 %v3479, 1.442695
    %v3481 = vpow.pop %v3480
    %v3482 = vadd.f32 %v3481, 1.0
    %v3483 = vrcp.pop %v3482
    %v3484 = vmul.f32 %v3477, %v3261
    %v3485 = vmul.f32 %v3472, %v3478
    %v3486 = vadd.f32 %v3484, %v3485
    %v3487 = vtanh.pop %v3486
    %v3488 = vmul.f32 %v3483, %v3487
    %v3489 = vpack.c.bf16 %v3488, %v3488
    %v3490 = vld [vmem:[#allocation11] sm:$0xf]
    %v3491 = vld [vmem:[#allocation11 + $0x4] sm:$0xf]
    %v3492 = vld [vmem:[#allocation11 + $0x8] sm:$0xf]
    %v3493 = vld [vmem:[#allocation11 + $0xc] sm:$0xf]
    %v3494 = vld [vmem:[#allocation11 + $0x10] sm:$0xf]
    %v3495 = vld [vmem:[#allocation11 + $0x14] sm:$0xf]
    %v3496 = vld [vmem:[#allocation11 + $0x18] sm:$0xf]
    %v3497 = vld [vmem:[#allocation11 + $0x1c] sm:$0xf]
    %v3498 = vld [vmem:[#allocation11 + $0x20] sm:$0xf]
    %v3499 = vld [vmem:[#allocation11 + $0x24] sm:$0xf]
    %v3500 = vld [vmem:[#allocation11 + $0x28] sm:$0xf]
    %v3501 = vld [vmem:[#allocation11 + $0x2c] sm:$0xf]
    %v3502 = vld [vmem:[#allocation11 + $0x30] sm:$0xf]
    %v3503 = vld [vmem:[#allocation11 + $0x34] sm:$0xf]
    %v3504 = vld [vmem:[#allocation11 + $0x38] sm:$0xf]
    %v3505 = vld [vmem:[#allocation11 + $0x3c] sm:$0xf]
    %v3506 = vld [vmem:[%s7] sm:$0x1]
    %v3508 = vlaneseq
    %v3509 = vshrl.u32 %v3508, 7
    %v3510 = vsub.s32 0, %v3509
    %v3511 = vrot.slane %v3506, %v3510
    %v3529 = vunpack.c.l.b16 %v3490
    %v3530 = vunpack.c.l.b16 %v3491
    %v3531 = vunpack.c.l.b16 %v3492
    %v3532 = vunpack.c.l.b16 %v3493
    %v3533 = vunpack.c.l.b16 %v3494
    %v3534 = vunpack.c.l.b16 %v3495
    %v3535 = vunpack.c.l.b16 %v3496
    %v3536 = vunpack.c.l.b16 %v3497
    %v3537 = vunpack.c.l.b16 %v3498
    %v3538 = vunpack.c.l.b16 %v3499
    %v3539 = vunpack.c.l.b16 %v3500
    %v3540 = vunpack.c.l.b16 %v3501
    %v3541 = vunpack.c.l.b16 %v3502
    %v3542 = vunpack.c.l.b16 %v3503
    %v3543 = vunpack.c.l.b16 %v3504
    %v3544 = vunpack.c.l.b16 %v3505
    %v3545 = vpack.c.b16 %v3530, %v3529
    %v3546 = vpack.c.b16 %v3532, %v3531
    %v3547 = vpack.c.b16 %v3534, %v3533
    %v3548 = vpack.c.b16 %v3536, %v3535
    %v3549 = vpack.c.b16 %v3538, %v3537
    %v3550 = vpack.c.b16 %v3540, %v3539
    %v3551 = vpack.c.b16 %v3542, %v3541
    %v3552 = vpack.c.b16 %v3544, %v3543
    %3561 = vmatprep.subr.bf16.mxu0 0
    %3562 = vmatpush1.bf16.msra.mxu0 %v3545
    %3563 = vmatprep.subr.bf16.mxu0 0
    %3564 = vmatpush1.bf16.msra.mxu0 %v3546
    %3565 = vmatprep.subr.bf16.mxu0 0
    %3566 = vmatpush1.bf16.msra.mxu0 %v3547
    %3567 = vmatprep.subr.bf16.mxu0 0
    %3568 = vmatpush1.bf16.msra.mxu0 %v3548
    %3569 = vmatprep.subr.bf16.mxu0 0
    %3570 = vmatpush1.bf16.msra.mxu0 %v3549
    %3571 = vmatprep.subr.bf16.mxu0 0
    %3572 = vmatpush1.bf16.msra.mxu0 %v3550
    %3573 = vmatprep.subr.bf16.mxu0 0
    %3574 = vmatpush1.bf16.msra.mxu0 %v3551
    %3575 = vmatprep.subr.bf16.mxu0 0
    %3576 = vmatpush1.bf16.msra.mxu0 %v3552
    %3577 = vmatprep.subr.bf16.mxu0 0
    %3578 = vmatpush1.bf16.msra.mxu0 0
    %3579 = vmatprep.subr.bf16.mxu0 0
    %3580 = vmatpush1.bf16.msra.mxu0 0
    %3581 = vmatprep.subr.bf16.mxu0 0
    %3582 = vmatpush1.bf16.msra.mxu0 0
    %3583 = vmatprep.subr.bf16.mxu0 0
    %3584 = vmatpush1.bf16.msra.mxu0 0
    %3585 = vmatprep.subr.bf16.mxu0 0
    %3586 = vmatpush1.bf16.msra.mxu0 0
    %3587 = vmatprep.subr.bf16.mxu0 0
    %3588 = vmatpush1.bf16.msra.mxu0 0
    %3589 = vmatprep.subr.bf16.mxu0 0
    %3590 = vmatpush1.bf16.msra.mxu0 0
    %3591 = vmatprep.subr.bf16.mxu0 0
    %3592 = vmatpush1.bf16.msra.mxu0 0
    %3593 = vmatprep.mubr.bf16.mxu0 0
    %3594 = vmatmul.mubr.bf16.gmra.mrb[0].mxu0 %v3489
    %v3595 = vpop.f32.mrb[0].mxu0
    %v3596 = vadd.f32 %v3511, %v3595
    %v3597 = vpop.f32.mrb[0].mxu0
    %v3598 = vpop.f32.mrb[0].mxu0
    %v3599 = vpop.f32.mrb[0].mxu0
    %3600 = vdwg.mxu0
    %3601 = vst [vmem:[#allocation12] sm:$0xff] %v3596
    // Predicated region
    $region54: #{tpu_custom_call.1} parent=1 // pred_check
      _
    $region55: #{tpu_custom_call.1} parent=1 // pred_check_branch
      %3603 = sbr.rel (0) target = $region57
    $region56: #{tpu_custom_call.1} parent=1 // pred_region
      %s3605 = ssub.s32 128, 128
      %3606 = vsyncadd [#allocation5], %s3605
      %s3608 = sshll.u32 [#allocation12], 4
      %s3609 = int_to_ptr.vmem [resolvable:$true] %s3608
      %3611 = dma.vmem_to_hbm [thread:$0]  %s3609, 128, %s8, [#allocation5]
    $region57: #{tpu_custom_call.1} parent=1 // pred_fallthru
      _
    // Predicated region
    $region58: #{tpu_custom_call.1} parent=1 // pred_check
      _
    $region59: #{tpu_custom_call.1} parent=1 // pred_check_branch
      %3613 = sbr.rel (0) target = $region61
    $region60: #{tpu_custom_call.1} parent=1 // pred_region
      %3614 = dma.done [#allocation5], 128
    $region61: #{tpu_custom_call.1} parent=1 // pred_fallthru
      _
    %3615 = vsyncpa [#allocation4], 1
    %3616 = vsyncpa [#allocation7], 1
    %3617 = vsyncpa [#allocation10], 1
    %3618 = vsyncpa [#allocation5], 1

</llo_original>
